<compile_context>
chip_gen: v5e
topology: v5e:2x2
jax: 0.10.0
libtpu: 0.0.40
codegen_flags: <defaults>
</compile_context>

<pallas_src>
import numpy as np

import jax
import jax.numpy as jnp
from jax import lax
from jax.experimental import pallas as pl
from jax.experimental.pallas import tpu as pltpu


def _hardsigmoid(x):
    # torch.nn.Hardsigmoid: clip(x/6 + 0.5, 0, 1); multiply is cheaper than divide.
    return jnp.clip(x * (1.0 / 6.0) + 0.5, 0.0, 1.0)


def sfm_kernel(
    x_ref,       # (T, N, D)   time-major input
    wx_ref,      # (D, G)      fused input weights  [W_i|W_ste|W_c|W_o|W_fre], G = 4H+F
    bz_ref,      # (1, G)      fused input biases
    uh_ref,      # (H, G)      fused recurrent weights [U_i|U_ste|U_c|U_o|U_fre]
    ebig_ref,    # (G, 4*HF)   fused expansion: act -> [ste_rep|i_rep|tanh_c_rep|fre_til]
    uab_ref,     # (HF, H)     block "diag": [h*F+f, h] = U_a[f]  (sum over F on MXU)
    ba_ref,      # (1, H)
    re_ref,      # (T, 1, HF)  cos(2*pi*(t+1)*f/F) tiled over H (float64 -> f32)
    im_ref,      # (T, 1, HF)  sin(...)
    wout_ref,    # (H, 1)      W_p @ fc_w
    bout_ref,    # (1, 1)      b_p @ fc_w + fc_b
    out_ref,     # (N, 1)
    xz_sc,       # scratch (T, N, G)  precomputed x-projections
    h_sc,        # scratch (N, H)
    sre_sc,      # scratch (N, HF)
    sim_sc,      # scratch (N, HF)
):
    T = x_ref.shape[0]
    N = x_ref.shape[1]
    H = uh_ref.shape[0]
    G = uh_ref.shape[1]
    HF = uab_ref.shape[0]

    def mm(a, b):
        return jnp.dot(a, b, preferred_element_type=jnp.float32)

    # ---- stage 1: time-parallel input projection (T independent tiny GEMMs,
    # no dependence on the recurrent state -> freely pipelined by the scheduler).
    wx = wx_ref[...]
    bz = bz_ref[...]

    def proj(t, carry):
        xz_sc[t] = mm(x_ref[t], wx) + bz
        return carry

    lax.fori_loop(0, T, proj, 0, unroll=True)

    # ---- hoist loop-invariant weights / masks out of the recurrence.
    uh = uh_ref[...]
    ebig = ebig_ref[...]
    uab = uab_ref[...]
    ba = ba_ref[...]
    # Column layout of z is [i | ste | c | o | fre]; the c columns take tanh.
    col = lax.broadcasted_iota(jnp.int32, (N, G), 1)
    cmask = (col >= 2 * H) & (col < 3 * H)

    def gate_step(t, z, first):
        # One full-vreg hardsigmoid + one full-vreg tanh, then select per column
        # (replaces five per-gate activations on narrow lane slices).
        act = jnp.where(cmask, jnp.tanh(z), _hardsigmoid(z))       # (N, G)
        # Single fused expansion GEMM into the lane-dense (N, HF) layout.
        rep = mm(act, ebig)                                        # (N, 4*HF)
        i_rep = rep[:, HF:2 * HF]
        tc_rep = rep[:, 2 * HF:3 * HF]
        c_rep = i_rep * tc_rep                                     # (i * tanh(c_pre))_rep

        re_t = re_ref[t]                                           # (1, HF)
        im_t = im_ref[t]
        if first:
            # S_{-1} = 0: the f * S term vanishes.
            S_re = c_rep * re_t
            S_im = c_rep * im_t
        else:
            f_flat = rep[:, 0:HF] * rep[:, 3 * HF:4 * HF]          # ste_rep * fre_til
            S_re = f_flat * sre_sc[...] + c_rep * re_t
            S_im = f_flat * sim_sc[...] + c_rep * im_t

        A = S_re * S_re + S_im * S_im                              # (N, HF)
        a = jnp.tanh(mm(A, uab) + ba)                              # sum over F on MXU
        h_sc[...] = act[:, 3 * H:4 * H] * a                        # o * a
        sre_sc[...] = S_re
        sim_sc[...] = S_im

    # ---- stage 2: sequential recurrence.  t = 0 peeled: h_{-1} = 0, so the
    # h @ Uh GEMM is skipped and no scratch zero-init is required.
    gate_step(0, xz_sc[0], first=True)

    def step(t, carry):
        gate_step(t, xz_sc[t] + mm(h_sc[...], uh), first=False)
        return carry

    # T is small; full unroll for LLO scheduling visibility.  For large T use a
    # partial unroll factor instead (vreg pressure).
    lax.fori_loop(1, T, step, 0, unroll=True)

    # fc_out(W_p @ h + b_p) folded into a single (H, 1) head.
    out_ref[...] = mm(h_sc[...], wout_ref[...]) + bout_ref[...]


def build_constants(p, *, d_feat, hidden, freq_dim, seq_len):
    """One-time fused-weight / table construction (cache across forward calls)."""
    H, F, T = hidden, freq_dim, seq_len
    HF = H * F
    G = 4 * H + F

    # Fused gate weights, column layout [i | ste | c | o | fre].
    Wx = jnp.concatenate([p["W_i"], p["W_ste"], p["W_c"], p["W_o"], p["W_fre"]], axis=1)
    Uh = jnp.concatenate([p["U_i"], p["U_ste"], p["U_c"], p["U_o"], p["U_fre"]], axis=1)
    bz = jnp.concatenate([p["b_i"], p["b_ste"], p["b_c"], p["b_o"], p["b_fre"]], axis=1)

    # 0/1 expansion pieces for the lane-dense (N, H*F) layout.
    E_h = np.repeat(np.eye(H, dtype=np.float32), F, axis=1)        # (H, HF): [h, h*F+f]=1
    E_f = np.tile(np.eye(F, dtype=np.float32), (1, H))             # (F, HF): [f, h*F+f]=1
    # Fused expansion matrix: act (col layout [i|ste|c|o|fre]) ->
    #   [ste_rep | i_rep | tanh_c_rep | fre_til]   (o columns map to zero).
    E_big = np.zeros((G, 4 * HF), np.float32)
    E_big[H:2 * H, 0:HF] = E_h           # ste   -> ste_rep
    E_big[0:H, HF:2 * HF] = E_h          # i     -> i_rep
    E_big[2 * H:3 * H, 2 * HF:3 * HF] = E_h  # tanh_c -> tanh_c_rep
    E_big[4 * H:, 3 * HF:4 * HF] = E_f   # fre   -> fre_til

    # Sum-over-F reduction as a block matrix: [h*F+f, h] = U_a[f].
    ua_flat = jnp.tile(p["U_a"][:, 0], H)                          # (HF,)
    Ua_block = jnp.asarray(E_h).T * ua_flat[:, None]               # (HF, H)

    # Trig tables in float64 (matches the module's float64 frequency array).
    freq = np.arange(F, dtype=np.float64) / F
    tt = np.arange(1, T + 1, dtype=np.float64)
    omega = 2.0 * np.pi * tt[:, None] * freq[None, :]              # (T, F) float64
    re = jnp.asarray(np.tile(np.cos(omega), (1, H)).astype(np.float32).reshape(T, 1, HF))
    im = jnp.asarray(np.tile(np.sin(omega), (1, H)).astype(np.float32).reshape(T, 1, HF))

    # Output head: fc_out(h @ W_p + b_p) = h @ (W_p @ fc_w) + (b_p @ fc_w + fc_b).
    W_out = p["W_p"] @ p["fc_w"]                                   # (H, 1)
    b_out = p["b_p"] @ p["fc_w"] + p["fc_b"]                       # (1, 1)

    return dict(Wx=Wx, bz=bz, Uh=Uh, E_big=jnp.asarray(E_big), Ua_block=Ua_block,
                b_a=p["b_a"], re=re, im=im, W_out=W_out, b_out=b_out)


@jax.jit
def sfm_forward(x, consts):
    """x: (N, d_feat * T) float32.  Returns fc_out(p) for the last step -> (N,)."""
    N = x.shape[0]
    D, G = consts["Wx"].shape
    H = consts["Uh"].shape[0]
    HF = consts["Ua_block"].shape[0]
    T = consts["re"].shape[0]

    x_seq = jnp.transpose(x.reshape(N, D, -1), (2, 0, 1))          # (T, N, D) time-major

    operands = [x_seq, consts["Wx"], consts["bz"], consts["Uh"], consts["E_big"],
                consts["Ua_block"], consts["b_a"], consts["re"], consts["im"],
                consts["W_out"], consts["b_out"]]

    def _full_spec(a):
        nd = a.ndim
        return pl.BlockSpec(a.shape, lambda i, _nd=nd: (0,) * _nd)

    out = pl.pallas_call(
        sfm_kernel,
        out_shape=jax.ShapeDtypeStruct((N, 1), jnp.float32),
        grid_spec=pltpu.PrefetchScalarGridSpec(
            num_scalar_prefetch=0,
            grid=(1,),
            in_specs=[_full_spec(a) for a in operands],
            out_specs=pl.BlockSpec((N, 1), lambda i: (0, 0)),
            scratch_shapes=[
                pltpu.VMEM((T, N, G), jnp.float32),   # xz (in-kernel x-projection)
                pltpu.VMEM((N, H), jnp.float32),      # h
                pltpu.VMEM((N, HF), jnp.float32),     # S_re (lane-dense)
                pltpu.VMEM((N, HF), jnp.float32),     # S_im (lane-dense)
            ],
        ),
        compiler_params=pltpu.CompilerParams(dimension_semantics=("arbitrary",)),
    )(*operands)
    # module returns .squeeze(); use [:, 0] so the result is always (N,).
    return out[:, 0]


def make_params(key, d_feat, hidden, freq_dim, output_dim):
    """Deterministic synthetic parameters (shapes match SFM_Model.__init__)."""
    ks = jax.random.split(key, 16)
    n = lambda k, s, sc=0.2: (sc * jax.random.normal(k, s)).astype(jnp.float32)
    return {
        "W_i":   n(ks[0], (d_feat, hidden)),
        "W_ste": n(ks[1], (d_feat, hidden)),
        "W_fre": n(ks[2], (d_feat, freq_dim)),
        "W_c":   n(ks[3], (d_feat, hidden)),
        "W_o":   n(ks[4], (d_feat, hidden)),
        "U_i":   n(ks[5], (hidden, hidden)),
        "U_ste": n(ks[6], (hidden, hidden)),
        "U_fre": n(ks[7], (hidden, freq_dim)),
        "U_c":   n(ks[8], (hidden, hidden)),
        "U_o":   n(ks[9], (hidden, hidden)),
        "b_i":   jnp.zeros((1, hidden), jnp.float32),
        "b_ste": jnp.ones((1, hidden), jnp.float32),
        "b_fre": jnp.ones((1, freq_dim), jnp.float32),
        "b_c":   jnp.zeros((1, hidden), jnp.float32),
        "b_o":   jnp.zeros((1, hidden), jnp.float32),
        "U_a":   n(ks[10], (freq_dim, 1)),
        "b_a":   jnp.zeros((1, hidden), jnp.float32),
        "W_p":   n(ks[11], (hidden, output_dim)),
        "b_p":   jnp.zeros((1, output_dim), jnp.float32),
        # fc_out = nn.Linear(output_dim, 1): weight passed transposed, bias (1,1).
        "fc_w":  n(ks[12], (output_dim, 1)),
        "fc_b":  n(ks[13], (1, 1)),
    }


def sfm_reference(x, p, *, d_feat, hidden, freq_dim):
    """Pure-JAX reference mirroring the PyTorch forward (un-fused weights,
    3-D state layout, float64 trig like the module)."""
    N = x.shape[0]
    xs = jnp.transpose(x.reshape(N, d_feat, -1), (2, 0, 1))   # (T, N, D)
    T = xs.shape[0]
    h = jnp.zeros((N, hidden), jnp.float32)
    S_re = jnp.zeros((N, hidden, freq_dim), jnp.float32)
    S_im = jnp.zeros((N, hidden, freq_dim), jnp.float32)
    freq64 = np.arange(freq_dim, dtype=np.float64) / freq_dim
    p_out = None
    for ts in range(T):
        xt = xs[ts]
        x_i = xt @ p["W_i"] + p["b_i"]
        x_ste = xt @ p["W_ste"] + p["b_ste"]
        x_fre = xt @ p["W_fre"] + p["b_fre"]
        x_c = xt @ p["W_c"] + p["b_c"]
        x_o = xt @ p["W_o"] + p["b_o"]
        i_g = _hardsigmoid(x_i + h @ p["U_i"])
        ste = _hardsigmoid(x_ste + h @ p["U_ste"])
        fre = _hardsigmoid(x_fre + h @ p["U_fre"])
        f = ste[:, :, None] * fre[:, None, :]
        c = i_g * jnp.tanh(x_c + h @ p["U_c"])
        omega = 2.0 * np.pi * (ts + 1) * freq64              # float64
        re = jnp.asarray(np.cos(omega), jnp.float32)[None, None, :]
        im = jnp.asarray(np.sin(omega), jnp.float32)[None, None, :]
        c3 = c[:, :, None]
        S_re = f * S_re + c3 * re
        S_im = f * S_im + c3 * im
        A = S_re ** 2 + S_im ** 2
        A_a = (A.reshape(-1, freq_dim) @ p["U_a"]).reshape(N, hidden)
        a = jnp.tanh(A_a + p["b_a"])
        o = _hardsigmoid(x_o + h @ p["U_o"])
        h = o * a
        p_out = h @ p["W_p"] + p["b_p"]
    return (p_out @ p["fc_w"] + p["fc_b"]).squeeze()


if __name__ == "__main__":
    # Small shapes consistent with the module's forward:
    #   input (N, d_feat * T) -> reshape (N, d_feat, T) -> permute (N, T, d_feat)
    N, D_FEAT, HIDDEN, FREQ, OUT_DIM, T = 4, 16, 32, 8, 1, 8

    key = jax.random.PRNGKey(0)
    k_x, k_p = jax.random.split(key)
    x = jax.random.normal(k_x, (N, D_FEAT * T), dtype=jnp.float32)
    params = make_params(k_p, D_FEAT, HIDDEN, FREQ, OUT_DIM)

    # Built once; cached across calls (jitted forward takes them as device args).
    consts = build_constants(params, d_feat=D_FEAT, hidden=HIDDEN, freq_dim=FREQ, seq_len=T)

    out = sfm_forward(x, consts)
    out = jax.block_until_ready(out)

    ref = sfm_reference(x, params, d_feat=D_FEAT, hidden=HIDDEN, freq_dim=FREQ)
    assert out.shape == (N,)
    # Tolerance allows for TPU MXU matmul-precision differences between the
    # fused in-kernel GEMM path and the un-fused XLA reference.
    assert jnp.allclose(out, ref, atol=5e-3, rtol=5e-3), (out, ref)

    print("KERNEL_OK")
</pallas_src>

<mosaic_0001>
module attributes {stable_mosaic.version = 11 : i64} {
  func.func @sfm_kernel(%arg0: i32, %arg1: memref<8x4x16xf32, #tpu.memory_space<vmem>>, %arg2: memref<16x136xf32, #tpu.memory_space<vmem>>, %arg3: memref<1x136xf32, #tpu.memory_space<vmem>>, %arg4: memref<32x136xf32, #tpu.memory_space<vmem>>, %arg5: memref<136x1024xf32, #tpu.memory_space<vmem>>, %arg6: memref<256x32xf32, #tpu.memory_space<vmem>>, %arg7: memref<1x32xf32, #tpu.memory_space<vmem>>, %arg8: memref<8x1x256xf32, #tpu.memory_space<vmem>>, %arg9: memref<8x1x256xf32, #tpu.memory_space<vmem>>, %arg10: memref<32x1xf32, #tpu.memory_space<vmem>>, %arg11: memref<1x1xf32, #tpu.memory_space<vmem>>, %arg12: memref<4x1xf32, #tpu.memory_space<vmem>>, %arg13: memref<8x4x136xf32, #tpu.memory_space<vmem>>, %arg14: memref<4x32xf32, #tpu.memory_space<vmem>>, %arg15: memref<4x256xf32, #tpu.memory_space<vmem>>, %arg16: memref<4x256xf32, #tpu.memory_space<vmem>>) attributes {dimension_semantics = [#tpu.dimension_semantics<arbitrary>], iteration_bounds = array<i64: 1>, scalar_prefetch = 0 : i64, scratch_operands = 4 : i64, tpu.core_type = #tpu.core_type<tc>, window_params = [{pipeline_mode = #tpu.pipeline_mode<synchronous>, transform_indices = @transform_0, window_bounds = array<i64: 8, 4, 16>}, {pipeline_mode = #tpu.pipeline_mode<synchronous>, transform_indices = @transform_1, window_bounds = array<i64: 16, 136>}, {pipeline_mode = #tpu.pipeline_mode<synchronous>, transform_indices = @transform_2, window_bounds = array<i64: 1, 136>}, {pipeline_mode = #tpu.pipeline_mode<synchronous>, transform_indices = @transform_3, window_bounds = array<i64: 32, 136>}, {pipeline_mode = #tpu.pipeline_mode<synchronous>, transform_indices = @transform_4, window_bounds = array<i64: 136, 1024>}, {pipeline_mode = #tpu.pipeline_mode<synchronous>, transform_indices = @transform_5, window_bounds = array<i64: 256, 32>}, {pipeline_mode = #tpu.pipeline_mode<synchronous>, transform_indices = @transform_6, window_bounds = array<i64: 1, 32>}, {pipeline_mode = #tpu.pipeline_mode<synchronous>, transform_indices = @transform_7, window_bounds = array<i64: 8, 1, 256>}, {pipeline_mode = #tpu.pipeline_mode<synchronous>, transform_indices = @transform_8, window_bounds = array<i64: 8, 1, 256>}, {pipeline_mode = #tpu.pipeline_mode<synchronous>, transform_indices = @transform_9, window_bounds = array<i64: 32, 1>}, {pipeline_mode = #tpu.pipeline_mode<synchronous>, transform_indices = @transform_10, window_bounds = array<i64: 1, 1>}, {pipeline_mode = #tpu.pipeline_mode<synchronous>, transform_indices = @transform_11, window_bounds = array<i64: 4, 1>}]} {
    %c0 = arith.constant 0 : index
    %c0_0 = arith.constant 0 : index
    %0 = vector.load %arg2[%c0, %c0_0] : memref<16x136xf32, #tpu.memory_space<vmem>>, vector<16x136xf32>
    %c0_1 = arith.constant 0 : index
    %c0_2 = arith.constant 0 : index
    %1 = vector.load %arg3[%c0_1, %c0_2] : memref<1x136xf32, #tpu.memory_space<vmem>>, vector<1x136xf32>
    %c0_i32 = arith.constant 0 : i32
    %2 = arith.index_cast %c0_i32 : i32 to index
    %c0_3 = arith.constant 0 : index
    %c0_4 = arith.constant 0 : index
    %3 = vector.load %arg1[%2, %c0_3, %c0_4] : memref<8x4x16xf32, #tpu.memory_space<vmem>>, vector<1x4x16xf32>
    %4 = vector.shape_cast %3 : vector<1x4x16xf32> to vector<4x16xf32>
    %cst = arith.constant dense<0.000000e+00> : vector<4x136xf32>
    %5 = tpu.matmul %4, %0, %cst {dimension_numbers = #tpu.dot_dimension_numbers<[1], [0], [0], [1], [0, 0, 1, 1], [], []>} : vector<4x16xf32>, vector<16x136xf32>, vector<4x136xf32> -> vector<4x136xf32>
    %6 = vector.broadcast %1 : vector<1x136xf32> to vector<4x136xf32>
    %7 = arith.addf %5, %6 : vector<4x136xf32>
    %8 = arith.index_cast %c0_i32 : i32 to index
    %c0_5 = arith.constant 0 : index
    %c0_6 = arith.constant 0 : index
    %9 = vector.load %arg13[%8, %c0_5, %c0_6] : memref<8x4x136xf32, #tpu.memory_space<vmem>>, vector<1x4x136xf32>
    %10 = vector.shape_cast %9 : vector<1x4x136xf32> to vector<4x136xf32>
    %11 = vector.shape_cast %7 : vector<4x136xf32> to vector<1x4x136xf32>
    tpu.vector_store %arg13[%8, %c0_5, %c0_6], %11 {strides = array<i32>} : memref<8x4x136xf32, #tpu.memory_space<vmem>>, vector<1x4x136xf32>,
    %c1_i32 = arith.constant 1 : i32
    %12 = arith.index_cast %c1_i32 : i32 to index
    %c0_7 = arith.constant 0 : index
    %c0_8 = arith.constant 0 : index
    %13 = vector.load %arg1[%12, %c0_7, %c0_8] : memref<8x4x16xf32, #tpu.memory_space<vmem>>, vector<1x4x16xf32>
    %14 = vector.shape_cast %13 : vector<1x4x16xf32> to vector<4x16xf32>
    %cst_9 = arith.constant dense<0.000000e+00> : vector<4x136xf32>
    %15 = tpu.matmul %14, %0, %cst_9 {dimension_numbers = #tpu.dot_dimension_numbers<[1], [0], [0], [1], [0, 0, 1, 1], [], []>} : vector<4x16xf32>, vector<16x136xf32>, vector<4x136xf32> -> vector<4x136xf32>
    %16 = vector.broadcast %1 : vector<1x136xf32> to vector<4x136xf32>
    %17 = arith.addf %15, %16 : vector<4x136xf32>
    %18 = arith.index_cast %c1_i32 : i32 to index
    %c0_10 = arith.constant 0 : index
    %c0_11 = arith.constant 0 : index
    %19 = vector.load %arg13[%18, %c0_10, %c0_11] : memref<8x4x136xf32, #tpu.memory_space<vmem>>, vector<1x4x136xf32>
    %20 = vector.shape_cast %19 : vector<1x4x136xf32> to vector<4x136xf32>
    %21 = vector.shape_cast %17 : vector<4x136xf32> to vector<1x4x136xf32>
    tpu.vector_store %arg13[%18, %c0_10, %c0_11], %21 {strides = array<i32>} : memref<8x4x136xf32, #tpu.memory_space<vmem>>, vector<1x4x136xf32>,
    %c2_i32 = arith.constant 2 : i32
    %22 = arith.index_cast %c2_i32 : i32 to index
    %c0_12 = arith.constant 0 : index
    %c0_13 = arith.constant 0 : index
    %23 = vector.load %arg1[%22, %c0_12, %c0_13] : memref<8x4x16xf32, #tpu.memory_space<vmem>>, vector<1x4x16xf32>
    %24 = vector.shape_cast %23 : vector<1x4x16xf32> to vector<4x16xf32>
    %cst_14 = arith.constant dense<0.000000e+00> : vector<4x136xf32>
    %25 = tpu.matmul %24, %0, %cst_14 {dimension_numbers = #tpu.dot_dimension_numbers<[1], [0], [0], [1], [0, 0, 1, 1], [], []>} : vector<4x16xf32>, vector<16x136xf32>, vector<4x136xf32> -> vector<4x136xf32>
    %26 = vector.broadcast %1 : vector<1x136xf32> to vector<4x136xf32>
    %27 = arith.addf %25, %26 : vector<4x136xf32>
    %28 = arith.index_cast %c2_i32 : i32 to index
    %c0_15 = arith.constant 0 : index
    %c0_16 = arith.constant 0 : index
    %29 = vector.load %arg13[%28, %c0_15, %c0_16] : memref<8x4x136xf32, #tpu.memory_space<vmem>>, vector<1x4x136xf32>
    %30 = vector.shape_cast %29 : vector<1x4x136xf32> to vector<4x136xf32>
    %31 = vector.shape_cast %27 : vector<4x136xf32> to vector<1x4x136xf32>
    tpu.vector_store %arg13[%28, %c0_15, %c0_16], %31 {strides = array<i32>} : memref<8x4x136xf32, #tpu.memory_space<vmem>>, vector<1x4x136xf32>,
    %c3_i32 = arith.constant 3 : i32
    %32 = arith.index_cast %c3_i32 : i32 to index
    %c0_17 = arith.constant 0 : index
    %c0_18 = arith.constant 0 : index
    %33 = vector.load %arg1[%32, %c0_17, %c0_18] : memref<8x4x16xf32, #tpu.memory_space<vmem>>, vector<1x4x16xf32>
    %34 = vector.shape_cast %33 : vector<1x4x16xf32> to vector<4x16xf32>
    %cst_19 = arith.constant dense<0.000000e+00> : vector<4x136xf32>
    %35 = tpu.matmul %34, %0, %cst_19 {dimension_numbers = #tpu.dot_dimension_numbers<[1], [0], [0], [1], [0, 0, 1, 1], [], []>} : vector<4x16xf32>, vector<16x136xf32>, vector<4x136xf32> -> vector<4x136xf32>
    %36 = vector.broadcast %1 : vector<1x136xf32> to vector<4x136xf32>
    %37 = arith.addf %35, %36 : vector<4x136xf32>
    %38 = arith.index_cast %c3_i32 : i32 to index
    %c0_20 = arith.constant 0 : index
    %c0_21 = arith.constant 0 : index
    %39 = vector.load %arg13[%38, %c0_20, %c0_21] : memref<8x4x136xf32, #tpu.memory_space<vmem>>, vector<1x4x136xf32>
    %40 = vector.shape_cast %39 : vector<1x4x136xf32> to vector<4x136xf32>
    %41 = vector.shape_cast %37 : vector<4x136xf32> to vector<1x4x136xf32>
    tpu.vector_store %arg13[%38, %c0_20, %c0_21], %41 {strides = array<i32>} : memref<8x4x136xf32, #tpu.memory_space<vmem>>, vector<1x4x136xf32>,
    %c4_i32 = arith.constant 4 : i32
    %42 = arith.index_cast %c4_i32 : i32 to index
    %c0_22 = arith.constant 0 : index
    %c0_23 = arith.constant 0 : index
    %43 = vector.load %arg1[%42, %c0_22, %c0_23] : memref<8x4x16xf32, #tpu.memory_space<vmem>>, vector<1x4x16xf32>
    %44 = vector.shape_cast %43 : vector<1x4x16xf32> to vector<4x16xf32>
    %cst_24 = arith.constant dense<0.000000e+00> : vector<4x136xf32>
    %45 = tpu.matmul %44, %0, %cst_24 {dimension_numbers = #tpu.dot_dimension_numbers<[1], [0], [0], [1], [0, 0, 1, 1], [], []>} : vector<4x16xf32>, vector<16x136xf32>, vector<4x136xf32> -> vector<4x136xf32>
    %46 = vector.broadcast %1 : vector<1x136xf32> to vector<4x136xf32>
    %47 = arith.addf %45, %46 : vector<4x136xf32>
    %48 = arith.index_cast %c4_i32 : i32 to index
    %c0_25 = arith.constant 0 : index
    %c0_26 = arith.constant 0 : index
    %49 = vector.load %arg13[%48, %c0_25, %c0_26] : memref<8x4x136xf32, #tpu.memory_space<vmem>>, vector<1x4x136xf32>
    %50 = vector.shape_cast %49 : vector<1x4x136xf32> to vector<4x136xf32>
    %51 = vector.shape_cast %47 : vector<4x136xf32> to vector<1x4x136xf32>
    tpu.vector_store %arg13[%48, %c0_25, %c0_26], %51 {strides = array<i32>} : memref<8x4x136xf32, #tpu.memory_space<vmem>>, vector<1x4x136xf32>,
    %c5_i32 = arith.constant 5 : i32
    %52 = arith.index_cast %c5_i32 : i32 to index
    %c0_27 = arith.constant 0 : index
    %c0_28 = arith.constant 0 : index
    %53 = vector.load %arg1[%52, %c0_27, %c0_28] : memref<8x4x16xf32, #tpu.memory_space<vmem>>, vector<1x4x16xf32>
    %54 = vector.shape_cast %53 : vector<1x4x16xf32> to vector<4x16xf32>
    %cst_29 = arith.constant dense<0.000000e+00> : vector<4x136xf32>
    %55 = tpu.matmul %54, %0, %cst_29 {dimension_numbers = #tpu.dot_dimension_numbers<[1], [0], [0], [1], [0, 0, 1, 1], [], []>} : vector<4x16xf32>, vector<16x136xf32>, vector<4x136xf32> -> vector<4x136xf32>
    %56 = vector.broadcast %1 : vector<1x136xf32> to vector<4x136xf32>
    %57 = arith.addf %55, %56 : vector<4x136xf32>
    %58 = arith.index_cast %c5_i32 : i32 to index
    %c0_30 = arith.constant 0 : index
    %c0_31 = arith.constant 0 : index
    %59 = vector.load %arg13[%58, %c0_30, %c0_31] : memref<8x4x136xf32, #tpu.memory_space<vmem>>, vector<1x4x136xf32>
    %60 = vector.shape_cast %59 : vector<1x4x136xf32> to vector<4x136xf32>
    %61 = vector.shape_cast %57 : vector<4x136xf32> to vector<1x4x136xf32>
    tpu.vector_store %arg13[%58, %c0_30, %c0_31], %61 {strides = array<i32>} : memref<8x4x136xf32, #tpu.memory_space<vmem>>, vector<1x4x136xf32>,
    %c6_i32 = arith.constant 6 : i32
    %62 = arith.index_cast %c6_i32 : i32 to index
    %c0_32 = arith.constant 0 : index
    %c0_33 = arith.constant 0 : index
    %63 = vector.load %arg1[%62, %c0_32, %c0_33] : memref<8x4x16xf32, #tpu.memory_space<vmem>>, vector<1x4x16xf32>
    %64 = vector.shape_cast %63 : vector<1x4x16xf32> to vector<4x16xf32>
    %cst_34 = arith.constant dense<0.000000e+00> : vector<4x136xf32>
    %65 = tpu.matmul %64, %0, %cst_34 {dimension_numbers = #tpu.dot_dimension_numbers<[1], [0], [0], [1], [0, 0, 1, 1], [], []>} : vector<4x16xf32>, vector<16x136xf32>, vector<4x136xf32> -> vector<4x136xf32>
    %66 = vector.broadcast %1 : vector<1x136xf32> to vector<4x136xf32>
    %67 = arith.addf %65, %66 : vector<4x136xf32>
    %68 = arith.index_cast %c6_i32 : i32 to index
    %c0_35 = arith.constant 0 : index
    %c0_36 = arith.constant 0 : index
    %69 = vector.load %arg13[%68, %c0_35, %c0_36] : memref<8x4x136xf32, #tpu.memory_space<vmem>>, vector<1x4x136xf32>
    %70 = vector.shape_cast %69 : vector<1x4x136xf32> to vector<4x136xf32>
    %71 = vector.shape_cast %67 : vector<4x136xf32> to vector<1x4x136xf32>
    tpu.vector_store %arg13[%68, %c0_35, %c0_36], %71 {strides = array<i32>} : memref<8x4x136xf32, #tpu.memory_space<vmem>>, vector<1x4x136xf32>,
    %c7_i32 = arith.constant 7 : i32
    %72 = arith.index_cast %c7_i32 : i32 to index
    %c0_37 = arith.constant 0 : index
    %c0_38 = arith.constant 0 : index
    %73 = vector.load %arg1[%72, %c0_37, %c0_38] : memref<8x4x16xf32, #tpu.memory_space<vmem>>, vector<1x4x16xf32>
    %74 = vector.shape_cast %73 : vector<1x4x16xf32> to vector<4x16xf32>
    %cst_39 = arith.constant dense<0.000000e+00> : vector<4x136xf32>
    %75 = tpu.matmul %74, %0, %cst_39 {dimension_numbers = #tpu.dot_dimension_numbers<[1], [0], [0], [1], [0, 0, 1, 1], [], []>} : vector<4x16xf32>, vector<16x136xf32>, vector<4x136xf32> -> vector<4x136xf32>
    %76 = vector.broadcast %1 : vector<1x136xf32> to vector<4x136xf32>
    %77 = arith.addf %75, %76 : vector<4x136xf32>
    %78 = arith.index_cast %c7_i32 : i32 to index
    %c0_40 = arith.constant 0 : index
    %c0_41 = arith.constant 0 : index
    %79 = vector.load %arg13[%78, %c0_40, %c0_41] : memref<8x4x136xf32, #tpu.memory_space<vmem>>, vector<1x4x136xf32>
    %80 = vector.shape_cast %79 : vector<1x4x136xf32> to vector<4x136xf32>
    %81 = vector.shape_cast %77 : vector<4x136xf32> to vector<1x4x136xf32>
    tpu.vector_store %arg13[%78, %c0_40, %c0_41], %81 {strides = array<i32>} : memref<8x4x136xf32, #tpu.memory_space<vmem>>, vector<1x4x136xf32>,
    %c8_i32 = arith.constant 8 : i32
    %c0_42 = arith.constant 0 : index
    %c0_43 = arith.constant 0 : index
    %82 = vector.load %arg4[%c0_42, %c0_43] : memref<32x136xf32, #tpu.memory_space<vmem>>, vector<32x136xf32>
    %c0_44 = arith.constant 0 : index
    %c0_45 = arith.constant 0 : index
    %83 = vector.load %arg5[%c0_44, %c0_45] : memref<136x1024xf32, #tpu.memory_space<vmem>>, vector<136x1024xf32>
    %c0_46 = arith.constant 0 : index
    %c0_47 = arith.constant 0 : index
    %84 = vector.load %arg6[%c0_46, %c0_47] : memref<256x32xf32, #tpu.memory_space<vmem>>, vector<256x32xf32>
    %c0_48 = arith.constant 0 : index
    %c0_49 = arith.constant 0 : index
    %85 = vector.load %arg7[%c0_48, %c0_49] : memref<1x32xf32, #tpu.memory_space<vmem>>, vector<1x32xf32>
    %86 = tpu.iota {dimensions = array<i32: 1>} : vector<4x136xi32>
    %c64_i32 = arith.constant 64 : i32
    %87 = vector.broadcast %c64_i32 : i32 to vector<4x136xi32>
    %88 = arith.cmpi sge, %86, %87 : vector<4x136xi32>
    %c96_i32 = arith.constant 96 : i32
    %89 = vector.broadcast %c96_i32 : i32 to vector<4x136xi32>
    %90 = arith.cmpi slt, %86, %89 : vector<4x136xi32>
    %91 = arith.andi %88, %90 : vector<4x136xi1>
    %c0_50 = arith.constant 0 : index
    %c0_51 = arith.constant 0 : index
    %c0_52 = arith.constant 0 : index
    %92 = vector.load %arg13[%c0_50, %c0_51, %c0_52] : memref<8x4x136xf32, #tpu.memory_space<vmem>>, vector<1x4x136xf32>
    %93 = vector.shape_cast %92 : vector<1x4x136xf32> to vector<4x136xf32>
    %94 = math.tanh %93 : vector<4x136xf32>
    %cst_53 = arith.constant 0.166666672 : f32
    %95 = vector.broadcast %cst_53 : f32 to vector<4x136xf32>
    %96 = arith.mulf %93, %95 : vector<4x136xf32>
    %cst_54 = arith.constant 5.000000e-01 : f32
    %97 = vector.broadcast %cst_54 : f32 to vector<4x136xf32>
    %98 = arith.addf %96, %97 : vector<4x136xf32>
    %cst_55 = arith.constant 0.000000e+00 : f32
    %cst_56 = arith.constant 1.000000e+00 : f32
    %99 = vector.broadcast %cst_55 : f32 to vector<4x136xf32>
    %100 = arith.maximumf %99, %98 : vector<4x136xf32>
    %101 = vector.broadcast %cst_56 : f32 to vector<4x136xf32>
    %102 = arith.minimumf %101, %100 : vector<4x136xf32>
    %103 = arith.select %91, %94, %102 : vector<4x136xi1>, vector<4x136xf32>
    %cst_57 = arith.constant dense<0.000000e+00> : vector<4x1024xf32>
    %104 = tpu.matmul %103, %83, %cst_57 {dimension_numbers = #tpu.dot_dimension_numbers<[1], [0], [0], [1], [0, 0, 1, 1], [], []>} : vector<4x136xf32>, vector<136x1024xf32>, vector<4x1024xf32> -> vector<4x1024xf32>
    %105 = vector.extract_strided_slice %104 {offsets = [0, 256], sizes = [4, 256], strides = [1, 1]} : vector<4x1024xf32> to vector<4x256xf32>
    %106 = vector.extract_strided_slice %104 {offsets = [0, 512], sizes = [4, 256], strides = [1, 1]} : vector<4x1024xf32> to vector<4x256xf32>
    %107 = arith.mulf %105, %106 : vector<4x256xf32>
    %c0_58 = arith.constant 0 : index
    %c0_59 = arith.constant 0 : index
    %c0_60 = arith.constant 0 : index
    %108 = vector.load %arg8[%c0_58, %c0_59, %c0_60] : memref<8x1x256xf32, #tpu.memory_space<vmem>>, vector<1x1x256xf32>
    %109 = vector.shape_cast %108 : vector<1x1x256xf32> to vector<1x256xf32>
    %c0_61 = arith.constant 0 : index
    %c0_62 = arith.constant 0 : index
    %c0_63 = arith.constant 0 : index
    %110 = vector.load %arg9[%c0_61, %c0_62, %c0_63] : memref<8x1x256xf32, #tpu.memory_space<vmem>>, vector<1x1x256xf32>
    %111 = vector.shape_cast %110 : vector<1x1x256xf32> to vector<1x256xf32>
    %112 = vector.broadcast %109 : vector<1x256xf32> to vector<4x256xf32>
    %113 = arith.mulf %107, %112 : vector<4x256xf32>
    %114 = vector.broadcast %111 : vector<1x256xf32> to vector<4x256xf32>
    %115 = arith.mulf %107, %114 : vector<4x256xf32>
    %116 = arith.mulf %113, %113 : vector<4x256xf32>
    %117 = arith.mulf %115, %115 : vector<4x256xf32>
    %118 = arith.addf %116, %117 : vector<4x256xf32>
    %cst_64 = arith.constant dense<0.000000e+00> : vector<4x32xf32>
    %119 = tpu.matmul %118, %84, %cst_64 {dimension_numbers = #tpu.dot_dimension_numbers<[1], [0], [0], [1], [0, 0, 1, 1], [], []>} : vector<4x256xf32>, vector<256x32xf32>, vector<4x32xf32> -> vector<4x32xf32>
    %120 = vector.broadcast %85 : vector<1x32xf32> to vector<4x32xf32>
    %121 = arith.addf %119, %120 : vector<4x32xf32>
    %122 = math.tanh %121 : vector<4x32xf32>
    %123 = vector.extract_strided_slice %103 {offsets = [0, 96], sizes = [4, 32], strides = [1, 1]} : vector<4x136xf32> to vector<4x32xf32>
    %124 = arith.mulf %123, %122 : vector<4x32xf32>
    %c0_65 = arith.constant 0 : index
    %c0_66 = arith.constant 0 : index
    %125 = vector.load %arg14[%c0_65, %c0_66] : memref<4x32xf32, #tpu.memory_space<vmem>>, vector<4x32xf32>
    tpu.vector_store %arg14[%c0_65, %c0_66], %124 {strides = array<i32>} : memref<4x32xf32, #tpu.memory_space<vmem>>, vector<4x32xf32>,
    %c0_67 = arith.constant 0 : index
    %c0_68 = arith.constant 0 : index
    %126 = vector.load %arg15[%c0_67, %c0_68] : memref<4x256xf32, #tpu.memory_space<vmem>>, vector<4x256xf32>
    tpu.vector_store %arg15[%c0_67, %c0_68], %113 {strides = array<i32>} : memref<4x256xf32, #tpu.memory_space<vmem>>, vector<4x256xf32>,
    %c0_69 = arith.constant 0 : index
    %c0_70 = arith.constant 0 : index
    %127 = vector.load %arg16[%c0_69, %c0_70] : memref<4x256xf32, #tpu.memory_space<vmem>>, vector<4x256xf32>
    tpu.vector_store %arg16[%c0_69, %c0_70], %115 {strides = array<i32>} : memref<4x256xf32, #tpu.memory_space<vmem>>, vector<4x256xf32>,
    %c1_i32_71 = arith.constant 1 : i32
    %128 = arith.index_cast %c1_i32_71 : i32 to index
    %c0_72 = arith.constant 0 : index
    %c0_73 = arith.constant 0 : index
    %129 = vector.load %arg13[%128, %c0_72, %c0_73] : memref<8x4x136xf32, #tpu.memory_space<vmem>>, vector<1x4x136xf32>
    %130 = vector.shape_cast %129 : vector<1x4x136xf32> to vector<4x136xf32>
    %c0_74 = arith.constant 0 : index
    %c0_75 = arith.constant 0 : index
    %131 = vector.load %arg14[%c0_74, %c0_75] : memref<4x32xf32, #tpu.memory_space<vmem>>, vector<4x32xf32>
    %cst_76 = arith.constant dense<0.000000e+00> : vector<4x136xf32>
    %132 = tpu.matmul %131, %82, %cst_76 {dimension_numbers = #tpu.dot_dimension_numbers<[1], [0], [0], [1], [0, 0, 1, 1], [], []>} : vector<4x32xf32>, vector<32x136xf32>, vector<4x136xf32> -> vector<4x136xf32>
    %133 = arith.addf %130, %132 : vector<4x136xf32>
    %134 = math.tanh %133 : vector<4x136xf32>
    %cst_77 = arith.constant 0.166666672 : f32
    %135 = vector.broadcast %cst_77 : f32 to vector<4x136xf32>
    %136 = arith.mulf %133, %135 : vector<4x136xf32>
    %cst_78 = arith.constant 5.000000e-01 : f32
    %137 = vector.broadcast %cst_78 : f32 to vector<4x136xf32>
    %138 = arith.addf %136, %137 : vector<4x136xf32>
    %cst_79 = arith.constant 0.000000e+00 : f32
    %cst_80 = arith.constant 1.000000e+00 : f32
    %139 = vector.broadcast %cst_79 : f32 to vector<4x136xf32>
    %140 = arith.maximumf %139, %138 : vector<4x136xf32>
    %141 = vector.broadcast %cst_80 : f32 to vector<4x136xf32>
    %142 = arith.minimumf %141, %140 : vector<4x136xf32>
    %143 = arith.select %91, %134, %142 : vector<4x136xi1>, vector<4x136xf32>
    %cst_81 = arith.constant dense<0.000000e+00> : vector<4x1024xf32>
    %144 = tpu.matmul %143, %83, %cst_81 {dimension_numbers = #tpu.dot_dimension_numbers<[1], [0], [0], [1], [0, 0, 1, 1], [], []>} : vector<4x136xf32>, vector<136x1024xf32>, vector<4x1024xf32> -> vector<4x1024xf32>
    %145 = vector.extract_strided_slice %144 {offsets = [0, 256], sizes = [4, 256], strides = [1, 1]} : vector<4x1024xf32> to vector<4x256xf32>
    %146 = vector.extract_strided_slice %144 {offsets = [0, 512], sizes = [4, 256], strides = [1, 1]} : vector<4x1024xf32> to vector<4x256xf32>
    %147 = arith.mulf %145, %146 : vector<4x256xf32>
    %148 = arith.index_cast %c1_i32_71 : i32 to index
    %c0_82 = arith.constant 0 : index
    %c0_83 = arith.constant 0 : index
    %149 = vector.load %arg8[%148, %c0_82, %c0_83] : memref<8x1x256xf32, #tpu.memory_space<vmem>>, vector<1x1x256xf32>
    %150 = vector.shape_cast %149 : vector<1x1x256xf32> to vector<1x256xf32>
    %151 = arith.index_cast %c1_i32_71 : i32 to index
    %c0_84 = arith.constant 0 : index
    %c0_85 = arith.constant 0 : index
    %152 = vector.load %arg9[%151, %c0_84, %c0_85] : memref<8x1x256xf32, #tpu.memory_space<vmem>>, vector<1x1x256xf32>
    %153 = vector.shape_cast %152 : vector<1x1x256xf32> to vector<1x256xf32>
    %154 = vector.extract_strided_slice %144 {offsets = [0, 0], sizes = [4, 256], strides = [1, 1]} : vector<4x1024xf32> to vector<4x256xf32>
    %155 = vector.extract_strided_slice %144 {offsets = [0, 768], sizes = [4, 256], strides = [1, 1]} : vector<4x1024xf32> to vector<4x256xf32>
    %156 = arith.mulf %154, %155 : vector<4x256xf32>
    %c0_86 = arith.constant 0 : index
    %c0_87 = arith.constant 0 : index
    %157 = vector.load %arg15[%c0_86, %c0_87] : memref<4x256xf32, #tpu.memory_space<vmem>>, vector<4x256xf32>
    %158 = arith.mulf %156, %157 : vector<4x256xf32>
    %159 = vector.broadcast %150 : vector<1x256xf32> to vector<4x256xf32>
    %160 = arith.mulf %147, %159 : vector<4x256xf32>
    %161 = arith.addf %158, %160 : vector<4x256xf32>
    %c0_88 = arith.constant 0 : index
    %c0_89 = arith.constant 0 : index
    %162 = vector.load %arg16[%c0_88, %c0_89] : memref<4x256xf32, #tpu.memory_space<vmem>>, vector<4x256xf32>
    %163 = arith.mulf %156, %162 : vector<4x256xf32>
    %164 = vector.broadcast %153 : vector<1x256xf32> to vector<4x256xf32>
    %165 = arith.mulf %147, %164 : vector<4x256xf32>
    %166 = arith.addf %163, %165 : vector<4x256xf32>
    %167 = arith.mulf %161, %161 : vector<4x256xf32>
    %168 = arith.mulf %166, %166 : vector<4x256xf32>
    %169 = arith.addf %167, %168 : vector<4x256xf32>
    %cst_90 = arith.constant dense<0.000000e+00> : vector<4x32xf32>
    %170 = tpu.matmul %169, %84, %cst_90 {dimension_numbers = #tpu.dot_dimension_numbers<[1], [0], [0], [1], [0, 0, 1, 1], [], []>} : vector<4x256xf32>, vector<256x32xf32>, vector<4x32xf32> -> vector<4x32xf32>
    %171 = vector.broadcast %85 : vector<1x32xf32> to vector<4x32xf32>
    %172 = arith.addf %170, %171 : vector<4x32xf32>
    %173 = math.tanh %172 : vector<4x32xf32>
    %174 = vector.extract_strided_slice %143 {offsets = [0, 96], sizes = [4, 32], strides = [1, 1]} : vector<4x136xf32> to vector<4x32xf32>
    %175 = arith.mulf %174, %173 : vector<4x32xf32>
    %c0_91 = arith.constant 0 : index
    %c0_92 = arith.constant 0 : index
    %176 = vector.load %arg14[%c0_91, %c0_92] : memref<4x32xf32, #tpu.memory_space<vmem>>, vector<4x32xf32>
    tpu.vector_store %arg14[%c0_91, %c0_92], %175 {strides = array<i32>} : memref<4x32xf32, #tpu.memory_space<vmem>>, vector<4x32xf32>,
    %c0_93 = arith.constant 0 : index
    %c0_94 = arith.constant 0 : index
    %177 = vector.load %arg15[%c0_93, %c0_94] : memref<4x256xf32, #tpu.memory_space<vmem>>, vector<4x256xf32>
    tpu.vector_store %arg15[%c0_93, %c0_94], %161 {strides = array<i32>} : memref<4x256xf32, #tpu.memory_space<vmem>>, vector<4x256xf32>,
    %c0_95 = arith.constant 0 : index
    %c0_96 = arith.constant 0 : index
    %178 = vector.load %arg16[%c0_95, %c0_96] : memref<4x256xf32, #tpu.memory_space<vmem>>, vector<4x256xf32>
    tpu.vector_store %arg16[%c0_95, %c0_96], %166 {strides = array<i32>} : memref<4x256xf32, #tpu.memory_space<vmem>>, vector<4x256xf32>,
    %c2_i32_97 = arith.constant 2 : i32
    %179 = arith.index_cast %c2_i32_97 : i32 to index
    %c0_98 = arith.constant 0 : index
    %c0_99 = arith.constant 0 : index
    %180 = vector.load %arg13[%179, %c0_98, %c0_99] : memref<8x4x136xf32, #tpu.memory_space<vmem>>, vector<1x4x136xf32>
    %181 = vector.shape_cast %180 : vector<1x4x136xf32> to vector<4x136xf32>
    %c0_100 = arith.constant 0 : index
    %c0_101 = arith.constant 0 : index
    %182 = vector.load %arg14[%c0_100, %c0_101] : memref<4x32xf32, #tpu.memory_space<vmem>>, vector<4x32xf32>
    %cst_102 = arith.constant dense<0.000000e+00> : vector<4x136xf32>
    %183 = tpu.matmul %182, %82, %cst_102 {dimension_numbers = #tpu.dot_dimension_numbers<[1], [0], [0], [1], [0, 0, 1, 1], [], []>} : vector<4x32xf32>, vector<32x136xf32>, vector<4x136xf32> -> vector<4x136xf32>
    %184 = arith.addf %181, %183 : vector<4x136xf32>
    %185 = math.tanh %184 : vector<4x136xf32>
    %cst_103 = arith.constant 0.166666672 : f32
    %186 = vector.broadcast %cst_103 : f32 to vector<4x136xf32>
    %187 = arith.mulf %184, %186 : vector<4x136xf32>
    %cst_104 = arith.constant 5.000000e-01 : f32
    %188 = vector.broadcast %cst_104 : f32 to vector<4x136xf32>
    %189 = arith.addf %187, %188 : vector<4x136xf32>
    %cst_105 = arith.constant 0.000000e+00 : f32
    %cst_106 = arith.constant 1.000000e+00 : f32
    %190 = vector.broadcast %cst_105 : f32 to vector<4x136xf32>
    %191 = arith.maximumf %190, %189 : vector<4x136xf32>
    %192 = vector.broadcast %cst_106 : f32 to vector<4x136xf32>
    %193 = arith.minimumf %192, %191 : vector<4x136xf32>
    %194 = arith.select %91, %185, %193 : vector<4x136xi1>, vector<4x136xf32>
    %cst_107 = arith.constant dense<0.000000e+00> : vector<4x1024xf32>
    %195 = tpu.matmul %194, %83, %cst_107 {dimension_numbers = #tpu.dot_dimension_numbers<[1], [0], [0], [1], [0, 0, 1, 1], [], []>} : vector<4x136xf32>, vector<136x1024xf32>, vector<4x1024xf32> -> vector<4x1024xf32>
    %196 = vector.extract_strided_slice %195 {offsets = [0, 256], sizes = [4, 256], strides = [1, 1]} : vector<4x1024xf32> to vector<4x256xf32>
    %197 = vector.extract_strided_slice %195 {offsets = [0, 512], sizes = [4, 256], strides = [1, 1]} : vector<4x1024xf32> to vector<4x256xf32>
    %198 = arith.mulf %196, %197 : vector<4x256xf32>
    %199 = arith.index_cast %c2_i32_97 : i32 to index
    %c0_108 = arith.constant 0 : index
    %c0_109 = arith.constant 0 : index
    %200 = vector.load %arg8[%199, %c0_108, %c0_109] : memref<8x1x256xf32, #tpu.memory_space<vmem>>, vector<1x1x256xf32>
    %201 = vector.shape_cast %200 : vector<1x1x256xf32> to vector<1x256xf32>
    %202 = arith.index_cast %c2_i32_97 : i32 to index
    %c0_110 = arith.constant 0 : index
    %c0_111 = arith.constant 0 : index
    %203 = vector.load %arg9[%202, %c0_110, %c0_111] : memref<8x1x256xf32, #tpu.memory_space<vmem>>, vector<1x1x256xf32>
    %204 = vector.shape_cast %203 : vector<1x1x256xf32> to vector<1x256xf32>
    %205 = vector.extract_strided_slice %195 {offsets = [0, 0], sizes = [4, 256], strides = [1, 1]} : vector<4x1024xf32> to vector<4x256xf32>
    %206 = vector.extract_strided_slice %195 {offsets = [0, 768], sizes = [4, 256], strides = [1, 1]} : vector<4x1024xf32> to vector<4x256xf32>
    %207 = arith.mulf %205, %206 : vector<4x256xf32>
    %c0_112 = arith.constant 0 : index
    %c0_113 = arith.constant 0 : index
    %208 = vector.load %arg15[%c0_112, %c0_113] : memref<4x256xf32, #tpu.memory_space<vmem>>, vector<4x256xf32>
    %209 = arith.mulf %207, %208 : vector<4x256xf32>
    %210 = vector.broadcast %201 : vector<1x256xf32> to vector<4x256xf32>
    %211 = arith.mulf %198, %210 : vector<4x256xf32>
    %212 = arith.addf %209, %211 : vector<4x256xf32>
    %c0_114 = arith.constant 0 : index
    %c0_115 = arith.constant 0 : index
    %213 = vector.load %arg16[%c0_114, %c0_115] : memref<4x256xf32, #tpu.memory_space<vmem>>, vector<4x256xf32>
    %214 = arith.mulf %207, %213 : vector<4x256xf32>
    %215 = vector.broadcast %204 : vector<1x256xf32> to vector<4x256xf32>
    %216 = arith.mulf %198, %215 : vector<4x256xf32>
    %217 = arith.addf %214, %216 : vector<4x256xf32>
    %218 = arith.mulf %212, %212 : vector<4x256xf32>
    %219 = arith.mulf %217, %217 : vector<4x256xf32>
    %220 = arith.addf %218, %219 : vector<4x256xf32>
    %cst_116 = arith.constant dense<0.000000e+00> : vector<4x32xf32>
    %221 = tpu.matmul %220, %84, %cst_116 {dimension_numbers = #tpu.dot_dimension_numbers<[1], [0], [0], [1], [0, 0, 1, 1], [], []>} : vector<4x256xf32>, vector<256x32xf32>, vector<4x32xf32> -> vector<4x32xf32>
    %222 = vector.broadcast %85 : vector<1x32xf32> to vector<4x32xf32>
    %223 = arith.addf %221, %222 : vector<4x32xf32>
    %224 = math.tanh %223 : vector<4x32xf32>
    %225 = vector.extract_strided_slice %194 {offsets = [0, 96], sizes = [4, 32], strides = [1, 1]} : vector<4x136xf32> to vector<4x32xf32>
    %226 = arith.mulf %225, %224 : vector<4x32xf32>
    %c0_117 = arith.constant 0 : index
    %c0_118 = arith.constant 0 : index
    %227 = vector.load %arg14[%c0_117, %c0_118] : memref<4x32xf32, #tpu.memory_space<vmem>>, vector<4x32xf32>
    tpu.vector_store %arg14[%c0_117, %c0_118], %226 {strides = array<i32>} : memref<4x32xf32, #tpu.memory_space<vmem>>, vector<4x32xf32>,
    %c0_119 = arith.constant 0 : index
    %c0_120 = arith.constant 0 : index
    %228 = vector.load %arg15[%c0_119, %c0_120] : memref<4x256xf32, #tpu.memory_space<vmem>>, vector<4x256xf32>
    tpu.vector_store %arg15[%c0_119, %c0_120], %212 {strides = array<i32>} : memref<4x256xf32, #tpu.memory_space<vmem>>, vector<4x256xf32>,
    %c0_121 = arith.constant 0 : index
    %c0_122 = arith.constant 0 : index
    %229 = vector.load %arg16[%c0_121, %c0_122] : memref<4x256xf32, #tpu.memory_space<vmem>>, vector<4x256xf32>
    tpu.vector_store %arg16[%c0_121, %c0_122], %217 {strides = array<i32>} : memref<4x256xf32, #tpu.memory_space<vmem>>, vector<4x256xf32>,
    %c3_i32_123 = arith.constant 3 : i32
    %230 = arith.index_cast %c3_i32_123 : i32 to index
    %c0_124 = arith.constant 0 : index
    %c0_125 = arith.constant 0 : index
    %231 = vector.load %arg13[%230, %c0_124, %c0_125] : memref<8x4x136xf32, #tpu.memory_space<vmem>>, vector<1x4x136xf32>
    %232 = vector.shape_cast %231 : vector<1x4x136xf32> to vector<4x136xf32>
    %c0_126 = arith.constant 0 : index
    %c0_127 = arith.constant 0 : index
    %233 = vector.load %arg14[%c0_126, %c0_127] : memref<4x32xf32, #tpu.memory_space<vmem>>, vector<4x32xf32>
    %cst_128 = arith.constant dense<0.000000e+00> : vector<4x136xf32>
    %234 = tpu.matmul %233, %82, %cst_128 {dimension_numbers = #tpu.dot_dimension_numbers<[1], [0], [0], [1], [0, 0, 1, 1], [], []>} : vector<4x32xf32>, vector<32x136xf32>, vector<4x136xf32> -> vector<4x136xf32>
    %235 = arith.addf %232, %234 : vector<4x136xf32>
    %236 = math.tanh %235 : vector<4x136xf32>
    %cst_129 = arith.constant 0.166666672 : f32
    %237 = vector.broadcast %cst_129 : f32 to vector<4x136xf32>
    %238 = arith.mulf %235, %237 : vector<4x136xf32>
    %cst_130 = arith.constant 5.000000e-01 : f32
    %239 = vector.broadcast %cst_130 : f32 to vector<4x136xf32>
    %240 = arith.addf %238, %239 : vector<4x136xf32>
    %cst_131 = arith.constant 0.000000e+00 : f32
    %cst_132 = arith.constant 1.000000e+00 : f32
    %241 = vector.broadcast %cst_131 : f32 to vector<4x136xf32>
    %242 = arith.maximumf %241, %240 : vector<4x136xf32>
    %243 = vector.broadcast %cst_132 : f32 to vector<4x136xf32>
    %244 = arith.minimumf %243, %242 : vector<4x136xf32>
    %245 = arith.select %91, %236, %244 : vector<4x136xi1>, vector<4x136xf32>
    %cst_133 = arith.constant dense<0.000000e+00> : vector<4x1024xf32>
    %246 = tpu.matmul %245, %83, %cst_133 {dimension_numbers = #tpu.dot_dimension_numbers<[1], [0], [0], [1], [0, 0, 1, 1], [], []>} : vector<4x136xf32>, vector<136x1024xf32>, vector<4x1024xf32> -> vector<4x1024xf32>
    %247 = vector.extract_strided_slice %246 {offsets = [0, 256], sizes = [4, 256], strides = [1, 1]} : vector<4x1024xf32> to vector<4x256xf32>
    %248 = vector.extract_strided_slice %246 {offsets = [0, 512], sizes = [4, 256], strides = [1, 1]} : vector<4x1024xf32> to vector<4x256xf32>
    %249 = arith.mulf %247, %248 : vector<4x256xf32>
    %250 = arith.index_cast %c3_i32_123 : i32 to index
    %c0_134 = arith.constant 0 : index
    %c0_135 = arith.constant 0 : index
    %251 = vector.load %arg8[%250, %c0_134, %c0_135] : memref<8x1x256xf32, #tpu.memory_space<vmem>>, vector<1x1x256xf32>
    %252 = vector.shape_cast %251 : vector<1x1x256xf32> to vector<1x256xf32>
    %253 = arith.index_cast %c3_i32_123 : i32 to index
    %c0_136 = arith.constant 0 : index
    %c0_137 = arith.constant 0 : index
    %254 = vector.load %arg9[%253, %c0_136, %c0_137] : memref<8x1x256xf32, #tpu.memory_space<vmem>>, vector<1x1x256xf32>
    %255 = vector.shape_cast %254 : vector<1x1x256xf32> to vector<1x256xf32>
    %256 = vector.extract_strided_slice %246 {offsets = [0, 0], sizes = [4, 256], strides = [1, 1]} : vector<4x1024xf32> to vector<4x256xf32>
    %257 = vector.extract_strided_slice %246 {offsets = [0, 768], sizes = [4, 256], strides = [1, 1]} : vector<4x1024xf32> to vector<4x256xf32>
    %258 = arith.mulf %256, %257 : vector<4x256xf32>
    %c0_138 = arith.constant 0 : index
    %c0_139 = arith.constant 0 : index
    %259 = vector.load %arg15[%c0_138, %c0_139] : memref<4x256xf32, #tpu.memory_space<vmem>>, vector<4x256xf32>
    %260 = arith.mulf %258, %259 : vector<4x256xf32>
    %261 = vector.broadcast %252 : vector<1x256xf32> to vector<4x256xf32>
    %262 = arith.mulf %249, %261 : vector<4x256xf32>
    %263 = arith.addf %260, %262 : vector<4x256xf32>
    %c0_140 = arith.constant 0 : index
    %c0_141 = arith.constant 0 : index
    %264 = vector.load %arg16[%c0_140, %c0_141] : memref<4x256xf32, #tpu.memory_space<vmem>>, vector<4x256xf32>
    %265 = arith.mulf %258, %264 : vector<4x256xf32>
    %266 = vector.broadcast %255 : vector<1x256xf32> to vector<4x256xf32>
    %267 = arith.mulf %249, %266 : vector<4x256xf32>
    %268 = arith.addf %265, %267 : vector<4x256xf32>
    %269 = arith.mulf %263, %263 : vector<4x256xf32>
    %270 = arith.mulf %268, %268 : vector<4x256xf32>
    %271 = arith.addf %269, %270 : vector<4x256xf32>
    %cst_142 = arith.constant dense<0.000000e+00> : vector<4x32xf32>
    %272 = tpu.matmul %271, %84, %cst_142 {dimension_numbers = #tpu.dot_dimension_numbers<[1], [0], [0], [1], [0, 0, 1, 1], [], []>} : vector<4x256xf32>, vector<256x32xf32>, vector<4x32xf32> -> vector<4x32xf32>
    %273 = vector.broadcast %85 : vector<1x32xf32> to vector<4x32xf32>
    %274 = arith.addf %272, %273 : vector<4x32xf32>
    %275 = math.tanh %274 : vector<4x32xf32>
    %276 = vector.extract_strided_slice %245 {offsets = [0, 96], sizes = [4, 32], strides = [1, 1]} : vector<4x136xf32> to vector<4x32xf32>
    %277 = arith.mulf %276, %275 : vector<4x32xf32>
    %c0_143 = arith.constant 0 : index
    %c0_144 = arith.constant 0 : index
    %278 = vector.load %arg14[%c0_143, %c0_144] : memref<4x32xf32, #tpu.memory_space<vmem>>, vector<4x32xf32>
    tpu.vector_store %arg14[%c0_143, %c0_144], %277 {strides = array<i32>} : memref<4x32xf32, #tpu.memory_space<vmem>>, vector<4x32xf32>,
    %c0_145 = arith.constant 0 : index
    %c0_146 = arith.constant 0 : index
    %279 = vector.load %arg15[%c0_145, %c0_146] : memref<4x256xf32, #tpu.memory_space<vmem>>, vector<4x256xf32>
    tpu.vector_store %arg15[%c0_145, %c0_146], %263 {strides = array<i32>} : memref<4x256xf32, #tpu.memory_space<vmem>>, vector<4x256xf32>,
    %c0_147 = arith.constant 0 : index
    %c0_148 = arith.constant 0 : index
    %280 = vector.load %arg16[%c0_147, %c0_148] : memref<4x256xf32, #tpu.memory_space<vmem>>, vector<4x256xf32>
    tpu.vector_store %arg16[%c0_147, %c0_148], %268 {strides = array<i32>} : memref<4x256xf32, #tpu.memory_space<vmem>>, vector<4x256xf32>,
    %c4_i32_149 = arith.constant 4 : i32
    %281 = arith.index_cast %c4_i32_149 : i32 to index
    %c0_150 = arith.constant 0 : index
    %c0_151 = arith.constant 0 : index
    %282 = vector.load %arg13[%281, %c0_150, %c0_151] : memref<8x4x136xf32, #tpu.memory_space<vmem>>, vector<1x4x136xf32>
    %283 = vector.shape_cast %282 : vector<1x4x136xf32> to vector<4x136xf32>
    %c0_152 = arith.constant 0 : index
    %c0_153 = arith.constant 0 : index
    %284 = vector.load %arg14[%c0_152, %c0_153] : memref<4x32xf32, #tpu.memory_space<vmem>>, vector<4x32xf32>
    %cst_154 = arith.constant dense<0.000000e+00> : vector<4x136xf32>
    %285 = tpu.matmul %284, %82, %cst_154 {dimension_numbers = #tpu.dot_dimension_numbers<[1], [0], [0], [1], [0, 0, 1, 1], [], []>} : vector<4x32xf32>, vector<32x136xf32>, vector<4x136xf32> -> vector<4x136xf32>
    %286 = arith.addf %283, %285 : vector<4x136xf32>
    %287 = math.tanh %286 : vector<4x136xf32>
    %cst_155 = arith.constant 0.166666672 : f32
    %288 = vector.broadcast %cst_155 : f32 to vector<4x136xf32>
    %289 = arith.mulf %286, %288 : vector<4x136xf32>
    %cst_156 = arith.constant 5.000000e-01 : f32
    %290 = vector.broadcast %cst_156 : f32 to vector<4x136xf32>
    %291 = arith.addf %289, %290 : vector<4x136xf32>
    %cst_157 = arith.constant 0.000000e+00 : f32
    %cst_158 = arith.constant 1.000000e+00 : f32
    %292 = vector.broadcast %cst_157 : f32 to vector<4x136xf32>
    %293 = arith.maximumf %292, %291 : vector<4x136xf32>
    %294 = vector.broadcast %cst_158 : f32 to vector<4x136xf32>
    %295 = arith.minimumf %294, %293 : vector<4x136xf32>
    %296 = arith.select %91, %287, %295 : vector<4x136xi1>, vector<4x136xf32>
    %cst_159 = arith.constant dense<0.000000e+00> : vector<4x1024xf32>
    %297 = tpu.matmul %296, %83, %cst_159 {dimension_numbers = #tpu.dot_dimension_numbers<[1], [0], [0], [1], [0, 0, 1, 1], [], []>} : vector<4x136xf32>, vector<136x1024xf32>, vector<4x1024xf32> -> vector<4x1024xf32>
    %298 = vector.extract_strided_slice %297 {offsets = [0, 256], sizes = [4, 256], strides = [1, 1]} : vector<4x1024xf32> to vector<4x256xf32>
    %299 = vector.extract_strided_slice %297 {offsets = [0, 512], sizes = [4, 256], strides = [1, 1]} : vector<4x1024xf32> to vector<4x256xf32>
    %300 = arith.mulf %298, %299 : vector<4x256xf32>
    %301 = arith.index_cast %c4_i32_149 : i32 to index
    %c0_160 = arith.constant 0 : index
    %c0_161 = arith.constant 0 : index
    %302 = vector.load %arg8[%301, %c0_160, %c0_161] : memref<8x1x256xf32, #tpu.memory_space<vmem>>, vector<1x1x256xf32>
    %303 = vector.shape_cast %302 : vector<1x1x256xf32> to vector<1x256xf32>
    %304 = arith.index_cast %c4_i32_149 : i32 to index
    %c0_162 = arith.constant 0 : index
    %c0_163 = arith.constant 0 : index
    %305 = vector.load %arg9[%304, %c0_162, %c0_163] : memref<8x1x256xf32, #tpu.memory_space<vmem>>, vector<1x1x256xf32>
    %306 = vector.shape_cast %305 : vector<1x1x256xf32> to vector<1x256xf32>
    %307 = vector.extract_strided_slice %297 {offsets = [0, 0], sizes = [4, 256], strides = [1, 1]} : vector<4x1024xf32> to vector<4x256xf32>
    %308 = vector.extract_strided_slice %297 {offsets = [0, 768], sizes = [4, 256], strides = [1, 1]} : vector<4x1024xf32> to vector<4x256xf32>
    %309 = arith.mulf %307, %308 : vector<4x256xf32>
    %c0_164 = arith.constant 0 : index
    %c0_165 = arith.constant 0 : index
    %310 = vector.load %arg15[%c0_164, %c0_165] : memref<4x256xf32, #tpu.memory_space<vmem>>, vector<4x256xf32>
    %311 = arith.mulf %309, %310 : vector<4x256xf32>
    %312 = vector.broadcast %303 : vector<1x256xf32> to vector<4x256xf32>
    %313 = arith.mulf %300, %312 : vector<4x256xf32>
    %314 = arith.addf %311, %313 : vector<4x256xf32>
    %c0_166 = arith.constant 0 : index
    %c0_167 = arith.constant 0 : index
    %315 = vector.load %arg16[%c0_166, %c0_167] : memref<4x256xf32, #tpu.memory_space<vmem>>, vector<4x256xf32>
    %316 = arith.mulf %309, %315 : vector<4x256xf32>
    %317 = vector.broadcast %306 : vector<1x256xf32> to vector<4x256xf32>
    %318 = arith.mulf %300, %317 : vector<4x256xf32>
    %319 = arith.addf %316, %318 : vector<4x256xf32>
    %320 = arith.mulf %314, %314 : vector<4x256xf32>
    %321 = arith.mulf %319, %319 : vector<4x256xf32>
    %322 = arith.addf %320, %321 : vector<4x256xf32>
    %cst_168 = arith.constant dense<0.000000e+00> : vector<4x32xf32>
    %323 = tpu.matmul %322, %84, %cst_168 {dimension_numbers = #tpu.dot_dimension_numbers<[1], [0], [0], [1], [0, 0, 1, 1], [], []>} : vector<4x256xf32>, vector<256x32xf32>, vector<4x32xf32> -> vector<4x32xf32>
    %324 = vector.broadcast %85 : vector<1x32xf32> to vector<4x32xf32>
    %325 = arith.addf %323, %324 : vector<4x32xf32>
    %326 = math.tanh %325 : vector<4x32xf32>
    %327 = vector.extract_strided_slice %296 {offsets = [0, 96], sizes = [4, 32], strides = [1, 1]} : vector<4x136xf32> to vector<4x32xf32>
    %328 = arith.mulf %327, %326 : vector<4x32xf32>
    %c0_169 = arith.constant 0 : index
    %c0_170 = arith.constant 0 : index
    %329 = vector.load %arg14[%c0_169, %c0_170] : memref<4x32xf32, #tpu.memory_space<vmem>>, vector<4x32xf32>
    tpu.vector_store %arg14[%c0_169, %c0_170], %328 {strides = array<i32>} : memref<4x32xf32, #tpu.memory_space<vmem>>, vector<4x32xf32>,
    %c0_171 = arith.constant 0 : index
    %c0_172 = arith.constant 0 : index
    %330 = vector.load %arg15[%c0_171, %c0_172] : memref<4x256xf32, #tpu.memory_space<vmem>>, vector<4x256xf32>
    tpu.vector_store %arg15[%c0_171, %c0_172], %314 {strides = array<i32>} : memref<4x256xf32, #tpu.memory_space<vmem>>, vector<4x256xf32>,
    %c0_173 = arith.constant 0 : index
    %c0_174 = arith.constant 0 : index
    %331 = vector.load %arg16[%c0_173, %c0_174] : memref<4x256xf32, #tpu.memory_space<vmem>>, vector<4x256xf32>
    tpu.vector_store %arg16[%c0_173, %c0_174], %319 {strides = array<i32>} : memref<4x256xf32, #tpu.memory_space<vmem>>, vector<4x256xf32>,
    %c5_i32_175 = arith.constant 5 : i32
    %332 = arith.index_cast %c5_i32_175 : i32 to index
    %c0_176 = arith.constant 0 : index
    %c0_177 = arith.constant 0 : index
    %333 = vector.load %arg13[%332, %c0_176, %c0_177] : memref<8x4x136xf32, #tpu.memory_space<vmem>>, vector<1x4x136xf32>
    %334 = vector.shape_cast %333 : vector<1x4x136xf32> to vector<4x136xf32>
    %c0_178 = arith.constant 0 : index
    %c0_179 = arith.constant 0 : index
    %335 = vector.load %arg14[%c0_178, %c0_179] : memref<4x32xf32, #tpu.memory_space<vmem>>, vector<4x32xf32>
    %cst_180 = arith.constant dense<0.000000e+00> : vector<4x136xf32>
    %336 = tpu.matmul %335, %82, %cst_180 {dimension_numbers = #tpu.dot_dimension_numbers<[1], [0], [0], [1], [0, 0, 1, 1], [], []>} : vector<4x32xf32>, vector<32x136xf32>, vector<4x136xf32> -> vector<4x136xf32>
    %337 = arith.addf %334, %336 : vector<4x136xf32>
    %338 = math.tanh %337 : vector<4x136xf32>
    %cst_181 = arith.constant 0.166666672 : f32
    %339 = vector.broadcast %cst_181 : f32 to vector<4x136xf32>
    %340 = arith.mulf %337, %339 : vector<4x136xf32>
    %cst_182 = arith.constant 5.000000e-01 : f32
    %341 = vector.broadcast %cst_182 : f32 to vector<4x136xf32>
    %342 = arith.addf %340, %341 : vector<4x136xf32>
    %cst_183 = arith.constant 0.000000e+00 : f32
    %cst_184 = arith.constant 1.000000e+00 : f32
    %343 = vector.broadcast %cst_183 : f32 to vector<4x136xf32>
    %344 = arith.maximumf %343, %342 : vector<4x136xf32>
    %345 = vector.broadcast %cst_184 : f32 to vector<4x136xf32>
    %346 = arith.minimumf %345, %344 : vector<4x136xf32>
    %347 = arith.select %91, %338, %346 : vector<4x136xi1>, vector<4x136xf32>
    %cst_185 = arith.constant dense<0.000000e+00> : vector<4x1024xf32>
    %348 = tpu.matmul %347, %83, %cst_185 {dimension_numbers = #tpu.dot_dimension_numbers<[1], [0], [0], [1], [0, 0, 1, 1], [], []>} : vector<4x136xf32>, vector<136x1024xf32>, vector<4x1024xf32> -> vector<4x1024xf32>
    %349 = vector.extract_strided_slice %348 {offsets = [0, 256], sizes = [4, 256], strides = [1, 1]} : vector<4x1024xf32> to vector<4x256xf32>
    %350 = vector.extract_strided_slice %348 {offsets = [0, 512], sizes = [4, 256], strides = [1, 1]} : vector<4x1024xf32> to vector<4x256xf32>
    %351 = arith.mulf %349, %350 : vector<4x256xf32>
    %352 = arith.index_cast %c5_i32_175 : i32 to index
    %c0_186 = arith.constant 0 : index
    %c0_187 = arith.constant 0 : index
    %353 = vector.load %arg8[%352, %c0_186, %c0_187] : memref<8x1x256xf32, #tpu.memory_space<vmem>>, vector<1x1x256xf32>
    %354 = vector.shape_cast %353 : vector<1x1x256xf32> to vector<1x256xf32>
    %355 = arith.index_cast %c5_i32_175 : i32 to index
    %c0_188 = arith.constant 0 : index
    %c0_189 = arith.constant 0 : index
    %356 = vector.load %arg9[%355, %c0_188, %c0_189] : memref<8x1x256xf32, #tpu.memory_space<vmem>>, vector<1x1x256xf32>
    %357 = vector.shape_cast %356 : vector<1x1x256xf32> to vector<1x256xf32>
    %358 = vector.extract_strided_slice %348 {offsets = [0, 0], sizes = [4, 256], strides = [1, 1]} : vector<4x1024xf32> to vector<4x256xf32>
    %359 = vector.extract_strided_slice %348 {offsets = [0, 768], sizes = [4, 256], strides = [1, 1]} : vector<4x1024xf32> to vector<4x256xf32>
    %360 = arith.mulf %358, %359 : vector<4x256xf32>
    %c0_190 = arith.constant 0 : index
    %c0_191 = arith.constant 0 : index
    %361 = vector.load %arg15[%c0_190, %c0_191] : memref<4x256xf32, #tpu.memory_space<vmem>>, vector<4x256xf32>
    %362 = arith.mulf %360, %361 : vector<4x256xf32>
    %363 = vector.broadcast %354 : vector<1x256xf32> to vector<4x256xf32>
    %364 = arith.mulf %351, %363 : vector<4x256xf32>
    %365 = arith.addf %362, %364 : vector<4x256xf32>
    %c0_192 = arith.constant 0 : index
    %c0_193 = arith.constant 0 : index
    %366 = vector.load %arg16[%c0_192, %c0_193] : memref<4x256xf32, #tpu.memory_space<vmem>>, vector<4x256xf32>
    %367 = arith.mulf %360, %366 : vector<4x256xf32>
    %368 = vector.broadcast %357 : vector<1x256xf32> to vector<4x256xf32>
    %369 = arith.mulf %351, %368 : vector<4x256xf32>
    %370 = arith.addf %367, %369 : vector<4x256xf32>
    %371 = arith.mulf %365, %365 : vector<4x256xf32>
    %372 = arith.mulf %370, %370 : vector<4x256xf32>
    %373 = arith.addf %371, %372 : vector<4x256xf32>
    %cst_194 = arith.constant dense<0.000000e+00> : vector<4x32xf32>
    %374 = tpu.matmul %373, %84, %cst_194 {dimension_numbers = #tpu.dot_dimension_numbers<[1], [0], [0], [1], [0, 0, 1, 1], [], []>} : vector<4x256xf32>, vector<256x32xf32>, vector<4x32xf32> -> vector<4x32xf32>
    %375 = vector.broadcast %85 : vector<1x32xf32> to vector<4x32xf32>
    %376 = arith.addf %374, %375 : vector<4x32xf32>
    %377 = math.tanh %376 : vector<4x32xf32>
    %378 = vector.extract_strided_slice %347 {offsets = [0, 96], sizes = [4, 32], strides = [1, 1]} : vector<4x136xf32> to vector<4x32xf32>
    %379 = arith.mulf %378, %377 : vector<4x32xf32>
    %c0_195 = arith.constant 0 : index
    %c0_196 = arith.constant 0 : index
    %380 = vector.load %arg14[%c0_195, %c0_196] : memref<4x32xf32, #tpu.memory_space<vmem>>, vector<4x32xf32>
    tpu.vector_store %arg14[%c0_195, %c0_196], %379 {strides = array<i32>} : memref<4x32xf32, #tpu.memory_space<vmem>>, vector<4x32xf32>,
    %c0_197 = arith.constant 0 : index
    %c0_198 = arith.constant 0 : index
    %381 = vector.load %arg15[%c0_197, %c0_198] : memref<4x256xf32, #tpu.memory_space<vmem>>, vector<4x256xf32>
    tpu.vector_store %arg15[%c0_197, %c0_198], %365 {strides = array<i32>} : memref<4x256xf32, #tpu.memory_space<vmem>>, vector<4x256xf32>,
    %c0_199 = arith.constant 0 : index
    %c0_200 = arith.constant 0 : index
    %382 = vector.load %arg16[%c0_199, %c0_200] : memref<4x256xf32, #tpu.memory_space<vmem>>, vector<4x256xf32>
    tpu.vector_store %arg16[%c0_199, %c0_200], %370 {strides = array<i32>} : memref<4x256xf32, #tpu.memory_space<vmem>>, vector<4x256xf32>,
    %c6_i32_201 = arith.constant 6 : i32
    %383 = arith.index_cast %c6_i32_201 : i32 to index
    %c0_202 = arith.constant 0 : index
    %c0_203 = arith.constant 0 : index
    %384 = vector.load %arg13[%383, %c0_202, %c0_203] : memref<8x4x136xf32, #tpu.memory_space<vmem>>, vector<1x4x136xf32>
    %385 = vector.shape_cast %384 : vector<1x4x136xf32> to vector<4x136xf32>
    %c0_204 = arith.constant 0 : index
    %c0_205 = arith.constant 0 : index
    %386 = vector.load %arg14[%c0_204, %c0_205] : memref<4x32xf32, #tpu.memory_space<vmem>>, vector<4x32xf32>
    %cst_206 = arith.constant dense<0.000000e+00> : vector<4x136xf32>
    %387 = tpu.matmul %386, %82, %cst_206 {dimension_numbers = #tpu.dot_dimension_numbers<[1], [0], [0], [1], [0, 0, 1, 1], [], []>} : vector<4x32xf32>, vector<32x136xf32>, vector<4x136xf32> -> vector<4x136xf32>
    %388 = arith.addf %385, %387 : vector<4x136xf32>
    %389 = math.tanh %388 : vector<4x136xf32>
    %cst_207 = arith.constant 0.166666672 : f32
    %390 = vector.broadcast %cst_207 : f32 to vector<4x136xf32>
    %391 = arith.mulf %388, %390 : vector<4x136xf32>
    %cst_208 = arith.constant 5.000000e-01 : f32
    %392 = vector.broadcast %cst_208 : f32 to vector<4x136xf32>
    %393 = arith.addf %391, %392 : vector<4x136xf32>
    %cst_209 = arith.constant 0.000000e+00 : f32
    %cst_210 = arith.constant 1.000000e+00 : f32
    %394 = vector.broadcast %cst_209 : f32 to vector<4x136xf32>
    %395 = arith.maximumf %394, %393 : vector<4x136xf32>
    %396 = vector.broadcast %cst_210 : f32 to vector<4x136xf32>
    %397 = arith.minimumf %396, %395 : vector<4x136xf32>
    %398 = arith.select %91, %389, %397 : vector<4x136xi1>, vector<4x136xf32>
    %cst_211 = arith.constant dense<0.000000e+00> : vector<4x1024xf32>
    %399 = tpu.matmul %398, %83, %cst_211 {dimension_numbers = #tpu.dot_dimension_numbers<[1], [0], [0], [1], [0, 0, 1, 1], [], []>} : vector<4x136xf32>, vector<136x1024xf32>, vector<4x1024xf32> -> vector<4x1024xf32>
    %400 = vector.extract_strided_slice %399 {offsets = [0, 256], sizes = [4, 256], strides = [1, 1]} : vector<4x1024xf32> to vector<4x256xf32>
    %401 = vector.extract_strided_slice %399 {offsets = [0, 512], sizes = [4, 256], strides = [1, 1]} : vector<4x1024xf32> to vector<4x256xf32>
    %402 = arith.mulf %400, %401 : vector<4x256xf32>
    %403 = arith.index_cast %c6_i32_201 : i32 to index
    %c0_212 = arith.constant 0 : index
    %c0_213 = arith.constant 0 : index
    %404 = vector.load %arg8[%403, %c0_212, %c0_213] : memref<8x1x256xf32, #tpu.memory_space<vmem>>, vector<1x1x256xf32>
    %405 = vector.shape_cast %404 : vector<1x1x256xf32> to vector<1x256xf32>
    %406 = arith.index_cast %c6_i32_201 : i32 to index
    %c0_214 = arith.constant 0 : index
    %c0_215 = arith.constant 0 : index
    %407 = vector.load %arg9[%406, %c0_214, %c0_215] : memref<8x1x256xf32, #tpu.memory_space<vmem>>, vector<1x1x256xf32>
    %408 = vector.shape_cast %407 : vector<1x1x256xf32> to vector<1x256xf32>
    %409 = vector.extract_strided_slice %399 {offsets = [0, 0], sizes = [4, 256], strides = [1, 1]} : vector<4x1024xf32> to vector<4x256xf32>
    %410 = vector.extract_strided_slice %399 {offsets = [0, 768], sizes = [4, 256], strides = [1, 1]} : vector<4x1024xf32> to vector<4x256xf32>
    %411 = arith.mulf %409, %410 : vector<4x256xf32>
    %c0_216 = arith.constant 0 : index
    %c0_217 = arith.constant 0 : index
    %412 = vector.load %arg15[%c0_216, %c0_217] : memref<4x256xf32, #tpu.memory_space<vmem>>, vector<4x256xf32>
    %413 = arith.mulf %411, %412 : vector<4x256xf32>
    %414 = vector.broadcast %405 : vector<1x256xf32> to vector<4x256xf32>
    %415 = arith.mulf %402, %414 : vector<4x256xf32>
    %416 = arith.addf %413, %415 : vector<4x256xf32>
    %c0_218 = arith.constant 0 : index
    %c0_219 = arith.constant 0 : index
    %417 = vector.load %arg16[%c0_218, %c0_219] : memref<4x256xf32, #tpu.memory_space<vmem>>, vector<4x256xf32>
    %418 = arith.mulf %411, %417 : vector<4x256xf32>
    %419 = vector.broadcast %408 : vector<1x256xf32> to vector<4x256xf32>
    %420 = arith.mulf %402, %419 : vector<4x256xf32>
    %421 = arith.addf %418, %420 : vector<4x256xf32>
    %422 = arith.mulf %416, %416 : vector<4x256xf32>
    %423 = arith.mulf %421, %421 : vector<4x256xf32>
    %424 = arith.addf %422, %423 : vector<4x256xf32>
    %cst_220 = arith.constant dense<0.000000e+00> : vector<4x32xf32>
    %425 = tpu.matmul %424, %84, %cst_220 {dimension_numbers = #tpu.dot_dimension_numbers<[1], [0], [0], [1], [0, 0, 1, 1], [], []>} : vector<4x256xf32>, vector<256x32xf32>, vector<4x32xf32> -> vector<4x32xf32>
    %426 = vector.broadcast %85 : vector<1x32xf32> to vector<4x32xf32>
    %427 = arith.addf %425, %426 : vector<4x32xf32>
    %428 = math.tanh %427 : vector<4x32xf32>
    %429 = vector.extract_strided_slice %398 {offsets = [0, 96], sizes = [4, 32], strides = [1, 1]} : vector<4x136xf32> to vector<4x32xf32>
    %430 = arith.mulf %429, %428 : vector<4x32xf32>
    %c0_221 = arith.constant 0 : index
    %c0_222 = arith.constant 0 : index
    %431 = vector.load %arg14[%c0_221, %c0_222] : memref<4x32xf32, #tpu.memory_space<vmem>>, vector<4x32xf32>
    tpu.vector_store %arg14[%c0_221, %c0_222], %430 {strides = array<i32>} : memref<4x32xf32, #tpu.memory_space<vmem>>, vector<4x32xf32>,
    %c0_223 = arith.constant 0 : index
    %c0_224 = arith.constant 0 : index
    %432 = vector.load %arg15[%c0_223, %c0_224] : memref<4x256xf32, #tpu.memory_space<vmem>>, vector<4x256xf32>
    tpu.vector_store %arg15[%c0_223, %c0_224], %416 {strides = array<i32>} : memref<4x256xf32, #tpu.memory_space<vmem>>, vector<4x256xf32>,
    %c0_225 = arith.constant 0 : index
    %c0_226 = arith.constant 0 : index
    %433 = vector.load %arg16[%c0_225, %c0_226] : memref<4x256xf32, #tpu.memory_space<vmem>>, vector<4x256xf32>
    tpu.vector_store %arg16[%c0_225, %c0_226], %421 {strides = array<i32>} : memref<4x256xf32, #tpu.memory_space<vmem>>, vector<4x256xf32>,
    %c7_i32_227 = arith.constant 7 : i32
    %434 = arith.index_cast %c7_i32_227 : i32 to index
    %c0_228 = arith.constant 0 : index
    %c0_229 = arith.constant 0 : index
    %435 = vector.load %arg13[%434, %c0_228, %c0_229] : memref<8x4x136xf32, #tpu.memory_space<vmem>>, vector<1x4x136xf32>
    %436 = vector.shape_cast %435 : vector<1x4x136xf32> to vector<4x136xf32>
    %c0_230 = arith.constant 0 : index
    %c0_231 = arith.constant 0 : index
    %437 = vector.load %arg14[%c0_230, %c0_231] : memref<4x32xf32, #tpu.memory_space<vmem>>, vector<4x32xf32>
    %cst_232 = arith.constant dense<0.000000e+00> : vector<4x136xf32>
    %438 = tpu.matmul %437, %82, %cst_232 {dimension_numbers = #tpu.dot_dimension_numbers<[1], [0], [0], [1], [0, 0, 1, 1], [], []>} : vector<4x32xf32>, vector<32x136xf32>, vector<4x136xf32> -> vector<4x136xf32>
    %439 = arith.addf %436, %438 : vector<4x136xf32>
    %440 = math.tanh %439 : vector<4x136xf32>
    %cst_233 = arith.constant 0.166666672 : f32
    %441 = vector.broadcast %cst_233 : f32 to vector<4x136xf32>
    %442 = arith.mulf %439, %441 : vector<4x136xf32>
    %cst_234 = arith.constant 5.000000e-01 : f32
    %443 = vector.broadcast %cst_234 : f32 to vector<4x136xf32>
    %444 = arith.addf %442, %443 : vector<4x136xf32>
    %cst_235 = arith.constant 0.000000e+00 : f32
    %cst_236 = arith.constant 1.000000e+00 : f32
    %445 = vector.broadcast %cst_235 : f32 to vector<4x136xf32>
    %446 = arith.maximumf %445, %444 : vector<4x136xf32>
    %447 = vector.broadcast %cst_236 : f32 to vector<4x136xf32>
    %448 = arith.minimumf %447, %446 : vector<4x136xf32>
    %449 = arith.select %91, %440, %448 : vector<4x136xi1>, vector<4x136xf32>
    %cst_237 = arith.constant dense<0.000000e+00> : vector<4x1024xf32>
    %450 = tpu.matmul %449, %83, %cst_237 {dimension_numbers = #tpu.dot_dimension_numbers<[1], [0], [0], [1], [0, 0, 1, 1], [], []>} : vector<4x136xf32>, vector<136x1024xf32>, vector<4x1024xf32> -> vector<4x1024xf32>
    %451 = vector.extract_strided_slice %450 {offsets = [0, 256], sizes = [4, 256], strides = [1, 1]} : vector<4x1024xf32> to vector<4x256xf32>
    %452 = vector.extract_strided_slice %450 {offsets = [0, 512], sizes = [4, 256], strides = [1, 1]} : vector<4x1024xf32> to vector<4x256xf32>
    %453 = arith.mulf %451, %452 : vector<4x256xf32>
    %454 = arith.index_cast %c7_i32_227 : i32 to index
    %c0_238 = arith.constant 0 : index
    %c0_239 = arith.constant 0 : index
    %455 = vector.load %arg8[%454, %c0_238, %c0_239] : memref<8x1x256xf32, #tpu.memory_space<vmem>>, vector<1x1x256xf32>
    %456 = vector.shape_cast %455 : vector<1x1x256xf32> to vector<1x256xf32>
    %457 = arith.index_cast %c7_i32_227 : i32 to index
    %c0_240 = arith.constant 0 : index
    %c0_241 = arith.constant 0 : index
    %458 = vector.load %arg9[%457, %c0_240, %c0_241] : memref<8x1x256xf32, #tpu.memory_space<vmem>>, vector<1x1x256xf32>
    %459 = vector.shape_cast %458 : vector<1x1x256xf32> to vector<1x256xf32>
    %460 = vector.extract_strided_slice %450 {offsets = [0, 0], sizes = [4, 256], strides = [1, 1]} : vector<4x1024xf32> to vector<4x256xf32>
    %461 = vector.extract_strided_slice %450 {offsets = [0, 768], sizes = [4, 256], strides = [1, 1]} : vector<4x1024xf32> to vector<4x256xf32>
    %462 = arith.mulf %460, %461 : vector<4x256xf32>
    %c0_242 = arith.constant 0 : index
    %c0_243 = arith.constant 0 : index
    %463 = vector.load %arg15[%c0_242, %c0_243] : memref<4x256xf32, #tpu.memory_space<vmem>>, vector<4x256xf32>
    %464 = arith.mulf %462, %463 : vector<4x256xf32>
    %465 = vector.broadcast %456 : vector<1x256xf32> to vector<4x256xf32>
    %466 = arith.mulf %453, %465 : vector<4x256xf32>
    %467 = arith.addf %464, %466 : vector<4x256xf32>
    %c0_244 = arith.constant 0 : index
    %c0_245 = arith.constant 0 : index
    %468 = vector.load %arg16[%c0_244, %c0_245] : memref<4x256xf32, #tpu.memory_space<vmem>>, vector<4x256xf32>
    %469 = arith.mulf %462, %468 : vector<4x256xf32>
    %470 = vector.broadcast %459 : vector<1x256xf32> to vector<4x256xf32>
    %471 = arith.mulf %453, %470 : vector<4x256xf32>
    %472 = arith.addf %469, %471 : vector<4x256xf32>
    %473 = arith.mulf %467, %467 : vector<4x256xf32>
    %474 = arith.mulf %472, %472 : vector<4x256xf32>
    %475 = arith.addf %473, %474 : vector<4x256xf32>
    %cst_246 = arith.constant dense<0.000000e+00> : vector<4x32xf32>
    %476 = tpu.matmul %475, %84, %cst_246 {dimension_numbers = #tpu.dot_dimension_numbers<[1], [0], [0], [1], [0, 0, 1, 1], [], []>} : vector<4x256xf32>, vector<256x32xf32>, vector<4x32xf32> -> vector<4x32xf32>
    %477 = vector.broadcast %85 : vector<1x32xf32> to vector<4x32xf32>
    %478 = arith.addf %476, %477 : vector<4x32xf32>
    %479 = math.tanh %478 : vector<4x32xf32>
    %480 = vector.extract_strided_slice %449 {offsets = [0, 96], sizes = [4, 32], strides = [1, 1]} : vector<4x136xf32> to vector<4x32xf32>
    %481 = arith.mulf %480, %479 : vector<4x32xf32>
    %c0_247 = arith.constant 0 : index
    %c0_248 = arith.constant 0 : index
    %482 = vector.load %arg14[%c0_247, %c0_248] : memref<4x32xf32, #tpu.memory_space<vmem>>, vector<4x32xf32>
    tpu.vector_store %arg14[%c0_247, %c0_248], %481 {strides = array<i32>} : memref<4x32xf32, #tpu.memory_space<vmem>>, vector<4x32xf32>,
    %c0_249 = arith.constant 0 : index
    %c0_250 = arith.constant 0 : index
    %483 = vector.load %arg15[%c0_249, %c0_250] : memref<4x256xf32, #tpu.memory_space<vmem>>, vector<4x256xf32>
    tpu.vector_store %arg15[%c0_249, %c0_250], %467 {strides = array<i32>} : memref<4x256xf32, #tpu.memory_space<vmem>>, vector<4x256xf32>,
    %c0_251 = arith.constant 0 : index
    %c0_252 = arith.constant 0 : index
    %484 = vector.load %arg16[%c0_251, %c0_252] : memref<4x256xf32, #tpu.memory_space<vmem>>, vector<4x256xf32>
    tpu.vector_store %arg16[%c0_251, %c0_252], %472 {strides = array<i32>} : memref<4x256xf32, #tpu.memory_space<vmem>>, vector<4x256xf32>,
    %c7_i32_253 = arith.constant 7 : i32
    %c0_254 = arith.constant 0 : index
    %c0_255 = arith.constant 0 : index
    %485 = vector.load %arg14[%c0_254, %c0_255] : memref<4x32xf32, #tpu.memory_space<vmem>>, vector<4x32xf32>
    %c0_256 = arith.constant 0 : index
    %c0_257 = arith.constant 0 : index
    %486 = vector.load %arg10[%c0_256, %c0_257] : memref<32x1xf32, #tpu.memory_space<vmem>>, vector<32x1xf32>
    %cst_258 = arith.constant dense<0.000000e+00> : vector<4x1xf32>
    %487 = tpu.matmul %485, %486, %cst_258 {dimension_numbers = #tpu.dot_dimension_numbers<[1], [0], [0], [1], [0, 0, 1, 1], [], []>} : vector<4x32xf32>, vector<32x1xf32>, vector<4x1xf32> -> vector<4x1xf32>
    %c0_259 = arith.constant 0 : index
    %c0_260 = arith.constant 0 : index
    %488 = vector.load %arg11[%c0_259, %c0_260] : memref<1x1xf32, #tpu.memory_space<vmem>>, vector<1x1xf32>
    %489 = vector.broadcast %488 : vector<1x1xf32> to vector<4x1xf32>
    %490 = arith.addf %487, %489 : vector<4x1xf32>
    %c0_261 = arith.constant 0 : index
    %c0_262 = arith.constant 0 : index
    %491 = vector.load %arg12[%c0_261, %c0_262] : memref<4x1xf32, #tpu.memory_space<vmem>>, vector<4x1xf32>
    tpu.vector_store %arg12[%c0_261, %c0_262], %490 {strides = array<i32>} : memref<4x1xf32, #tpu.memory_space<vmem>>, vector<4x1xf32>,
    return
  }
  func.func @transform_0(%arg0: i32) -> (i32, i32, i32) {
    %c0_i32 = arith.constant 0 : i32
    %c0_i32_0 = arith.constant 0 : i32
    %c0_i32_1 = arith.constant 0 : i32
    %c0_i32_2 = arith.constant 0 : i32
    return %c0_i32, %c0_i32_0, %c0_i32_1 : i32, i32, i32
  }
  func.func @transform_1(%arg0: i32) -> (i32, i32) {
    %c0_i32 = arith.constant 0 : i32
    %c0_i32_0 = arith.constant 0 : i32
    %c0_i32_1 = arith.constant 0 : i32
    return %c0_i32, %c0_i32_0 : i32, i32
  }
  func.func @transform_2(%arg0: i32) -> (i32, i32) {
    %c0_i32 = arith.constant 0 : i32
    %c0_i32_0 = arith.constant 0 : i32
    %c0_i32_1 = arith.constant 0 : i32
    return %c0_i32, %c0_i32_0 : i32, i32
  }
  func.func @transform_3(%arg0: i32) -> (i32, i32) {
    %c0_i32 = arith.constant 0 : i32
    %c0_i32_0 = arith.constant 0 : i32
    %c0_i32_1 = arith.constant 0 : i32
    return %c0_i32, %c0_i32_0 : i32, i32
  }
  func.func @transform_4(%arg0: i32) -> (i32, i32) {
    %c0_i32 = arith.constant 0 : i32
    %c0_i32_0 = arith.constant 0 : i32
    %c0_i32_1 = arith.constant 0 : i32
    return %c0_i32, %c0_i32_0 : i32, i32
  }
  func.func @transform_5(%arg0: i32) -> (i32, i32) {
    %c0_i32 = arith.constant 0 : i32
    %c0_i32_0 = arith.constant 0 : i32
    %c0_i32_1 = arith.constant 0 : i32
    return %c0_i32, %c0_i32_0 : i32, i32
  }
  func.func @transform_6(%arg0: i32) -> (i32, i32) {
    %c0_i32 = arith.constant 0 : i32
    %c0_i32_0 = arith.constant 0 : i32
    %c0_i32_1 = arith.constant 0 : i32
    return %c0_i32, %c0_i32_0 : i32, i32
  }
  func.func @transform_7(%arg0: i32) -> (i32, i32, i32) {
    %c0_i32 = arith.constant 0 : i32
    %c0_i32_0 = arith.constant 0 : i32
    %c0_i32_1 = arith.constant 0 : i32
    %c0_i32_2 = arith.constant 0 : i32
    return %c0_i32, %c0_i32_0, %c0_i32_1 : i32, i32, i32
  }
  func.func @transform_8(%arg0: i32) -> (i32, i32, i32) {
    %c0_i32 = arith.constant 0 : i32
    %c0_i32_0 = arith.constant 0 : i32
    %c0_i32_1 = arith.constant 0 : i32
    %c0_i32_2 = arith.constant 0 : i32
    return %c0_i32, %c0_i32_0, %c0_i32_1 : i32, i32, i32
  }
  func.func @transform_9(%arg0: i32) -> (i32, i32) {
    %c0_i32 = arith.constant 0 : i32
    %c0_i32_0 = arith.constant 0 : i32
    %c0_i32_1 = arith.constant 0 : i32
    return %c0_i32, %c0_i32_0 : i32, i32
  }
  func.func @transform_10(%arg0: i32) -> (i32, i32) {
    %c0_i32 = arith.constant 0 : i32
    %c0_i32_0 = arith.constant 0 : i32
    %c0_i32_1 = arith.constant 0 : i32
    return %c0_i32, %c0_i32_0 : i32, i32
  }
  func.func @transform_11(%arg0: i32) -> (i32, i32) {
    %c0_i32 = arith.constant 0 : i32
    %c0_i32_0 = arith.constant 0 : i32
    %c0_i32_1 = arith.constant 0 : i32
    return %c0_i32, %c0_i32_0 : i32, i32
  }
}

</mosaic_0001>

<llo_original>
// kernel: sfm_forward.1
$region0: #{sfm_forward.1}
  #allocation0 [shape = 'u32[]', space=smem, size = 0x4, offset = 0x4, fixed_abs, tag = 'smem constant byte address 0x4 - core index']
  #allocation1 [shape = 'u32[72,128]{1,0:T(1,128)}', space=vmem, size = 0x9000, scoped, tag = 'internal scratch']
  #allocation2 [shape = 'f32[8,4,136]{2,1,0:T(4,128)}', space=vmem, size = 0x8000, scoped, tag = 'scratch operand']
  #allocation3 [shape = 'f32[4,32]{1,0:T(4,128)}', space=vmem, size = 0x800, scoped, tag = 'scratch operand']
  #allocation4 [shape = 'f32[4,256]{1,0:T(4,128)}', space=vmem, size = 0x1000, scoped, tag = 'scratch operand']
  #allocation5 [shape = 'f32[4,256]{1,0:T(4,128)}', space=vmem, size = 0x1000, scoped, tag = 'scratch operand']
  #allocation6 [shape = 'f32[1,1]{1,0:T(1,128)S(1)}', space=vmem, size = 0x200, scoped, tag = 'scoped memory for sfm_forward.1']
  %s0 = inlined_call_operand.vmem [shape: f32[8,4,16], index: 0, kind: input, shape index: {}]
  %s1 = inlined_call_operand.vmem [shape: f32[16,136], index: 1, kind: input, shape index: {}]
  %s2 = inlined_call_operand.vmem [shape: f32[1,136], index: 2, kind: input, shape index: {}]
  %s3 = inlined_call_operand.vmem [shape: f32[32,136], index: 3, kind: input, shape index: {}]
  %s4 = inlined_call_operand.hbm [shape: f32[136,1024], index: 4, kind: input, shape index: {}]
  %s5 = inlined_call_operand.vmem [shape: f32[256,32], index: 5, kind: input, shape index: {}]
  %s6 = inlined_call_operand.vmem [shape: f32[1,32], index: 6, kind: input, shape index: {}]
  %s7 = inlined_call_operand.vmem [shape: f32[8,1,256], index: 7, kind: input, shape index: {}]
  %s8 = inlined_call_operand.vmem [shape: f32[8,1,256], index: 8, kind: input, shape index: {}]
  %s9 = inlined_call_operand.vmem [shape: f32[32,1], index: 9, kind: input, shape index: {}]
  %s10 = inlined_call_operand.<no memory space> [shape: f32[1,1], index: 10, kind: input, shape index: {}]
  %s11 = inlined_call_operand.vmem [shape: f32[4,1], index: 11, kind: output, shape index: {}]
  %s12 = sld [smem:[#allocation0]]
  $region58: #{sfm_forward.1} parent=0
    _
  %s14 = ssub.s32 1, %s12
  %s15 = scalar_select 0, %s14, %s12
  %v16 = vstv %s10
  %17 = vst [vmem:[#allocation6] sm:$0x1] %v16
  $region1: #{sfm_forward.1} parent=0
    #allocation7 [shape = 'u8[557056]{0}', space=vmem, size = 0x88000, scoped, tag = 'input window, operand 4, single buffered']
    #allocation8 [shape = 's32[1]{0}', space=sflag, size = 0x4, scoped, tag = 'scoped memory for sfm_forward.1']
    %18 = vsyncpa [#allocation8], 0
    // Predicated region
    $region2: #{sfm_forward.1} parent=1 // pred_check
      _
    $region3: #{sfm_forward.1} parent=1 // pred_check_branch
      %20 = sbr.rel (0) target = $region5
    $region4: #{sfm_forward.1} parent=1 // pred_region
      _
    $region5: #{sfm_forward.1} parent=1 // pred_fallthru
      _
    // Predicated region
    $region6: #{sfm_forward.1} parent=1 // pred_check
      _
    $region7: #{sfm_forward.1} parent=1 // pred_check_branch
      %22 = sbr.rel (0) target = $region9
    $region8: #{sfm_forward.1} parent=1 // pred_region
      _
    $region9: #{sfm_forward.1} parent=1 // pred_fallthru
      _
    // Predicated region
    $region10: #{sfm_forward.1} parent=1 // pred_check
      _
    $region11: #{sfm_forward.1} parent=1 // pred_check_branch
      %24 = sbr.rel (0) target = $region13
    $region12: #{sfm_forward.1} parent=1 // pred_region
      _
    $region13: #{sfm_forward.1} parent=1 // pred_fallthru
      _
    // Predicated region
    $region14: #{sfm_forward.1} parent=1 // pred_check
      _
    $region15: #{sfm_forward.1} parent=1 // pred_check_branch
      %26 = sbr.rel (0) target = $region17
    $region16: #{sfm_forward.1} parent=1 // pred_region
      _
    $region17: #{sfm_forward.1} parent=1 // pred_fallthru
      _
    // Predicated region
    $region18: #{sfm_forward.1} parent=1 // pred_check
      _
    $region19: #{sfm_forward.1} parent=1 // pred_check_branch
      %28 = sbr.rel (0) target = $region21
    $region20: #{sfm_forward.1} parent=1 // pred_region
      %30 = vsyncadd [#allocation8], 0
      %s31 = sshll.u32 %s4, 4
      %s32 = int_to_ptr.hbm [resolvable:$true] %s31
      %s33 = sshll.u32 [#allocation7], 4
      %s34 = int_to_ptr.vmem [resolvable:$true] %s33
      %39 = dma.hbm_to_vmem [thread:$0]  %s32, 17408, %s34, [#allocation8], 1024, 1024, 64
    $region21: #{sfm_forward.1} parent=1 // pred_fallthru
      _
    // Predicated region
    $region22: #{sfm_forward.1} parent=1 // pred_check
      _
    $region23: #{sfm_forward.1} parent=1 // pred_check_branch
      %41 = sbr.rel (0) target = $region25
    $region24: #{sfm_forward.1} parent=1 // pred_region
      _
    $region25: #{sfm_forward.1} parent=1 // pred_fallthru
      _
    // Predicated region
    $region26: #{sfm_forward.1} parent=1 // pred_check
      _
    $region27: #{sfm_forward.1} parent=1 // pred_check_branch
      %43 = sbr.rel (0) target = $region29
    $region28: #{sfm_forward.1} parent=1 // pred_region
      _
    $region29: #{sfm_forward.1} parent=1 // pred_fallthru
      _
    // Predicated region
    $region30: #{sfm_forward.1} parent=1 // pred_check
      _
    $region31: #{sfm_forward.1} parent=1 // pred_check_branch
      %45 = sbr.rel (0) target = $region33
    $region32: #{sfm_forward.1} parent=1 // pred_region
      _
    $region33: #{sfm_forward.1} parent=1 // pred_fallthru
      _
    // Predicated region
    $region34: #{sfm_forward.1} parent=1 // pred_check
      _
    $region35: #{sfm_forward.1} parent=1 // pred_check_branch
      %47 = sbr.rel (0) target = $region37
    $region36: #{sfm_forward.1} parent=1 // pred_region
      _
    $region37: #{sfm_forward.1} parent=1 // pred_fallthru
      _
    // Predicated region
    $region38: #{sfm_forward.1} parent=1 // pred_check
      _
    $region39: #{sfm_forward.1} parent=1 // pred_check_branch
      %49 = sbr.rel (0) target = $region41
    $region40: #{sfm_forward.1} parent=1 // pred_region
      _
    $region41: #{sfm_forward.1} parent=1 // pred_fallthru
      _
    // Predicated region
    $region42: #{sfm_forward.1} parent=1 // pred_check
      _
    $region43: #{sfm_forward.1} parent=1 // pred_check_branch
      %51 = sbr.rel (0) target = $region45
    $region44: #{sfm_forward.1} parent=1 // pred_region
      _
    $region45: #{sfm_forward.1} parent=1 // pred_fallthru
      _
    // Predicated region
    $region46: #{sfm_forward.1} parent=1 // pred_check
      _
    $region47: #{sfm_forward.1} parent=1 // pred_check_branch
      %53 = sbr.rel (0) target = $region49
    $region48: #{sfm_forward.1} parent=1 // pred_region
      %55 = dma.done [#allocation8], 17408
    $region49: #{sfm_forward.1} parent=1 // pred_fallthru
      _
    %v56 = vld [vmem:[%s1] sm:$0xff]
    %v57 = vld [vmem:[%s1 + $0x8] sm:$0xff]
    %v58 = vld [vmem:[%s1 + $0x10] sm:$0xff]
    %v59 = vld [vmem:[%s1 + $0x18] sm:$0xff]
    %v60 = vld [vmem:[%s2] sm:$0x3]
    %v61 = vld [vmem:[%s0] sm:$0xf]
    %v63 = vperm.slane %v60, 0
    %v64 = vperm.slane %v60, 1
    %vm67 = vcmask 130048
    %v69 = vsel %vm67, %v61, 0
    %71 = vmatpush.msra.mxu0 0.0
    %72 = vmatpush.msra.mxu0 0.0
    %73 = vmatpush.msra.mxu0 0.0
    %74 = vmatpush.msra.mxu0 0.0
    %75 = vmatpush.msra.mxu0 0.0
    %76 = vmatpush.msra.mxu0 0.0
    %77 = vmatpush.msra.mxu0 0.0
    %78 = vmatpush.msra.mxu0 0.0
    %79 = vmatpush.msra.mxu0 0.0
    %80 = vmatpush.msra.mxu0 0.0
    %81 = vmatpush.msra.mxu0 0.0
    %82 = vmatpush.msra.mxu0 0.0
    %83 = vmatpush.msra.mxu0 0.0
    %84 = vmatpush.msra.mxu0 0.0
    %85 = vmatpush.msra.mxu0 %v58
    %86 = vmatpush.msra.mxu0 %v56
    %87 = vmatmul.f32.gmra.mxu0 %v69
    %v88 = vpop.f32.mrf.mxu0
    %v89 = vadd.f32 %v63, %v88
    %90 = vdwg.mxu0
    %91 = vmatpush.msra.mxu0 0.0
    %92 = vmatpush.msra.mxu0 0.0
    %93 = vmatpush.msra.mxu0 0.0
    %94 = vmatpush.msra.mxu0 0.0
    %95 = vmatpush.msra.mxu0 0.0
    %96 = vmatpush.msra.mxu0 0.0
    %97 = vmatpush.msra.mxu0 0.0
    %98 = vmatpush.msra.mxu0 0.0
    %99 = vmatpush.msra.mxu0 0.0
    %100 = vmatpush.msra.mxu0 0.0
    %101 = vmatpush.msra.mxu0 0.0
    %102 = vmatpush.msra.mxu0 0.0
    %103 = vmatpush.msra.mxu0 0.0
    %104 = vmatpush.msra.mxu0 0.0
    %105 = vmatpush.msra.mxu0 %v59
    %106 = vmatpush.msra.mxu0 %v57
    %107 = vmatmul.f32.gmra.mxu0 %v69
    %v108 = vpop.f32.mrf.mxu0
    %v109 = vadd.f32 %v64, %v108
    %110 = vdwg.mxu0
    %v113 = vrot.slane %v109, 4
    %vm114 = vcmask 1043456
    %v115 = vsel %vm114, %v89, %v113
    %vm117 = vcmask 64516
    %vm118 = vmor %vm117, %vm114
    %119 = vst.msk [vmem:[#allocation2] sm:$0xff] %vm118, %v115
    %s120 = scalar_lea.vmem %s0, 4
    %v121 = vld [vmem:[%s120] sm:$0xf]
    %v123 = vsel %vm67, %v121, 0
    %125 = vmatpush.msra.mxu0 0.0
    %126 = vmatpush.msra.mxu0 0.0
    %127 = vmatpush.msra.mxu0 0.0
    %128 = vmatpush.msra.mxu0 0.0
    %129 = vmatpush.msra.mxu0 0.0
    %130 = vmatpush.msra.mxu0 0.0
    %131 = vmatpush.msra.mxu0 0.0
    %132 = vmatpush.msra.mxu0 0.0
    %133 = vmatpush.msra.mxu0 0.0
    %134 = vmatpush.msra.mxu0 0.0
    %135 = vmatpush.msra.mxu0 0.0
    %136 = vmatpush.msra.mxu0 0.0
    %137 = vmatpush.msra.mxu0 0.0
    %138 = vmatpush.msra.mxu0 0.0
    %139 = vmatpush.msra.mxu0 %v58
    %140 = vmatpush.msra.mxu0 %v56
    %141 = vmatmul.f32.gmra.mxu0 %v123
    %v142 = vpop.f32.mrf.mxu0
    %v143 = vadd.f32 %v63, %v142
    %144 = vdwg.mxu0
    %145 = vmatpush.msra.mxu0 0.0
    %146 = vmatpush.msra.mxu0 0.0
    %147 = vmatpush.msra.mxu0 0.0
    %148 = vmatpush.msra.mxu0 0.0
    %149 = vmatpush.msra.mxu0 0.0
    %150 = vmatpush.msra.mxu0 0.0
    %151 = vmatpush.msra.mxu0 0.0
    %152 = vmatpush.msra.mxu0 0.0
    %153 = vmatpush.msra.mxu0 0.0
    %154 = vmatpush.msra.mxu0 0.0
    %155 = vmatpush.msra.mxu0 0.0
    %156 = vmatpush.msra.mxu0 0.0
    %157 = vmatpush.msra.mxu0 0.0
    %158 = vmatpush.msra.mxu0 0.0
    %159 = vmatpush.msra.mxu0 %v59
    %160 = vmatpush.msra.mxu0 %v57
    %161 = vmatmul.f32.gmra.mxu0 %v123
    %v162 = vpop.f32.mrf.mxu0
    %v163 = vadd.f32 %v64, %v162
    %164 = vdwg.mxu0
    %v167 = vrot.slane %v163, 4
    %v168 = vsel %vm114, %v143, %v167
    %s170 = scalar_lea.vmem [#allocation2], 8
    %171 = vst.msk [vmem:[%s170] sm:$0xff] %vm118, %v168
    %s172 = scalar_lea.vmem %s0, 8
    %v173 = vld [vmem:[%s172] sm:$0xf]
    %v175 = vsel %vm67, %v173, 0
    %177 = vmatpush.msra.mxu0 0.0
    %178 = vmatpush.msra.mxu0 0.0
    %179 = vmatpush.msra.mxu0 0.0
    %180 = vmatpush.msra.mxu0 0.0
    %181 = vmatpush.msra.mxu0 0.0
    %182 = vmatpush.msra.mxu0 0.0
    %183 = vmatpush.msra.mxu0 0.0
    %184 = vmatpush.msra.mxu0 0.0
    %185 = vmatpush.msra.mxu0 0.0
    %186 = vmatpush.msra.mxu0 0.0
    %187 = vmatpush.msra.mxu0 0.0
    %188 = vmatpush.msra.mxu0 0.0
    %189 = vmatpush.msra.mxu0 0.0
    %190 = vmatpush.msra.mxu0 0.0
    %191 = vmatpush.msra.mxu0 %v58
    %192 = vmatpush.msra.mxu0 %v56
    %193 = vmatmul.f32.gmra.mxu0 %v175
    %v194 = vpop.f32.mrf.mxu0
    %v195 = vadd.f32 %v63, %v194
    %196 = vdwg.mxu0
    %197 = vmatpush.msra.mxu0 0.0
    %198 = vmatpush.msra.mxu0 0.0
    %199 = vmatpush.msra.mxu0 0.0
    %200 = vmatpush.msra.mxu0 0.0
    %201 = vmatpush.msra.mxu0 0.0
    %202 = vmatpush.msra.mxu0 0.0
    %203 = vmatpush.msra.mxu0 0.0
    %204 = vmatpush.msra.mxu0 0.0
    %205 = vmatpush.msra.mxu0 0.0
    %206 = vmatpush.msra.mxu0 0.0
    %207 = vmatpush.msra.mxu0 0.0
    %208 = vmatpush.msra.mxu0 0.0
    %209 = vmatpush.msra.mxu0 0.0
    %210 = vmatpush.msra.mxu0 0.0
    %211 = vmatpush.msra.mxu0 %v59
    %212 = vmatpush.msra.mxu0 %v57
    %213 = vmatmul.f32.gmra.mxu0 %v175
    %v214 = vpop.f32.mrf.mxu0
    %v215 = vadd.f32 %v64, %v214
    %216 = vdwg.mxu0
    %v219 = vrot.slane %v215, 4
    %v220 = vsel %vm114, %v195, %v219
    %s222 = scalar_lea.vmem [#allocation2], 16
    %223 = vst.msk [vmem:[%s222] sm:$0xff] %vm118, %v220
    %s224 = scalar_lea.vmem %s0, 12
    %v225 = vld [vmem:[%s224] sm:$0xf]
    %v227 = vsel %vm67, %v225, 0
    %229 = vmatpush.msra.mxu0 0.0
    %230 = vmatpush.msra.mxu0 0.0
    %231 = vmatpush.msra.mxu0 0.0
    %232 = vmatpush.msra.mxu0 0.0
    %233 = vmatpush.msra.mxu0 0.0
    %234 = vmatpush.msra.mxu0 0.0
    %235 = vmatpush.msra.mxu0 0.0
    %236 = vmatpush.msra.mxu0 0.0
    %237 = vmatpush.msra.mxu0 0.0
    %238 = vmatpush.msra.mxu0 0.0
    %239 = vmatpush.msra.mxu0 0.0
    %240 = vmatpush.msra.mxu0 0.0
    %241 = vmatpush.msra.mxu0 0.0
    %242 = vmatpush.msra.mxu0 0.0
    %243 = vmatpush.msra.mxu0 %v58
    %244 = vmatpush.msra.mxu0 %v56
    %245 = vmatmul.f32.gmra.mxu0 %v227
    %v246 = vpop.f32.mrf.mxu0
    %v247 = vadd.f32 %v63, %v246
    %248 = vdwg.mxu0
    %249 = vmatpush.msra.mxu0 0.0
    %250 = vmatpush.msra.mxu0 0.0
    %251 = vmatpush.msra.mxu0 0.0
    %252 = vmatpush.msra.mxu0 0.0
    %253 = vmatpush.msra.mxu0 0.0
    %254 = vmatpush.msra.mxu0 0.0
    %255 = vmatpush.msra.mxu0 0.0
    %256 = vmatpush.msra.mxu0 0.0
    %257 = vmatpush.msra.mxu0 0.0
    %258 = vmatpush.msra.mxu0 0.0
    %259 = vmatpush.msra.mxu0 0.0
    %260 = vmatpush.msra.mxu0 0.0
    %261 = vmatpush.msra.mxu0 0.0
    %262 = vmatpush.msra.mxu0 0.0
    %263 = vmatpush.msra.mxu0 %v59
    %264 = vmatpush.msra.mxu0 %v57
    %265 = vmatmul.f32.gmra.mxu0 %v227
    %v266 = vpop.f32.mrf.mxu0
    %v267 = vadd.f32 %v64, %v266
    %268 = vdwg.mxu0
    %v271 = vrot.slane %v267, 4
    %v272 = vsel %vm114, %v247, %v271
    %s274 = scalar_lea.vmem [#allocation2], 24
    %275 = vst.msk [vmem:[%s274] sm:$0xff] %vm118, %v272
    %s276 = scalar_lea.vmem %s0, 16
    %v277 = vld [vmem:[%s276] sm:$0xf]
    %v279 = vsel %vm67, %v277, 0
    %281 = vmatpush.msra.mxu0 0.0
    %282 = vmatpush.msra.mxu0 0.0
    %283 = vmatpush.msra.mxu0 0.0
    %284 = vmatpush.msra.mxu0 0.0
    %285 = vmatpush.msra.mxu0 0.0
    %286 = vmatpush.msra.mxu0 0.0
    %287 = vmatpush.msra.mxu0 0.0
    %288 = vmatpush.msra.mxu0 0.0
    %289 = vmatpush.msra.mxu0 0.0
    %290 = vmatpush.msra.mxu0 0.0
    %291 = vmatpush.msra.mxu0 0.0
    %292 = vmatpush.msra.mxu0 0.0
    %293 = vmatpush.msra.mxu0 0.0
    %294 = vmatpush.msra.mxu0 0.0
    %295 = vmatpush.msra.mxu0 %v58
    %296 = vmatpush.msra.mxu0 %v56
    %297 = vmatmul.f32.gmra.mxu0 %v279
    %v298 = vpop.f32.mrf.mxu0
    %v299 = vadd.f32 %v63, %v298
    %300 = vdwg.mxu0
    %301 = vmatpush.msra.mxu0 0.0
    %302 = vmatpush.msra.mxu0 0.0
    %303 = vmatpush.msra.mxu0 0.0
    %304 = vmatpush.msra.mxu0 0.0
    %305 = vmatpush.msra.mxu0 0.0
    %306 = vmatpush.msra.mxu0 0.0
    %307 = vmatpush.msra.mxu0 0.0
    %308 = vmatpush.msra.mxu0 0.0
    %309 = vmatpush.msra.mxu0 0.0
    %310 = vmatpush.msra.mxu0 0.0
    %311 = vmatpush.msra.mxu0 0.0
    %312 = vmatpush.msra.mxu0 0.0
    %313 = vmatpush.msra.mxu0 0.0
    %314 = vmatpush.msra.mxu0 0.0
    %315 = vmatpush.msra.mxu0 %v59
    %316 = vmatpush.msra.mxu0 %v57
    %317 = vmatmul.f32.gmra.mxu0 %v279
    %v318 = vpop.f32.mrf.mxu0
    %v319 = vadd.f32 %v64, %v318
    %320 = vdwg.mxu0
    %v323 = vrot.slane %v319, 4
    %v324 = vsel %vm114, %v299, %v323
    %s326 = scalar_lea.vmem [#allocation2], 32
    %327 = vst.msk [vmem:[%s326] sm:$0xff] %vm118, %v324
    %s328 = scalar_lea.vmem %s0, 20
    %v329 = vld [vmem:[%s328] sm:$0xf]
    %v331 = vsel %vm67, %v329, 0
    %333 = vmatpush.msra.mxu0 0.0
    %334 = vmatpush.msra.mxu0 0.0
    %335 = vmatpush.msra.mxu0 0.0
    %336 = vmatpush.msra.mxu0 0.0
    %337 = vmatpush.msra.mxu0 0.0
    %338 = vmatpush.msra.mxu0 0.0
    %339 = vmatpush.msra.mxu0 0.0
    %340 = vmatpush.msra.mxu0 0.0
    %341 = vmatpush.msra.mxu0 0.0
    %342 = vmatpush.msra.mxu0 0.0
    %343 = vmatpush.msra.mxu0 0.0
    %344 = vmatpush.msra.mxu0 0.0
    %345 = vmatpush.msra.mxu0 0.0
    %346 = vmatpush.msra.mxu0 0.0
    %347 = vmatpush.msra.mxu0 %v58
    %348 = vmatpush.msra.mxu0 %v56
    %349 = vmatmul.f32.gmra.mxu0 %v331
    %v350 = vpop.f32.mrf.mxu0
    %v351 = vadd.f32 %v63, %v350
    %352 = vdwg.mxu0
    %353 = vmatpush.msra.mxu0 0.0
    %354 = vmatpush.msra.mxu0 0.0
    %355 = vmatpush.msra.mxu0 0.0
    %356 = vmatpush.msra.mxu0 0.0
    %357 = vmatpush.msra.mxu0 0.0
    %358 = vmatpush.msra.mxu0 0.0
    %359 = vmatpush.msra.mxu0 0.0
    %360 = vmatpush.msra.mxu0 0.0
    %361 = vmatpush.msra.mxu0 0.0
    %362 = vmatpush.msra.mxu0 0.0
    %363 = vmatpush.msra.mxu0 0.0
    %364 = vmatpush.msra.mxu0 0.0
    %365 = vmatpush.msra.mxu0 0.0
    %366 = vmatpush.msra.mxu0 0.0
    %367 = vmatpush.msra.mxu0 %v59
    %368 = vmatpush.msra.mxu0 %v57
    %369 = vmatmul.f32.gmra.mxu0 %v331
    %v370 = vpop.f32.mrf.mxu0
    %v371 = vadd.f32 %v64, %v370
    %372 = vdwg.mxu0
    %v375 = vrot.slane %v371, 4
    %v376 = vsel %vm114, %v351, %v375
    %s378 = scalar_lea.vmem [#allocation2], 40
    %379 = vst.msk [vmem:[%s378] sm:$0xff] %vm118, %v376
    %s380 = scalar_lea.vmem %s0, 24
    %v381 = vld [vmem:[%s380] sm:$0xf]
    %v383 = vsel %vm67, %v381, 0
    %385 = vmatpush.msra.mxu0 0.0
    %386 = vmatpush.msra.mxu0 0.0
    %387 = vmatpush.msra.mxu0 0.0
    %388 = vmatpush.msra.mxu0 0.0
    %389 = vmatpush.msra.mxu0 0.0
    %390 = vmatpush.msra.mxu0 0.0
    %391 = vmatpush.msra.mxu0 0.0
    %392 = vmatpush.msra.mxu0 0.0
    %393 = vmatpush.msra.mxu0 0.0
    %394 = vmatpush.msra.mxu0 0.0
    %395 = vmatpush.msra.mxu0 0.0
    %396 = vmatpush.msra.mxu0 0.0
    %397 = vmatpush.msra.mxu0 0.0
    %398 = vmatpush.msra.mxu0 0.0
    %399 = vmatpush.msra.mxu0 %v58
    %400 = vmatpush.msra.mxu0 %v56
    %401 = vmatmul.f32.gmra.mxu0 %v383
    %v402 = vpop.f32.mrf.mxu0
    %v403 = vadd.f32 %v63, %v402
    %404 = vdwg.mxu0
    %405 = vmatpush.msra.mxu0 0.0
    %406 = vmatpush.msra.mxu0 0.0
    %407 = vmatpush.msra.mxu0 0.0
    %408 = vmatpush.msra.mxu0 0.0
    %409 = vmatpush.msra.mxu0 0.0
    %410 = vmatpush.msra.mxu0 0.0
    %411 = vmatpush.msra.mxu0 0.0
    %412 = vmatpush.msra.mxu0 0.0
    %413 = vmatpush.msra.mxu0 0.0
    %414 = vmatpush.msra.mxu0 0.0
    %415 = vmatpush.msra.mxu0 0.0
    %416 = vmatpush.msra.mxu0 0.0
    %417 = vmatpush.msra.mxu0 0.0
    %418 = vmatpush.msra.mxu0 0.0
    %419 = vmatpush.msra.mxu0 %v59
    %420 = vmatpush.msra.mxu0 %v57
    %421 = vmatmul.f32.gmra.mxu0 %v383
    %v422 = vpop.f32.mrf.mxu0
    %v423 = vadd.f32 %v64, %v422
    %424 = vdwg.mxu0
    %v427 = vrot.slane %v423, 4
    %v428 = vsel %vm114, %v403, %v427
    %s430 = scalar_lea.vmem [#allocation2], 48
    %431 = vst.msk [vmem:[%s430] sm:$0xff] %vm118, %v428
    %s432 = scalar_lea.vmem %s0, 28
    %v433 = vld [vmem:[%s432] sm:$0xf]
    %v435 = vsel %vm67, %v433, 0
    %437 = vmatpush.msra.mxu0 0.0
    %438 = vmatpush.msra.mxu0 0.0
    %439 = vmatpush.msra.mxu0 0.0
    %440 = vmatpush.msra.mxu0 0.0
    %441 = vmatpush.msra.mxu0 0.0
    %442 = vmatpush.msra.mxu0 0.0
    %443 = vmatpush.msra.mxu0 0.0
    %444 = vmatpush.msra.mxu0 0.0
    %445 = vmatpush.msra.mxu0 0.0
    %446 = vmatpush.msra.mxu0 0.0
    %447 = vmatpush.msra.mxu0 0.0
    %448 = vmatpush.msra.mxu0 0.0
    %449 = vmatpush.msra.mxu0 0.0
    %450 = vmatpush.msra.mxu0 0.0
    %451 = vmatpush.msra.mxu0 %v58
    %452 = vmatpush.msra.mxu0 %v56
    %453 = vmatmul.f32.gmra.mxu0 %v435
    %v454 = vpop.f32.mrf.mxu0
    %v455 = vadd.f32 %v63, %v454
    %456 = vdwg.mxu0
    %457 = vmatpush.msra.mxu0 0.0
    %458 = vmatpush.msra.mxu0 0.0
    %459 = vmatpush.msra.mxu0 0.0
    %460 = vmatpush.msra.mxu0 0.0
    %461 = vmatpush.msra.mxu0 0.0
    %462 = vmatpush.msra.mxu0 0.0
    %463 = vmatpush.msra.mxu0 0.0
    %464 = vmatpush.msra.mxu0 0.0
    %465 = vmatpush.msra.mxu0 0.0
    %466 = vmatpush.msra.mxu0 0.0
    %467 = vmatpush.msra.mxu0 0.0
    %468 = vmatpush.msra.mxu0 0.0
    %469 = vmatpush.msra.mxu0 0.0
    %470 = vmatpush.msra.mxu0 0.0
    %471 = vmatpush.msra.mxu0 %v59
    %472 = vmatpush.msra.mxu0 %v57
    %473 = vmatmul.f32.gmra.mxu0 %v435
    %v474 = vpop.f32.mrf.mxu0
    %v475 = vadd.f32 %v64, %v474
    %476 = vdwg.mxu0
    %v479 = vrot.slane %v475, 4
    %v480 = vsel %vm114, %v455, %v479
    %s482 = scalar_lea.vmem [#allocation2], 56
    %483 = vst.msk [vmem:[%s482] sm:$0xff] %vm118, %v480
    %v484 = vld [vmem:[%s3] sm:$0xff]
    %v485 = vld [vmem:[%s3 + $0x8] sm:$0xff]
    %v486 = vld [vmem:[%s3 + $0x10] sm:$0xff]
    %v487 = vld [vmem:[%s3 + $0x18] sm:$0xff]
    %v488 = vld [vmem:[%s3 + $0x20] sm:$0xff]
    %v489 = vld [vmem:[%s3 + $0x28] sm:$0xff]
    %v490 = vld [vmem:[%s3 + $0x30] sm:$0xff]
    %v491 = vld [vmem:[%s3 + $0x38] sm:$0xff]
    %v492 = vld [vmem:[#allocation7] sm:$0xff]
    %v493 = vld [vmem:[#allocation7 + $0x8] sm:$0xff]
    %v494 = vld [vmem:[#allocation7 + $0x10] sm:$0xff]
    %v495 = vld [vmem:[#allocation7 + $0x18] sm:$0xff]
    %v496 = vld [vmem:[#allocation7 + $0x20] sm:$0xff]
    %v497 = vld [vmem:[#allocation7 + $0x28] sm:$0xff]
    %v498 = vld [vmem:[#allocation7 + $0x30] sm:$0xff]
    %v499 = vld [vmem:[#allocation7 + $0x38] sm:$0xff]
    %v500 = vld [vmem:[#allocation7 + $0x40] sm:$0xff]
    %v501 = vld [vmem:[#allocation7 + $0x48] sm:$0xff]
    %v502 = vld [vmem:[#allocation7 + $0x50] sm:$0xff]
    %v503 = vld [vmem:[#allocation7 + $0x58] sm:$0xff]
    %v504 = vld [vmem:[#allocation7 + $0x60] sm:$0xff]
    %v505 = vld [vmem:[#allocation7 + $0x68] sm:$0xff]
    %v506 = vld [vmem:[#allocation7 + $0x70] sm:$0xff]
    %v507 = vld [vmem:[#allocation7 + $0x78] sm:$0xff]
    %v508 = vld [vmem:[#allocation7 + $0x80] sm:$0xff]
    %v509 = vld [vmem:[#allocation7 + $0x88] sm:$0xff]
    %v510 = vld [vmem:[#allocation7 + $0x90] sm:$0xff]
    %v511 = vld [vmem:[#allocation7 + $0x98] sm:$0xff]
    %v512 = vld [vmem:[#allocation7 + $0xa0] sm:$0xff]
    %v513 = vld [vmem:[#allocation7 + $0xa8] sm:$0xff]
    %v514 = vld [vmem:[#allocation7 + $0xb0] sm:$0xff]
    %v515 = vld [vmem:[#allocation7 + $0xb8] sm:$0xff]
    %v516 = vld [vmem:[#allocation7 + $0xc0] sm:$0xff]
    %v517 = vld [vmem:[#allocation7 + $0xc8] sm:$0xff]
    %v518 = vld [vmem:[#allocation7 + $0xd0] sm:$0xff]
    %v519 = vld [vmem:[#allocation7 + $0xd8] sm:$0xff]
    %v520 = vld [vmem:[#allocation7 + $0xe0] sm:$0xff]
    %v521 = vld [vmem:[#allocation7 + $0xe8] sm:$0xff]
    %v522 = vld [vmem:[#allocation7 + $0xf0] sm:$0xff]
    %v523 = vld [vmem:[#allocation7 + $0xf8] sm:$0xff]
    %v524 = vld [vmem:[#allocation7 + $0x100] sm:$0xff]
    %v525 = vld [vmem:[#allocation7 + $0x108] sm:$0xff]
    %v526 = vld [vmem:[#allocation7 + $0x110] sm:$0xff]
    %v527 = vld [vmem:[#allocation7 + $0x118] sm:$0xff]
    %v528 = vld [vmem:[#allocation7 + $0x120] sm:$0xff]
    %v529 = vld [vmem:[#allocation7 + $0x128] sm:$0xff]
    %v530 = vld [vmem:[#allocation7 + $0x130] sm:$0xff]
    %v531 = vld [vmem:[#allocation7 + $0x138] sm:$0xff]
    %v532 = vld [vmem:[#allocation7 + $0x140] sm:$0xff]
    %v533 = vld [vmem:[#allocation7 + $0x148] sm:$0xff]
    %v534 = vld [vmem:[#allocation7 + $0x150] sm:$0xff]
    %v535 = vld [vmem:[#allocation7 + $0x158] sm:$0xff]
    %v536 = vld [vmem:[#allocation7 + $0x160] sm:$0xff]
    %v537 = vld [vmem:[#allocation7 + $0x168] sm:$0xff]
    %v538 = vld [vmem:[#allocation7 + $0x170] sm:$0xff]
    %v539 = vld [vmem:[#allocation7 + $0x178] sm:$0xff]
    %v540 = vld [vmem:[#allocation7 + $0x180] sm:$0xff]
    %v541 = vld [vmem:[#allocation7 + $0x188] sm:$0xff]
    %v542 = vld [vmem:[#allocation7 + $0x190] sm:$0xff]
    %v543 = vld [vmem:[#allocation7 + $0x198] sm:$0xff]
    %v544 = vld [vmem:[#allocation7 + $0x1a0] sm:$0xff]
    %v545 = vld [vmem:[#allocation7 + $0x1a8] sm:$0xff]
    %v546 = vld [vmem:[#allocation7 + $0x1b0] sm:$0xff]
    %v547 = vld [vmem:[#allocation7 + $0x1b8] sm:$0xff]
    %v548 = vld [vmem:[#allocation7 + $0x1c0] sm:$0xff]
    %v549 = vld [vmem:[#allocation7 + $0x1c8] sm:$0xff]
    %v550 = vld [vmem:[#allocation7 + $0x1d0] sm:$0xff]
    %v551 = vld [vmem:[#allocation7 + $0x1d8] sm:$0xff]
    %v552 = vld [vmem:[#allocation7 + $0x1e0] sm:$0xff]
    %v553 = vld [vmem:[#allocation7 + $0x1e8] sm:$0xff]
    %v554 = vld [vmem:[#allocation7 + $0x1f0] sm:$0xff]
    %v555 = vld [vmem:[#allocation7 + $0x1f8] sm:$0xff]
    %v556 = vld [vmem:[#allocation7 + $0x200] sm:$0xff]
    %v557 = vld [vmem:[#allocation7 + $0x208] sm:$0xff]
    %v558 = vld [vmem:[#allocation7 + $0x210] sm:$0xff]
    %v559 = vld [vmem:[#allocation7 + $0x218] sm:$0xff]
    %v560 = vld [vmem:[#allocation7 + $0x220] sm:$0xff]
    %v561 = vld [vmem:[#allocation7 + $0x228] sm:$0xff]
    %v562 = vld [vmem:[#allocation7 + $0x230] sm:$0xff]
    %v563 = vld [vmem:[#allocation7 + $0x238] sm:$0xff]
    %v564 = vld [vmem:[#allocation7 + $0x240] sm:$0xff]
    %v565 = vld [vmem:[#allocation7 + $0x248] sm:$0xff]
    %v566 = vld [vmem:[#allocation7 + $0x250] sm:$0xff]
    %v567 = vld [vmem:[#allocation7 + $0x258] sm:$0xff]
    %v568 = vld [vmem:[#allocation7 + $0x260] sm:$0xff]
    %v569 = vld [vmem:[#allocation7 + $0x268] sm:$0xff]
    %v570 = vld [vmem:[#allocation7 + $0x270] sm:$0xff]
    %v571 = vld [vmem:[#allocation7 + $0x278] sm:$0xff]
    %v572 = vld [vmem:[#allocation7 + $0x280] sm:$0xff]
    %v573 = vld [vmem:[#allocation7 + $0x288] sm:$0xff]
    %v574 = vld [vmem:[#allocation7 + $0x290] sm:$0xff]
    %v575 = vld [vmem:[#allocation7 + $0x298] sm:$0xff]
    %v576 = vld [vmem:[#allocation7 + $0x2a0] sm:$0xff]
    %v577 = vld [vmem:[#allocation7 + $0x2a8] sm:$0xff]
    %v578 = vld [vmem:[#allocation7 + $0x2b0] sm:$0xff]
    %v579 = vld [vmem:[#allocation7 + $0x2b8] sm:$0xff]
    %v580 = vld [vmem:[#allocation7 + $0x2c0] sm:$0xff]
    %v581 = vld [vmem:[#allocation7 + $0x2c8] sm:$0xff]
    %v582 = vld [vmem:[#allocation7 + $0x2d0] sm:$0xff]
    %v583 = vld [vmem:[#allocation7 + $0x2d8] sm:$0xff]
    %v584 = vld [vmem:[#allocation7 + $0x2e0] sm:$0xff]
    %v585 = vld [vmem:[#allocation7 + $0x2e8] sm:$0xff]
    %v586 = vld [vmem:[#allocation7 + $0x2f0] sm:$0xff]
    %v587 = vld [vmem:[#allocation7 + $0x2f8] sm:$0xff]
    %v588 = vld [vmem:[#allocation7 + $0x300] sm:$0xff]
    %v589 = vld [vmem:[#allocation7 + $0x308] sm:$0xff]
    %v590 = vld [vmem:[#allocation7 + $0x310] sm:$0xff]
    %v591 = vld [vmem:[#allocation7 + $0x318] sm:$0xff]
    %v592 = vld [vmem:[#allocation7 + $0x320] sm:$0xff]
    %v593 = vld [vmem:[#allocation7 + $0x328] sm:$0xff]
    %v594 = vld [vmem:[#allocation7 + $0x330] sm:$0xff]
    %v595 = vld [vmem:[#allocation7 + $0x338] sm:$0xff]
    %v596 = vld [vmem:[#allocation7 + $0x340] sm:$0xff]
    %v597 = vld [vmem:[#allocation7 + $0x348] sm:$0xff]
    %v598 = vld [vmem:[#allocation7 + $0x350] sm:$0xff]
    %v599 = vld [vmem:[#allocation7 + $0x358] sm:$0xff]
    %v600 = vld [vmem:[#allocation7 + $0x360] sm:$0xff]
    %v601 = vld [vmem:[#allocation7 + $0x368] sm:$0xff]
    %v602 = vld [vmem:[#allocation7 + $0x370] sm:$0xff]
    %v603 = vld [vmem:[#allocation7 + $0x378] sm:$0xff]
    %v604 = vld [vmem:[#allocation7 + $0x380] sm:$0xff]
    %v605 = vld [vmem:[#allocation7 + $0x388] sm:$0xff]
    %v606 = vld [vmem:[#allocation7 + $0x390] sm:$0xff]
    %v607 = vld [vmem:[#allocation7 + $0x398] sm:$0xff]
    %v608 = vld [vmem:[#allocation7 + $0x3a0] sm:$0xff]
    %v609 = vld [vmem:[#allocation7 + $0x3a8] sm:$0xff]
    %v610 = vld [vmem:[#allocation7 + $0x3b0] sm:$0xff]
    %v611 = vld [vmem:[#allocation7 + $0x3b8] sm:$0xff]
    %v612 = vld [vmem:[#allocation7 + $0x3c0] sm:$0xff]
    %v613 = vld [vmem:[#allocation7 + $0x3c8] sm:$0xff]
    %v614 = vld [vmem:[#allocation7 + $0x3d0] sm:$0xff]
    %v615 = vld [vmem:[#allocation7 + $0x3d8] sm:$0xff]
    %v616 = vld [vmem:[#allocation7 + $0x3e0] sm:$0xff]
    %v617 = vld [vmem:[#allocation7 + $0x3e8] sm:$0xff]
    %v618 = vld [vmem:[#allocation7 + $0x3f0] sm:$0xff]
    %v619 = vld [vmem:[#allocation7 + $0x3f8] sm:$0xff]
    %v620 = vld [vmem:[#allocation7 + $0x400] sm:$0xff]
    %v621 = vld [vmem:[#allocation7 + $0x408] sm:$0xff]
    %v622 = vld [vmem:[#allocation7 + $0x410] sm:$0xff]
    %v623 = vld [vmem:[#allocation7 + $0x418] sm:$0xff]
    %v624 = vld [vmem:[#allocation7 + $0x420] sm:$0xff]
    %v625 = vld [vmem:[#allocation7 + $0x428] sm:$0xff]
    %v626 = vld [vmem:[#allocation7 + $0x430] sm:$0xff]
    %v627 = vld [vmem:[#allocation7 + $0x438] sm:$0xff]
    %v628 = vld [vmem:[%s5] sm:$0xff]
    %v629 = vld [vmem:[%s5 + $0x8] sm:$0xff]
    %v630 = vld [vmem:[%s5 + $0x10] sm:$0xff]
    %v631 = vld [vmem:[%s5 + $0x18] sm:$0xff]
    %v632 = vld [vmem:[%s5 + $0x20] sm:$0xff]
    %v633 = vld [vmem:[%s5 + $0x28] sm:$0xff]
    %v634 = vld [vmem:[%s5 + $0x30] sm:$0xff]
    %v635 = vld [vmem:[%s5 + $0x38] sm:$0xff]
    %v636 = vld [vmem:[%s5 + $0x40] sm:$0xff]
    %v637 = vld [vmem:[%s5 + $0x48] sm:$0xff]
    %v638 = vld [vmem:[%s5 + $0x50] sm:$0xff]
    %v639 = vld [vmem:[%s5 + $0x58] sm:$0xff]
    %v640 = vld [vmem:[%s5 + $0x60] sm:$0xff]
    %v641 = vld [vmem:[%s5 + $0x68] sm:$0xff]
    %v642 = vld [vmem:[%s5 + $0x70] sm:$0xff]
    %v643 = vld [vmem:[%s5 + $0x78] sm:$0xff]
    %v644 = vld [vmem:[%s5 + $0x80] sm:$0xff]
    %v645 = vld [vmem:[%s5 + $0x88] sm:$0xff]
    %v646 = vld [vmem:[%s5 + $0x90] sm:$0xff]
    %v647 = vld [vmem:[%s5 + $0x98] sm:$0xff]
    %v648 = vld [vmem:[%s5 + $0xa0] sm:$0xff]
    %v649 = vld [vmem:[%s5 + $0xa8] sm:$0xff]
    %v650 = vld [vmem:[%s5 + $0xb0] sm:$0xff]
    %v651 = vld [vmem:[%s5 + $0xb8] sm:$0xff]
    %v652 = vld [vmem:[%s5 + $0xc0] sm:$0xff]
    %v653 = vld [vmem:[%s5 + $0xc8] sm:$0xff]
    %v654 = vld [vmem:[%s5 + $0xd0] sm:$0xff]
    %v655 = vld [vmem:[%s5 + $0xd8] sm:$0xff]
    %v656 = vld [vmem:[%s5 + $0xe0] sm:$0xff]
    %v657 = vld [vmem:[%s5 + $0xe8] sm:$0xff]
    %v658 = vld [vmem:[%s5 + $0xf0] sm:$0xff]
    %v659 = vld [vmem:[%s5 + $0xf8] sm:$0xff]
    %v660 = vld [vmem:[%s6] sm:$0x1]
    %v661 = vlaneseq
    %v662 = vand.u32 %v661, 127
    %v663 = vadd.s32 %v662, 128
    %vm664 = vcmp.ge.s32.totalorder %v662, 64
    %vm665 = vcmp.ge.s32.totalorder %v663, 64
    %vm666 = vcmp.lt.s32.totalorder %v662, 96
    %vm667 = vcmp.lt.s32.totalorder %v663, 96
    %vm668 = vmand %vm664, %vm666
    %vm669 = vmand %vm665, %vm667
    %v670 = vld [vmem:[#allocation2] sm:$0xff]
    %v671 = vtanh.pop %v670
    %v672 = vmul.f32 %v670, 0.16666667
    %v673 = vadd.f32 %v672, 0.5
    %v674 = vmax.f32 %v673, 0.0
    %v675 = vmin.f32 %v674, 1.0
    %677 = vst [vmem:[#allocation1] ss:$2 sm:$0xff] %v671
    %v678 = vld.sshfl [vmem:[#allocation1] sm:$0xff pattern:$0x75316420]
    %v679 = vld.sshfl [vmem:[#allocation1 + $0x8] sm:$0xff pattern:$0x75316420]
    %683 = vst [vmem:[#allocation1] ss:$2 sm:$0xff] %v675
    %v684 = vld.sshfl [vmem:[#allocation1] sm:$0xff pattern:$0x75316420]
    %v685 = vld.sshfl [vmem:[#allocation1 + $0x8] sm:$0xff pattern:$0x75316420]
    %v688 = vsel %vm668, %v678, %v684
    %v689 = vsel %vm669, %v679, %v685
    %vm690 = vcmask 64512
    %v692 = vsel %vm690, %v689, 0
    %694 = vmatpush.msra.mxu0 %v614
    %695 = vmatpush.msra.mxu0 %v606
    %696 = vmatpush.msra.mxu0 %v598
    %697 = vmatpush.msra.mxu0 %v590
    %698 = vmatpush.msra.mxu0 %v582
    %699 = vmatpush.msra.mxu0 %v574
    %700 = vmatpush.msra.mxu0 %v566
    %701 = vmatpush.msra.mxu0 %v558
    %702 = vmatpush.msra.mxu0 %v550
    %703 = vmatpush.msra.mxu0 %v542
    %704 = vmatpush.msra.mxu0 %v534
    %705 = vmatpush.msra.mxu0 %v526
    %706 = vmatpush.msra.mxu0 %v518
    %707 = vmatpush.msra.mxu0 %v510
    %708 = vmatpush.msra.mxu0 %v502
    %709 = vmatpush.msra.mxu0 %v494
    %710 = vmatmul.f32.gmra.mxu0 %v688
    %v711 = vpop.f32.mrf.mxu0
    %v712 = vadd.f32 0.0, %v711
    %713 = vdwg.mxu0
    %714 = vmatpush.msra.mxu0 0.0
    %715 = vmatpush.msra.mxu0 0.0
    %716 = vmatpush.msra.mxu0 0.0
    %717 = vmatpush.msra.mxu0 0.0
    %718 = vmatpush.msra.mxu0 0.0
    %719 = vmatpush.msra.mxu0 0.0
    %720 = vmatpush.msra.mxu0 0.0
    %721 = vmatpush.msra.mxu0 0.0
    %722 = vmatpush.msra.mxu0 0.0
    %723 = vmatpush.msra.mxu0 0.0
    %724 = vmatpush.msra.mxu0 0.0
    %725 = vmatpush.msra.mxu0 0.0
    %726 = vmatpush.msra.mxu0 0.0
    %727 = vmatpush.msra.mxu0 0.0
    %728 = vmatpush.msra.mxu0 0.0
    %729 = vmatpush.msra.mxu0 %v622
    %730 = vmatmul.f32.gmra.mxu0 %v692
    %v731 = vpop.f32.mrf.mxu0
    %v732 = vadd.f32 %v712, %v731
    %733 = vdwg.mxu0
    %734 = vmatpush.msra.mxu0 %v615
    %735 = vmatpush.msra.mxu0 %v607
    %736 = vmatpush.msra.mxu0 %v599
    %737 = vmatpush.msra.mxu0 %v591
    %738 = vmatpush.msra.mxu0 %v583
    %739 = vmatpush.msra.mxu0 %v575
    %740 = vmatpush.msra.mxu0 %v567
    %741 = vmatpush.msra.mxu0 %v559
    %742 = vmatpush.msra.mxu0 %v551
    %743 = vmatpush.msra.mxu0 %v543
    %744 = vmatpush.msra.mxu0 %v535
    %745 = vmatpush.msra.mxu0 %v527
    %746 = vmatpush.msra.mxu0 %v519
    %747 = vmatpush.msra.mxu0 %v511
    %748 = vmatpush.msra.mxu0 %v503
    %749 = vmatpush.msra.mxu0 %v495
    %750 = vmatmul.f32.gmra.mxu0 %v688
    %v751 = vpop.f32.mrf.mxu0
    %v752 = vadd.f32 0.0, %v751
    %753 = vdwg.mxu0
    %754 = vmatpush.msra.mxu0 0.0
    %755 = vmatpush.msra.mxu0 0.0
    %756 = vmatpush.msra.mxu0 0.0
    %757 = vmatpush.msra.mxu0 0.0
    %758 = vmatpush.msra.mxu0 0.0
    %759 = vmatpush.msra.mxu0 0.0
    %760 = vmatpush.msra.mxu0 0.0
    %761 = vmatpush.msra.mxu0 0.0
    %762 = vmatpush.msra.mxu0 0.0
    %763 = vmatpush.msra.mxu0 0.0
    %764 = vmatpush.msra.mxu0 0.0
    %765 = vmatpush.msra.mxu0 0.0
    %766 = vmatpush.msra.mxu0 0.0
    %767 = vmatpush.msra.mxu0 0.0
    %768 = vmatpush.msra.mxu0 0.0
    %769 = vmatpush.msra.mxu0 %v623
    %770 = vmatmul.f32.gmra.mxu0 %v692
    %v771 = vpop.f32.mrf.mxu0
    %v772 = vadd.f32 %v752, %v771
    %773 = vdwg.mxu0
    %774 = vmatpush.msra.mxu0 %v616
    %775 = vmatpush.msra.mxu0 %v608
    %776 = vmatpush.msra.mxu0 %v600
    %777 = vmatpush.msra.mxu0 %v592
    %778 = vmatpush.msra.mxu0 %v584
    %779 = vmatpush.msra.mxu0 %v576
    %780 = vmatpush.msra.mxu0 %v568
    %781 = vmatpush.msra.mxu0 %v560
    %782 = vmatpush.msra.mxu0 %v552
    %783 = vmatpush.msra.mxu0 %v544
    %784 = vmatpush.msra.mxu0 %v536
    %785 = vmatpush.msra.mxu0 %v528
    %786 = vmatpush.msra.mxu0 %v520
    %787 = vmatpush.msra.mxu0 %v512
    %788 = vmatpush.msra.mxu0 %v504
    %789 = vmatpush.msra.mxu0 %v496
    %790 = vmatmul.f32.gmra.mxu0 %v688
    %v791 = vpop.f32.mrf.mxu0
    %v792 = vadd.f32 0.0, %v791
    %793 = vdwg.mxu0
    %794 = vmatpush.msra.mxu0 0.0
    %795 = vmatpush.msra.mxu0 0.0
    %796 = vmatpush.msra.mxu0 0.0
    %797 = vmatpush.msra.mxu0 0.0
    %798 = vmatpush.msra.mxu0 0.0
    %799 = vmatpush.msra.mxu0 0.0
    %800 = vmatpush.msra.mxu0 0.0
    %801 = vmatpush.msra.mxu0 0.0
    %802 = vmatpush.msra.mxu0 0.0
    %803 = vmatpush.msra.mxu0 0.0
    %804 = vmatpush.msra.mxu0 0.0
    %805 = vmatpush.msra.mxu0 0.0
    %806 = vmatpush.msra.mxu0 0.0
    %807 = vmatpush.msra.mxu0 0.0
    %808 = vmatpush.msra.mxu0 0.0
    %809 = vmatpush.msra.mxu0 %v624
    %810 = vmatmul.f32.gmra.mxu0 %v692
    %v811 = vpop.f32.mrf.mxu0
    %v812 = vadd.f32 %v792, %v811
    %813 = vdwg.mxu0
    %814 = vmatpush.msra.mxu0 %v617
    %815 = vmatpush.msra.mxu0 %v609
    %816 = vmatpush.msra.mxu0 %v601
    %817 = vmatpush.msra.mxu0 %v593
    %818 = vmatpush.msra.mxu0 %v585
    %819 = vmatpush.msra.mxu0 %v577
    %820 = vmatpush.msra.mxu0 %v569
    %821 = vmatpush.msra.mxu0 %v561
    %822 = vmatpush.msra.mxu0 %v553
    %823 = vmatpush.msra.mxu0 %v545
    %824 = vmatpush.msra.mxu0 %v537
    %825 = vmatpush.msra.mxu0 %v529
    %826 = vmatpush.msra.mxu0 %v521
    %827 = vmatpush.msra.mxu0 %v513
    %828 = vmatpush.msra.mxu0 %v505
    %829 = vmatpush.msra.mxu0 %v497
    %830 = vmatmul.f32.gmra.mxu0 %v688
    %v831 = vpop.f32.mrf.mxu0
    %v832 = vadd.f32 0.0, %v831
    %833 = vdwg.mxu0
    %834 = vmatpush.msra.mxu0 0.0
    %835 = vmatpush.msra.mxu0 0.0
    %836 = vmatpush.msra.mxu0 0.0
    %837 = vmatpush.msra.mxu0 0.0
    %838 = vmatpush.msra.mxu0 0.0
    %839 = vmatpush.msra.mxu0 0.0
    %840 = vmatpush.msra.mxu0 0.0
    %841 = vmatpush.msra.mxu0 0.0
    %842 = vmatpush.msra.mxu0 0.0
    %843 = vmatpush.msra.mxu0 0.0
    %844 = vmatpush.msra.mxu0 0.0
    %845 = vmatpush.msra.mxu0 0.0
    %846 = vmatpush.msra.mxu0 0.0
    %847 = vmatpush.msra.mxu0 0.0
    %848 = vmatpush.msra.mxu0 0.0
    %849 = vmatpush.msra.mxu0 %v625
    %850 = vmatmul.f32.gmra.mxu0 %v692
    %v851 = vpop.f32.mrf.mxu0
    %v852 = vadd.f32 %v832, %v851
    %853 = vdwg.mxu0
    %v854 = vmul.f32 %v732, %v812
    %v855 = vmul.f32 %v772, %v852
    %v856 = vld [vmem:[%s7] sm:$0x3]
    %v857 = vld [vmem:[%s8] sm:$0x3]
    %v859 = vperm.slane %v856, 0
    %v860 = vperm.slane %v856, 1
    %v863 = vmul.f32 %v854, %v859
    %v864 = vmul.f32 %v855, %v860
    %v866 = vperm.slane %v857, 0
    %v867 = vperm.slane %v857, 1
    %v870 = vmul.f32 %v854, %v866
    %v871 = vmul.f32 %v855, %v867
    %v872 = vmul.f32 %v863, %v863
    %v873 = vmul.f32 %v864, %v864
    %v874 = vmul.f32 %v870, %v870
    %v875 = vmul.f32 %v871, %v871
    %v876 = vadd.f32 %v872, %v874
    %v877 = vadd.f32 %v873, %v875
    %v879 = vperm.slane %v660, 0
    %881 = vmatpush.msra.mxu0 %v643
    %882 = vmatpush.msra.mxu0 %v642
    %883 = vmatpush.msra.mxu0 %v641
    %884 = vmatpush.msra.mxu0 %v640
    %885 = vmatpush.msra.mxu0 %v639
    %886 = vmatpush.msra.mxu0 %v638
    %887 = vmatpush.msra.mxu0 %v637
    %888 = vmatpush.msra.mxu0 %v636
    %889 = vmatpush.msra.mxu0 %v635
    %890 = vmatpush.msra.mxu0 %v634
    %891 = vmatpush.msra.mxu0 %v633
    %892 = vmatpush.msra.mxu0 %v632
    %893 = vmatpush.msra.mxu0 %v631
    %894 = vmatpush.msra.mxu0 %v630
    %895 = vmatpush.msra.mxu0 %v629
    %896 = vmatpush.msra.mxu0 %v628
    %897 = vmatmul.f32.gmra.mxu0 %v876
    %v898 = vpop.f32.mrf.mxu0
    %v899 = vadd.f32 %v879, %v898
    %900 = vdwg.mxu0
    %901 = vmatpush.msra.mxu0 %v659
    %902 = vmatpush.msra.mxu0 %v658
    %903 = vmatpush.msra.mxu0 %v657
    %904 = vmatpush.msra.mxu0 %v656
    %905 = vmatpush.msra.mxu0 %v655
    %906 = vmatpush.msra.mxu0 %v654
    %907 = vmatpush.msra.mxu0 %v653
    %908 = vmatpush.msra.mxu0 %v652
    %909 = vmatpush.msra.mxu0 %v651
    %910 = vmatpush.msra.mxu0 %v650
    %911 = vmatpush.msra.mxu0 %v649
    %912 = vmatpush.msra.mxu0 %v648
    %913 = vmatpush.msra.mxu0 %v647
    %914 = vmatpush.msra.mxu0 %v646
    %915 = vmatpush.msra.mxu0 %v645
    %916 = vmatpush.msra.mxu0 %v644
    %917 = vmatmul.f32.gmra.mxu0 %v877
    %v918 = vpop.f32.mrf.mxu0
    %v919 = vadd.f32 %v899, %v918
    %920 = vdwg.mxu0
    %v921 = vtanh.pop %v919
    %923 = vrot.lane.b32.xlu0 %v921, 96
    %v924 = vpop.permute.xlu0 %923
    %v926 = vmul.f32 %v688, %v924
    %928 = vrot.lane.b32.xlu0 %v926, 32
    %v929 = vpop.permute.xlu0 %928
    %vm931 = vcmask 257024
    %932 = vst.msk [vmem:[#allocation3] sm:$0xf] %vm931, %v929
    %v935 = vrot.slane %v864, 4
    %v936 = vsel %vm114, %v863, %v935
    %938 = vst [vmem:[#allocation4] sm:$0xff] %v936
    %v941 = vrot.slane %v871, 4
    %v942 = vsel %vm114, %v870, %v941
    %944 = vst [vmem:[#allocation5] sm:$0xff] %v942
    %v945 = vld [vmem:[%s170] sm:$0xff]
    %v946 = vld [vmem:[#allocation3] sm:$0xf]
    %vm947 = vcmask 261120
    %v949 = vsel %vm947, %v946, 0
    %951 = vmatpush.msra.mxu0 0.0
    %952 = vmatpush.msra.mxu0 0.0
    %953 = vmatpush.msra.mxu0 0.0
    %954 = vmatpush.msra.mxu0 0.0
    %955 = vmatpush.msra.mxu0 0.0
    %956 = vmatpush.msra.mxu0 0.0
    %957 = vmatpush.msra.mxu0 0.0
    %958 = vmatpush.msra.mxu0 0.0
    %959 = vmatpush.msra.mxu0 0.0
    %960 = vmatpush.msra.mxu0 0.0
    %961 = vmatpush.msra.mxu0 0.0
    %962 = vmatpush.msra.mxu0 0.0
    %963 = vmatpush.msra.mxu0 %v490
    %964 = vmatpush.msra.mxu0 %v488
    %965 = vmatpush.msra.mxu0 %v486
    %966 = vmatpush.msra.mxu0 %v484
    %967 = vmatmul.f32.gmra.mxu0 %v949
    %v968 = vpop.f32.mrf.mxu0
    %v969 = vadd.f32 0.0, %v968
    %970 = vdwg.mxu0
    %971 = vmatpush.msra.mxu0 0.0
    %972 = vmatpush.msra.mxu0 0.0
    %973 = vmatpush.msra.mxu0 0.0
    %974 = vmatpush.msra.mxu0 0.0
    %975 = vmatpush.msra.mxu0 0.0
    %976 = vmatpush.msra.mxu0 0.0
    %977 = vmatpush.msra.mxu0 0.0
    %978 = vmatpush.msra.mxu0 0.0
    %979 = vmatpush.msra.mxu0 0.0
    %980 = vmatpush.msra.mxu0 0.0
    %981 = vmatpush.msra.mxu0 0.0
    %982 = vmatpush.msra.mxu0 0.0
    %983 = vmatpush.msra.mxu0 %v491
    %984 = vmatpush.msra.mxu0 %v489
    %985 = vmatpush.msra.mxu0 %v487
    %986 = vmatpush.msra.mxu0 %v485
    %987 = vmatmul.f32.gmra.mxu0 %v949
    %v988 = vpop.f32.mrf.mxu0
    %v989 = vadd.f32 0.0, %v988
    %990 = vdwg.mxu0
    %v993 = vrot.slane %v989, 4
    %v994 = vsel %vm114, %v969, %v993
    %v996 = vadd.f32 %v945, %v994
    %v997 = vtanh.pop %v996
    %v998 = vmul.f32 %v996, 0.16666667
    %v999 = vadd.f32 %v998, 0.5
    %v1000 = vmax.f32 %v999, 0.0
    %v1001 = vmin.f32 %v1000, 1.0
    %1003 = vst [vmem:[#allocation1] ss:$2 sm:$0xff] %v997
    %v1004 = vld.sshfl [vmem:[#allocation1] sm:$0xff pattern:$0x75316420]
    %v1005 = vld.sshfl [vmem:[#allocation1 + $0x8] sm:$0xff pattern:$0x75316420]
    %1009 = vst [vmem:[#allocation1] ss:$2 sm:$0xff] %v1001
    %v1010 = vld.sshfl [vmem:[#allocation1] sm:$0xff pattern:$0x75316420]
    %v1011 = vld.sshfl [vmem:[#allocation1 + $0x8] sm:$0xff pattern:$0x75316420]
    %v1014 = vsel %vm668, %v1004, %v1010
    %v1015 = vsel %vm669, %v1005, %v1011
    %v1017 = vsel %vm690, %v1015, 0
    %1019 = vmatpush.msra.mxu0 %v612
    %1020 = vmatpush.msra.mxu0 %v604
    %1021 = vmatpush.msra.mxu0 %v596
    %1022 = vmatpush.msra.mxu0 %v588
    %1023 = vmatpush.msra.mxu0 %v580
    %1024 = vmatpush.msra.mxu0 %v572
    %1025 = vmatpush.msra.mxu0 %v564
    %1026 = vmatpush.msra.mxu0 %v556
    %1027 = vmatpush.msra.mxu0 %v548
    %1028 = vmatpush.msra.mxu0 %v540
    %1029 = vmatpush.msra.mxu0 %v532
    %1030 = vmatpush.msra.mxu0 %v524
    %1031 = vmatpush.msra.mxu0 %v516
    %1032 = vmatpush.msra.mxu0 %v508
    %1033 = vmatpush.msra.mxu0 %v500
    %1034 = vmatpush.msra.mxu0 %v492
    %1035 = vmatmul.f32.gmra.mxu0 %v1014
    %v1036 = vpop.f32.mrf.mxu0
    %v1037 = vadd.f32 0.0, %v1036
    %1038 = vdwg.mxu0
    %1039 = vmatpush.msra.mxu0 0.0
    %1040 = vmatpush.msra.mxu0 0.0
    %1041 = vmatpush.msra.mxu0 0.0
    %1042 = vmatpush.msra.mxu0 0.0
    %1043 = vmatpush.msra.mxu0 0.0
    %1044 = vmatpush.msra.mxu0 0.0
    %1045 = vmatpush.msra.mxu0 0.0
    %1046 = vmatpush.msra.mxu0 0.0
    %1047 = vmatpush.msra.mxu0 0.0
    %1048 = vmatpush.msra.mxu0 0.0
    %1049 = vmatpush.msra.mxu0 0.0
    %1050 = vmatpush.msra.mxu0 0.0
    %1051 = vmatpush.msra.mxu0 0.0
    %1052 = vmatpush.msra.mxu0 0.0
    %1053 = vmatpush.msra.mxu0 0.0
    %1054 = vmatpush.msra.mxu0 %v620
    %1055 = vmatmul.f32.gmra.mxu0 %v1017
    %v1056 = vpop.f32.mrf.mxu0
    %v1057 = vadd.f32 %v1037, %v1056
    %1058 = vdwg.mxu0
    %1059 = vmatpush.msra.mxu0 %v613
    %1060 = vmatpush.msra.mxu0 %v605
    %1061 = vmatpush.msra.mxu0 %v597
    %1062 = vmatpush.msra.mxu0 %v589
    %1063 = vmatpush.msra.mxu0 %v581
    %1064 = vmatpush.msra.mxu0 %v573
    %1065 = vmatpush.msra.mxu0 %v565
    %1066 = vmatpush.msra.mxu0 %v557
    %1067 = vmatpush.msra.mxu0 %v549
    %1068 = vmatpush.msra.mxu0 %v541
    %1069 = vmatpush.msra.mxu0 %v533
    %1070 = vmatpush.msra.mxu0 %v525
    %1071 = vmatpush.msra.mxu0 %v517
    %1072 = vmatpush.msra.mxu0 %v509
    %1073 = vmatpush.msra.mxu0 %v501
    %1074 = vmatpush.msra.mxu0 %v493
    %1075 = vmatmul.f32.gmra.mxu0 %v1014
    %v1076 = vpop.f32.mrf.mxu0
    %v1077 = vadd.f32 0.0, %v1076
    %1078 = vdwg.mxu0
    %1079 = vmatpush.msra.mxu0 0.0
    %1080 = vmatpush.msra.mxu0 0.0
    %1081 = vmatpush.msra.mxu0 0.0
    %1082 = vmatpush.msra.mxu0 0.0
    %1083 = vmatpush.msra.mxu0 0.0
    %1084 = vmatpush.msra.mxu0 0.0
    %1085 = vmatpush.msra.mxu0 0.0
    %1086 = vmatpush.msra.mxu0 0.0
    %1087 = vmatpush.msra.mxu0 0.0
    %1088 = vmatpush.msra.mxu0 0.0
    %1089 = vmatpush.msra.mxu0 0.0
    %1090 = vmatpush.msra.mxu0 0.0
    %1091 = vmatpush.msra.mxu0 0.0
    %1092 = vmatpush.msra.mxu0 0.0
    %1093 = vmatpush.msra.mxu0 0.0
    %1094 = vmatpush.msra.mxu0 %v621
    %1095 = vmatmul.f32.gmra.mxu0 %v1017
    %v1096 = vpop.f32.mrf.mxu0
    %v1097 = vadd.f32 %v1077, %v1096
    %1098 = vdwg.mxu0
    %1099 = vmatpush.msra.mxu0 %v614
    %1100 = vmatpush.msra.mxu0 %v606
    %1101 = vmatpush.msra.mxu0 %v598
    %1102 = vmatpush.msra.mxu0 %v590
    %1103 = vmatpush.msra.mxu0 %v582
    %1104 = vmatpush.msra.mxu0 %v574
    %1105 = vmatpush.msra.mxu0 %v566
    %1106 = vmatpush.msra.mxu0 %v558
    %1107 = vmatpush.msra.mxu0 %v550
    %1108 = vmatpush.msra.mxu0 %v542
    %1109 = vmatpush.msra.mxu0 %v534
    %1110 = vmatpush.msra.mxu0 %v526
    %1111 = vmatpush.msra.mxu0 %v518
    %1112 = vmatpush.msra.mxu0 %v510
    %1113 = vmatpush.msra.mxu0 %v502
    %1114 = vmatpush.msra.mxu0 %v494
    %1115 = vmatmul.f32.gmra.mxu0 %v1014
    %v1116 = vpop.f32.mrf.mxu0
    %v1117 = vadd.f32 0.0, %v1116
    %1118 = vdwg.mxu0
    %1119 = vmatpush.msra.mxu0 0.0
    %1120 = vmatpush.msra.mxu0 0.0
    %1121 = vmatpush.msra.mxu0 0.0
    %1122 = vmatpush.msra.mxu0 0.0
    %1123 = vmatpush.msra.mxu0 0.0
    %1124 = vmatpush.msra.mxu0 0.0
    %1125 = vmatpush.msra.mxu0 0.0
    %1126 = vmatpush.msra.mxu0 0.0
    %1127 = vmatpush.msra.mxu0 0.0
    %1128 = vmatpush.msra.mxu0 0.0
    %1129 = vmatpush.msra.mxu0 0.0
    %1130 = vmatpush.msra.mxu0 0.0
    %1131 = vmatpush.msra.mxu0 0.0
    %1132 = vmatpush.msra.mxu0 0.0
    %1133 = vmatpush.msra.mxu0 0.0
    %1134 = vmatpush.msra.mxu0 %v622
    %1135 = vmatmul.f32.gmra.mxu0 %v1017
    %v1136 = vpop.f32.mrf.mxu0
    %v1137 = vadd.f32 %v1117, %v1136
    %1138 = vdwg.mxu0
    %1139 = vmatpush.msra.mxu0 %v615
    %1140 = vmatpush.msra.mxu0 %v607
    %1141 = vmatpush.msra.mxu0 %v599
    %1142 = vmatpush.msra.mxu0 %v591
    %1143 = vmatpush.msra.mxu0 %v583
    %1144 = vmatpush.msra.mxu0 %v575
    %1145 = vmatpush.msra.mxu0 %v567
    %1146 = vmatpush.msra.mxu0 %v559
    %1147 = vmatpush.msra.mxu0 %v551
    %1148 = vmatpush.msra.mxu0 %v543
    %1149 = vmatpush.msra.mxu0 %v535
    %1150 = vmatpush.msra.mxu0 %v527
    %1151 = vmatpush.msra.mxu0 %v519
    %1152 = vmatpush.msra.mxu0 %v511
    %1153 = vmatpush.msra.mxu0 %v503
    %1154 = vmatpush.msra.mxu0 %v495
    %1155 = vmatmul.f32.gmra.mxu0 %v1014
    %v1156 = vpop.f32.mrf.mxu0
    %v1157 = vadd.f32 0.0, %v1156
    %1158 = vdwg.mxu0
    %1159 = vmatpush.msra.mxu0 0.0
    %1160 = vmatpush.msra.mxu0 0.0
    %1161 = vmatpush.msra.mxu0 0.0
    %1162 = vmatpush.msra.mxu0 0.0
    %1163 = vmatpush.msra.mxu0 0.0
    %1164 = vmatpush.msra.mxu0 0.0
    %1165 = vmatpush.msra.mxu0 0.0
    %1166 = vmatpush.msra.mxu0 0.0
    %1167 = vmatpush.msra.mxu0 0.0
    %1168 = vmatpush.msra.mxu0 0.0
    %1169 = vmatpush.msra.mxu0 0.0
    %1170 = vmatpush.msra.mxu0 0.0
    %1171 = vmatpush.msra.mxu0 0.0
    %1172 = vmatpush.msra.mxu0 0.0
    %1173 = vmatpush.msra.mxu0 0.0
    %1174 = vmatpush.msra.mxu0 %v623
    %1175 = vmatmul.f32.gmra.mxu0 %v1017
    %v1176 = vpop.f32.mrf.mxu0
    %v1177 = vadd.f32 %v1157, %v1176
    %1178 = vdwg.mxu0
    %1179 = vmatpush.msra.mxu0 %v616
    %1180 = vmatpush.msra.mxu0 %v608
    %1181 = vmatpush.msra.mxu0 %v600
    %1182 = vmatpush.msra.mxu0 %v592
    %1183 = vmatpush.msra.mxu0 %v584
    %1184 = vmatpush.msra.mxu0 %v576
    %1185 = vmatpush.msra.mxu0 %v568
    %1186 = vmatpush.msra.mxu0 %v560
    %1187 = vmatpush.msra.mxu0 %v552
    %1188 = vmatpush.msra.mxu0 %v544
    %1189 = vmatpush.msra.mxu0 %v536
    %1190 = vmatpush.msra.mxu0 %v528
    %1191 = vmatpush.msra.mxu0 %v520
    %1192 = vmatpush.msra.mxu0 %v512
    %1193 = vmatpush.msra.mxu0 %v504
    %1194 = vmatpush.msra.mxu0 %v496
    %1195 = vmatmul.f32.gmra.mxu0 %v1014
    %v1196 = vpop.f32.mrf.mxu0
    %v1197 = vadd.f32 0.0, %v1196
    %1198 = vdwg.mxu0
    %1199 = vmatpush.msra.mxu0 0.0
    %1200 = vmatpush.msra.mxu0 0.0
    %1201 = vmatpush.msra.mxu0 0.0
    %1202 = vmatpush.msra.mxu0 0.0
    %1203 = vmatpush.msra.mxu0 0.0
    %1204 = vmatpush.msra.mxu0 0.0
    %1205 = vmatpush.msra.mxu0 0.0
    %1206 = vmatpush.msra.mxu0 0.0
    %1207 = vmatpush.msra.mxu0 0.0
    %1208 = vmatpush.msra.mxu0 0.0
    %1209 = vmatpush.msra.mxu0 0.0
    %1210 = vmatpush.msra.mxu0 0.0
    %1211 = vmatpush.msra.mxu0 0.0
    %1212 = vmatpush.msra.mxu0 0.0
    %1213 = vmatpush.msra.mxu0 0.0
    %1214 = vmatpush.msra.mxu0 %v624
    %1215 = vmatmul.f32.gmra.mxu0 %v1017
    %v1216 = vpop.f32.mrf.mxu0
    %v1217 = vadd.f32 %v1197, %v1216
    %1218 = vdwg.mxu0
    %1219 = vmatpush.msra.mxu0 %v617
    %1220 = vmatpush.msra.mxu0 %v609
    %1221 = vmatpush.msra.mxu0 %v601
    %1222 = vmatpush.msra.mxu0 %v593
    %1223 = vmatpush.msra.mxu0 %v585
    %1224 = vmatpush.msra.mxu0 %v577
    %1225 = vmatpush.msra.mxu0 %v569
    %1226 = vmatpush.msra.mxu0 %v561
    %1227 = vmatpush.msra.mxu0 %v553
    %1228 = vmatpush.msra.mxu0 %v545
    %1229 = vmatpush.msra.mxu0 %v537
    %1230 = vmatpush.msra.mxu0 %v529
    %1231 = vmatpush.msra.mxu0 %v521
    %1232 = vmatpush.msra.mxu0 %v513
    %1233 = vmatpush.msra.mxu0 %v505
    %1234 = vmatpush.msra.mxu0 %v497
    %1235 = vmatmul.f32.gmra.mxu0 %v1014
    %v1236 = vpop.f32.mrf.mxu0
    %v1237 = vadd.f32 0.0, %v1236
    %1238 = vdwg.mxu0
    %1239 = vmatpush.msra.mxu0 0.0
    %1240 = vmatpush.msra.mxu0 0.0
    %1241 = vmatpush.msra.mxu0 0.0
    %1242 = vmatpush.msra.mxu0 0.0
    %1243 = vmatpush.msra.mxu0 0.0
    %1244 = vmatpush.msra.mxu0 0.0
    %1245 = vmatpush.msra.mxu0 0.0
    %1246 = vmatpush.msra.mxu0 0.0
    %1247 = vmatpush.msra.mxu0 0.0
    %1248 = vmatpush.msra.mxu0 0.0
    %1249 = vmatpush.msra.mxu0 0.0
    %1250 = vmatpush.msra.mxu0 0.0
    %1251 = vmatpush.msra.mxu0 0.0
    %1252 = vmatpush.msra.mxu0 0.0
    %1253 = vmatpush.msra.mxu0 0.0
    %1254 = vmatpush.msra.mxu0 %v625
    %1255 = vmatmul.f32.gmra.mxu0 %v1017
    %v1256 = vpop.f32.mrf.mxu0
    %v1257 = vadd.f32 %v1237, %v1256
    %1258 = vdwg.mxu0
    %1259 = vmatpush.msra.mxu0 %v618
    %1260 = vmatpush.msra.mxu0 %v610
    %1261 = vmatpush.msra.mxu0 %v602
    %1262 = vmatpush.msra.mxu0 %v594
    %1263 = vmatpush.msra.mxu0 %v586
    %1264 = vmatpush.msra.mxu0 %v578
    %1265 = vmatpush.msra.mxu0 %v570
    %1266 = vmatpush.msra.mxu0 %v562
    %1267 = vmatpush.msra.mxu0 %v554
    %1268 = vmatpush.msra.mxu0 %v546
    %1269 = vmatpush.msra.mxu0 %v538
    %1270 = vmatpush.msra.mxu0 %v530
    %1271 = vmatpush.msra.mxu0 %v522
    %1272 = vmatpush.msra.mxu0 %v514
    %1273 = vmatpush.msra.mxu0 %v506
    %1274 = vmatpush.msra.mxu0 %v498
    %1275 = vmatmul.f32.gmra.mxu0 %v1014
    %v1276 = vpop.f32.mrf.mxu0
    %v1277 = vadd.f32 0.0, %v1276
    %1278 = vdwg.mxu0
    %1279 = vmatpush.msra.mxu0 0.0
    %1280 = vmatpush.msra.mxu0 0.0
    %1281 = vmatpush.msra.mxu0 0.0
    %1282 = vmatpush.msra.mxu0 0.0
    %1283 = vmatpush.msra.mxu0 0.0
    %1284 = vmatpush.msra.mxu0 0.0
    %1285 = vmatpush.msra.mxu0 0.0
    %1286 = vmatpush.msra.mxu0 0.0
    %1287 = vmatpush.msra.mxu0 0.0
    %1288 = vmatpush.msra.mxu0 0.0
    %1289 = vmatpush.msra.mxu0 0.0
    %1290 = vmatpush.msra.mxu0 0.0
    %1291 = vmatpush.msra.mxu0 0.0
    %1292 = vmatpush.msra.mxu0 0.0
    %1293 = vmatpush.msra.mxu0 0.0
    %1294 = vmatpush.msra.mxu0 %v626
    %1295 = vmatmul.f32.gmra.mxu0 %v1017
    %v1296 = vpop.f32.mrf.mxu0
    %v1297 = vadd.f32 %v1277, %v1296
    %1298 = vdwg.mxu0
    %1299 = vmatpush.msra.mxu0 %v619
    %1300 = vmatpush.msra.mxu0 %v611
    %1301 = vmatpush.msra.mxu0 %v603
    %1302 = vmatpush.msra.mxu0 %v595
    %1303 = vmatpush.msra.mxu0 %v587
    %1304 = vmatpush.msra.mxu0 %v579
    %1305 = vmatpush.msra.mxu0 %v571
    %1306 = vmatpush.msra.mxu0 %v563
    %1307 = vmatpush.msra.mxu0 %v555
    %1308 = vmatpush.msra.mxu0 %v547
    %1309 = vmatpush.msra.mxu0 %v539
    %1310 = vmatpush.msra.mxu0 %v531
    %1311 = vmatpush.msra.mxu0 %v523
    %1312 = vmatpush.msra.mxu0 %v515
    %1313 = vmatpush.msra.mxu0 %v507
    %1314 = vmatpush.msra.mxu0 %v499
    %1315 = vmatmul.f32.gmra.mxu0 %v1014
    %v1316 = vpop.f32.mrf.mxu0
    %v1317 = vadd.f32 0.0, %v1316
    %1318 = vdwg.mxu0
    %1319 = vmatpush.msra.mxu0 0.0
    %1320 = vmatpush.msra.mxu0 0.0
    %1321 = vmatpush.msra.mxu0 0.0
    %1322 = vmatpush.msra.mxu0 0.0
    %1323 = vmatpush.msra.mxu0 0.0
    %1324 = vmatpush.msra.mxu0 0.0
    %1325 = vmatpush.msra.mxu0 0.0
    %1326 = vmatpush.msra.mxu0 0.0
    %1327 = vmatpush.msra.mxu0 0.0
    %1328 = vmatpush.msra.mxu0 0.0
    %1329 = vmatpush.msra.mxu0 0.0
    %1330 = vmatpush.msra.mxu0 0.0
    %1331 = vmatpush.msra.mxu0 0.0
    %1332 = vmatpush.msra.mxu0 0.0
    %1333 = vmatpush.msra.mxu0 0.0
    %1334 = vmatpush.msra.mxu0 %v627
    %1335 = vmatmul.f32.gmra.mxu0 %v1017
    %v1336 = vpop.f32.mrf.mxu0
    %v1337 = vadd.f32 %v1317, %v1336
    %1338 = vdwg.mxu0
    %v1339 = vmul.f32 %v1137, %v1217
    %v1340 = vmul.f32 %v1177, %v1257
    %s1341 = scalar_lea.vmem %s7, 2
    %v1342 = vld [vmem:[%s1341] sm:$0x3]
    %s1343 = scalar_lea.vmem %s8, 2
    %v1344 = vld [vmem:[%s1343] sm:$0x3]
    %v1345 = vmul.f32 %v1057, %v1297
    %v1346 = vmul.f32 %v1097, %v1337
    %v1347 = vld [vmem:[#allocation4] sm:$0xff]
    %1349 = vst [vmem:[#allocation1] ss:$2 sm:$0xff] %v1347
    %v1350 = vld.sshfl [vmem:[#allocation1] sm:$0xff pattern:$0x75316420]
    %v1351 = vld.sshfl [vmem:[#allocation1 + $0x8] sm:$0xff pattern:$0x75316420]
    %v1354 = vmul.f32 %v1345, %v1350
    %v1355 = vmul.f32 %v1346, %v1351
    %v1357 = vperm.slane %v1342, 0
    %v1358 = vperm.slane %v1342, 1
    %v1361 = vmul.f32 %v1339, %v1357
    %v1362 = vmul.f32 %v1340, %v1358
    %v1363 = vadd.f32 %v1354, %v1361
    %v1364 = vadd.f32 %v1355, %v1362
    %v1365 = vld [vmem:[#allocation5] sm:$0xff]
    %1367 = vst [vmem:[#allocation1] ss:$2 sm:$0xff] %v1365
    %v1368 = vld.sshfl [vmem:[#allocation1] sm:$0xff pattern:$0x75316420]
    %v1369 = vld.sshfl [vmem:[#allocation1 + $0x8] sm:$0xff pattern:$0x75316420]
    %v1372 = vmul.f32 %v1345, %v1368
    %v1373 = vmul.f32 %v1346, %v1369
    %v1375 = vperm.slane %v1344, 0
    %v1376 = vperm.slane %v1344, 1
    %v1379 = vmul.f32 %v1339, %v1375
    %v1380 = vmul.f32 %v1340, %v1376
    %v1381 = vadd.f32 %v1372, %v1379
    %v1382 = vadd.f32 %v1373, %v1380
    %v1383 = vmul.f32 %v1363, %v1363
    %v1384 = vmul.f32 %v1364, %v1364
    %v1385 = vmul.f32 %v1381, %v1381
    %v1386 = vmul.f32 %v1382, %v1382
    %v1387 = vadd.f32 %v1383, %v1385
    %v1388 = vadd.f32 %v1384, %v1386
    %1389 = vmatpush.msra.mxu0 %v643
    %1390 = vmatpush.msra.mxu0 %v642
    %1391 = vmatpush.msra.mxu0 %v641
    %1392 = vmatpush.msra.mxu0 %v640
    %1393 = vmatpush.msra.mxu0 %v639
    %1394 = vmatpush.msra.mxu0 %v638
    %1395 = vmatpush.msra.mxu0 %v637
    %1396 = vmatpush.msra.mxu0 %v636
    %1397 = vmatpush.msra.mxu0 %v635
    %1398 = vmatpush.msra.mxu0 %v634
    %1399 = vmatpush.msra.mxu0 %v633
    %1400 = vmatpush.msra.mxu0 %v632
    %1401 = vmatpush.msra.mxu0 %v631
    %1402 = vmatpush.msra.mxu0 %v630
    %1403 = vmatpush.msra.mxu0 %v629
    %1404 = vmatpush.msra.mxu0 %v628
    %1405 = vmatmul.f32.gmra.mxu0 %v1387
    %v1406 = vpop.f32.mrf.mxu0
    %v1407 = vadd.f32 %v879, %v1406
    %1408 = vdwg.mxu0
    %1409 = vmatpush.msra.mxu0 %v659
    %1410 = vmatpush.msra.mxu0 %v658
    %1411 = vmatpush.msra.mxu0 %v657
    %1412 = vmatpush.msra.mxu0 %v656
    %1413 = vmatpush.msra.mxu0 %v655
    %1414 = vmatpush.msra.mxu0 %v654
    %1415 = vmatpush.msra.mxu0 %v653
    %1416 = vmatpush.msra.mxu0 %v652
    %1417 = vmatpush.msra.mxu0 %v651
    %1418 = vmatpush.msra.mxu0 %v650
    %1419 = vmatpush.msra.mxu0 %v649
    %1420 = vmatpush.msra.mxu0 %v648
    %1421 = vmatpush.msra.mxu0 %v647
    %1422 = vmatpush.msra.mxu0 %v646
    %1423 = vmatpush.msra.mxu0 %v645
    %1424 = vmatpush.msra.mxu0 %v644
    %1425 = vmatmul.f32.gmra.mxu0 %v1388
    %v1426 = vpop.f32.mrf.mxu0
    %v1427 = vadd.f32 %v1407, %v1426
    %1428 = vdwg.mxu0
    %v1429 = vtanh.pop %v1427
    %1431 = vrot.lane.b32.xlu0 %v1429, 96
    %v1432 = vpop.permute.xlu0 %1431
    %v1434 = vmul.f32 %v1014, %v1432
    %1436 = vrot.lane.b32.xlu0 %v1434, 32
    %v1437 = vpop.permute.xlu0 %1436
    %1439 = vst.msk [vmem:[#allocation3] sm:$0xf] %vm931, %v1437
    %v1442 = vrot.slane %v1364, 4
    %v1443 = vsel %vm114, %v1363, %v1442
    %1445 = vst [vmem:[#allocation4] sm:$0xff] %v1443
    %v1448 = vrot.slane %v1382, 4
    %v1449 = vsel %vm114, %v1381, %v1448
    %1451 = vst [vmem:[#allocation5] sm:$0xff] %v1449
    %v1452 = vld [vmem:[%s222] sm:$0xff]
    %v1453 = vld [vmem:[#allocation3] sm:$0xf]
    %v1455 = vsel %vm947, %v1453, 0
    %1457 = vmatpush.msra.mxu0 0.0
    %1458 = vmatpush.msra.mxu0 0.0
    %1459 = vmatpush.msra.mxu0 0.0
    %1460 = vmatpush.msra.mxu0 0.0
    %1461 = vmatpush.msra.mxu0 0.0
    %1462 = vmatpush.msra.mxu0 0.0
    %1463 = vmatpush.msra.mxu0 0.0
    %1464 = vmatpush.msra.mxu0 0.0
    %1465 = vmatpush.msra.mxu0 0.0
    %1466 = vmatpush.msra.mxu0 0.0
    %1467 = vmatpush.msra.mxu0 0.0
    %1468 = vmatpush.msra.mxu0 0.0
    %1469 = vmatpush.msra.mxu0 %v490
    %1470 = vmatpush.msra.mxu0 %v488
    %1471 = vmatpush.msra.mxu0 %v486
    %1472 = vmatpush.msra.mxu0 %v484
    %1473 = vmatmul.f32.gmra.mxu0 %v1455
    %v1474 = vpop.f32.mrf.mxu0
    %v1475 = vadd.f32 0.0, %v1474
    %1476 = vdwg.mxu0
    %1477 = vmatpush.msra.mxu0 0.0
    %1478 = vmatpush.msra.mxu0 0.0
    %1479 = vmatpush.msra.mxu0 0.0
    %1480 = vmatpush.msra.mxu0 0.0
    %1481 = vmatpush.msra.mxu0 0.0
    %1482 = vmatpush.msra.mxu0 0.0
    %1483 = vmatpush.msra.mxu0 0.0
    %1484 = vmatpush.msra.mxu0 0.0
    %1485 = vmatpush.msra.mxu0 0.0
    %1486 = vmatpush.msra.mxu0 0.0
    %1487 = vmatpush.msra.mxu0 0.0
    %1488 = vmatpush.msra.mxu0 0.0
    %1489 = vmatpush.msra.mxu0 %v491
    %1490 = vmatpush.msra.mxu0 %v489
    %1491 = vmatpush.msra.mxu0 %v487
    %1492 = vmatpush.msra.mxu0 %v485
    %1493 = vmatmul.f32.gmra.mxu0 %v1455
    %v1494 = vpop.f32.mrf.mxu0
    %v1495 = vadd.f32 0.0, %v1494
    %1496 = vdwg.mxu0
    %v1499 = vrot.slane %v1495, 4
    %v1500 = vsel %vm114, %v1475, %v1499
    %v1502 = vadd.f32 %v1452, %v1500
    %v1503 = vtanh.pop %v1502
    %v1504 = vmul.f32 %v1502, 0.16666667
    %v1505 = vadd.f32 %v1504, 0.5
    %v1506 = vmax.f32 %v1505, 0.0
    %v1507 = vmin.f32 %v1506, 1.0
    %1509 = vst [vmem:[#allocation1] ss:$2 sm:$0xff] %v1503
    %v1510 = vld.sshfl [vmem:[#allocation1] sm:$0xff pattern:$0x75316420]
    %v1511 = vld.sshfl [vmem:[#allocation1 + $0x8] sm:$0xff pattern:$0x75316420]
    %1515 = vst [vmem:[#allocation1] ss:$2 sm:$0xff] %v1507
    %v1516 = vld.sshfl [vmem:[#allocation1] sm:$0xff pattern:$0x75316420]
    %v1517 = vld.sshfl [vmem:[#allocation1 + $0x8] sm:$0xff pattern:$0x75316420]
    %v1520 = vsel %vm668, %v1510, %v1516
    %v1521 = vsel %vm669, %v1511, %v1517
    %v1523 = vsel %vm690, %v1521, 0
    %1525 = vmatpush.msra.mxu0 %v612
    %1526 = vmatpush.msra.mxu0 %v604
    %1527 = vmatpush.msra.mxu0 %v596
    %1528 = vmatpush.msra.mxu0 %v588
    %1529 = vmatpush.msra.mxu0 %v580
    %1530 = vmatpush.msra.mxu0 %v572
    %1531 = vmatpush.msra.mxu0 %v564
    %1532 = vmatpush.msra.mxu0 %v556
    %1533 = vmatpush.msra.mxu0 %v548
    %1534 = vmatpush.msra.mxu0 %v540
    %1535 = vmatpush.msra.mxu0 %v532
    %1536 = vmatpush.msra.mxu0 %v524
    %1537 = vmatpush.msra.mxu0 %v516
    %1538 = vmatpush.msra.mxu0 %v508
    %1539 = vmatpush.msra.mxu0 %v500
    %1540 = vmatpush.msra.mxu0 %v492
    %1541 = vmatmul.f32.gmra.mxu0 %v1520
    %v1542 = vpop.f32.mrf.mxu0
    %v1543 = vadd.f32 0.0, %v1542
    %1544 = vdwg.mxu0
    %1545 = vmatpush.msra.mxu0 0.0
    %1546 = vmatpush.msra.mxu0 0.0
    %1547 = vmatpush.msra.mxu0 0.0
    %1548 = vmatpush.msra.mxu0 0.0
    %1549 = vmatpush.msra.mxu0 0.0
    %1550 = vmatpush.msra.mxu0 0.0
    %1551 = vmatpush.msra.mxu0 0.0
    %1552 = vmatpush.msra.mxu0 0.0
    %1553 = vmatpush.msra.mxu0 0.0
    %1554 = vmatpush.msra.mxu0 0.0
    %1555 = vmatpush.msra.mxu0 0.0
    %1556 = vmatpush.msra.mxu0 0.0
    %1557 = vmatpush.msra.mxu0 0.0
    %1558 = vmatpush.msra.mxu0 0.0
    %1559 = vmatpush.msra.mxu0 0.0
    %1560 = vmatpush.msra.mxu0 %v620
    %1561 = vmatmul.f32.gmra.mxu0 %v1523
    %v1562 = vpop.f32.mrf.mxu0
    %v1563 = vadd.f32 %v1543, %v1562
    %1564 = vdwg.mxu0
    %1565 = vmatpush.msra.mxu0 %v613
    %1566 = vmatpush.msra.mxu0 %v605
    %1567 = vmatpush.msra.mxu0 %v597
    %1568 = vmatpush.msra.mxu0 %v589
    %1569 = vmatpush.msra.mxu0 %v581
    %1570 = vmatpush.msra.mxu0 %v573
    %1571 = vmatpush.msra.mxu0 %v565
    %1572 = vmatpush.msra.mxu0 %v557
    %1573 = vmatpush.msra.mxu0 %v549
    %1574 = vmatpush.msra.mxu0 %v541
    %1575 = vmatpush.msra.mxu0 %v533
    %1576 = vmatpush.msra.mxu0 %v525
    %1577 = vmatpush.msra.mxu0 %v517
    %1578 = vmatpush.msra.mxu0 %v509
    %1579 = vmatpush.msra.mxu0 %v501
    %1580 = vmatpush.msra.mxu0 %v493
    %1581 = vmatmul.f32.gmra.mxu0 %v1520
    %v1582 = vpop.f32.mrf.mxu0
    %v1583 = vadd.f32 0.0, %v1582
    %1584 = vdwg.mxu0
    %1585 = vmatpush.msra.mxu0 0.0
    %1586 = vmatpush.msra.mxu0 0.0
    %1587 = vmatpush.msra.mxu0 0.0
    %1588 = vmatpush.msra.mxu0 0.0
    %1589 = vmatpush.msra.mxu0 0.0
    %1590 = vmatpush.msra.mxu0 0.0
    %1591 = vmatpush.msra.mxu0 0.0
    %1592 = vmatpush.msra.mxu0 0.0
    %1593 = vmatpush.msra.mxu0 0.0
    %1594 = vmatpush.msra.mxu0 0.0
    %1595 = vmatpush.msra.mxu0 0.0
    %1596 = vmatpush.msra.mxu0 0.0
    %1597 = vmatpush.msra.mxu0 0.0
    %1598 = vmatpush.msra.mxu0 0.0
    %1599 = vmatpush.msra.mxu0 0.0
    %1600 = vmatpush.msra.mxu0 %v621
    %1601 = vmatmul.f32.gmra.mxu0 %v1523
    %v1602 = vpop.f32.mrf.mxu0
    %v1603 = vadd.f32 %v1583, %v1602
    %1604 = vdwg.mxu0
    %1605 = vmatpush.msra.mxu0 %v614
    %1606 = vmatpush.msra.mxu0 %v606
    %1607 = vmatpush.msra.mxu0 %v598
    %1608 = vmatpush.msra.mxu0 %v590
    %1609 = vmatpush.msra.mxu0 %v582
    %1610 = vmatpush.msra.mxu0 %v574
    %1611 = vmatpush.msra.mxu0 %v566
    %1612 = vmatpush.msra.mxu0 %v558
    %1613 = vmatpush.msra.mxu0 %v550
    %1614 = vmatpush.msra.mxu0 %v542
    %1615 = vmatpush.msra.mxu0 %v534
    %1616 = vmatpush.msra.mxu0 %v526
    %1617 = vmatpush.msra.mxu0 %v518
    %1618 = vmatpush.msra.mxu0 %v510
    %1619 = vmatpush.msra.mxu0 %v502
    %1620 = vmatpush.msra.mxu0 %v494
    %1621 = vmatmul.f32.gmra.mxu0 %v1520
    %v1622 = vpop.f32.mrf.mxu0
    %v1623 = vadd.f32 0.0, %v1622
    %1624 = vdwg.mxu0
    %1625 = vmatpush.msra.mxu0 0.0
    %1626 = vmatpush.msra.mxu0 0.0
    %1627 = vmatpush.msra.mxu0 0.0
    %1628 = vmatpush.msra.mxu0 0.0
    %1629 = vmatpush.msra.mxu0 0.0
    %1630 = vmatpush.msra.mxu0 0.0
    %1631 = vmatpush.msra.mxu0 0.0
    %1632 = vmatpush.msra.mxu0 0.0
    %1633 = vmatpush.msra.mxu0 0.0
    %1634 = vmatpush.msra.mxu0 0.0
    %1635 = vmatpush.msra.mxu0 0.0
    %1636 = vmatpush.msra.mxu0 0.0
    %1637 = vmatpush.msra.mxu0 0.0
    %1638 = vmatpush.msra.mxu0 0.0
    %1639 = vmatpush.msra.mxu0 0.0
    %1640 = vmatpush.msra.mxu0 %v622
    %1641 = vmatmul.f32.gmra.mxu0 %v1523
    %v1642 = vpop.f32.mrf.mxu0
    %v1643 = vadd.f32 %v1623, %v1642
    %1644 = vdwg.mxu0
    %1645 = vmatpush.msra.mxu0 %v615
    %1646 = vmatpush.msra.mxu0 %v607
    %1647 = vmatpush.msra.mxu0 %v599
    %1648 = vmatpush.msra.mxu0 %v591
    %1649 = vmatpush.msra.mxu0 %v583
    %1650 = vmatpush.msra.mxu0 %v575
    %1651 = vmatpush.msra.mxu0 %v567
    %1652 = vmatpush.msra.mxu0 %v559
    %1653 = vmatpush.msra.mxu0 %v551
    %1654 = vmatpush.msra.mxu0 %v543
    %1655 = vmatpush.msra.mxu0 %v535
    %1656 = vmatpush.msra.mxu0 %v527
    %1657 = vmatpush.msra.mxu0 %v519
    %1658 = vmatpush.msra.mxu0 %v511
    %1659 = vmatpush.msra.mxu0 %v503
    %1660 = vmatpush.msra.mxu0 %v495
    %1661 = vmatmul.f32.gmra.mxu0 %v1520
    %v1662 = vpop.f32.mrf.mxu0
    %v1663 = vadd.f32 0.0, %v1662
    %1664 = vdwg.mxu0
    %1665 = vmatpush.msra.mxu0 0.0
    %1666 = vmatpush.msra.mxu0 0.0
    %1667 = vmatpush.msra.mxu0 0.0
    %1668 = vmatpush.msra.mxu0 0.0
    %1669 = vmatpush.msra.mxu0 0.0
    %1670 = vmatpush.msra.mxu0 0.0
    %1671 = vmatpush.msra.mxu0 0.0
    %1672 = vmatpush.msra.mxu0 0.0
    %1673 = vmatpush.msra.mxu0 0.0
    %1674 = vmatpush.msra.mxu0 0.0
    %1675 = vmatpush.msra.mxu0 0.0
    %1676 = vmatpush.msra.mxu0 0.0
    %1677 = vmatpush.msra.mxu0 0.0
    %1678 = vmatpush.msra.mxu0 0.0
    %1679 = vmatpush.msra.mxu0 0.0
    %1680 = vmatpush.msra.mxu0 %v623
    %1681 = vmatmul.f32.gmra.mxu0 %v1523
    %v1682 = vpop.f32.mrf.mxu0
    %v1683 = vadd.f32 %v1663, %v1682
    %1684 = vdwg.mxu0
    %1685 = vmatpush.msra.mxu0 %v616
    %1686 = vmatpush.msra.mxu0 %v608
    %1687 = vmatpush.msra.mxu0 %v600
    %1688 = vmatpush.msra.mxu0 %v592
    %1689 = vmatpush.msra.mxu0 %v584
    %1690 = vmatpush.msra.mxu0 %v576
    %1691 = vmatpush.msra.mxu0 %v568
    %1692 = vmatpush.msra.mxu0 %v560
    %1693 = vmatpush.msra.mxu0 %v552
    %1694 = vmatpush.msra.mxu0 %v544
    %1695 = vmatpush.msra.mxu0 %v536
    %1696 = vmatpush.msra.mxu0 %v528
    %1697 = vmatpush.msra.mxu0 %v520
    %1698 = vmatpush.msra.mxu0 %v512
    %1699 = vmatpush.msra.mxu0 %v504
    %1700 = vmatpush.msra.mxu0 %v496
    %1701 = vmatmul.f32.gmra.mxu0 %v1520
    %v1702 = vpop.f32.mrf.mxu0
    %v1703 = vadd.f32 0.0, %v1702
    %1704 = vdwg.mxu0
    %1705 = vmatpush.msra.mxu0 0.0
    %1706 = vmatpush.msra.mxu0 0.0
    %1707 = vmatpush.msra.mxu0 0.0
    %1708 = vmatpush.msra.mxu0 0.0
    %1709 = vmatpush.msra.mxu0 0.0
    %1710 = vmatpush.msra.mxu0 0.0
    %1711 = vmatpush.msra.mxu0 0.0
    %1712 = vmatpush.msra.mxu0 0.0
    %1713 = vmatpush.msra.mxu0 0.0
    %1714 = vmatpush.msra.mxu0 0.0
    %1715 = vmatpush.msra.mxu0 0.0
    %1716 = vmatpush.msra.mxu0 0.0
    %1717 = vmatpush.msra.mxu0 0.0
    %1718 = vmatpush.msra.mxu0 0.0
    %1719 = vmatpush.msra.mxu0 0.0
    %1720 = vmatpush.msra.mxu0 %v624
    %1721 = vmatmul.f32.gmra.mxu0 %v1523
    %v1722 = vpop.f32.mrf.mxu0
    %v1723 = vadd.f32 %v1703, %v1722
    %1724 = vdwg.mxu0
    %1725 = vmatpush.msra.mxu0 %v617
    %1726 = vmatpush.msra.mxu0 %v609
    %1727 = vmatpush.msra.mxu0 %v601
    %1728 = vmatpush.msra.mxu0 %v593
    %1729 = vmatpush.msra.mxu0 %v585
    %1730 = vmatpush.msra.mxu0 %v577
    %1731 = vmatpush.msra.mxu0 %v569
    %1732 = vmatpush.msra.mxu0 %v561
    %1733 = vmatpush.msra.mxu0 %v553
    %1734 = vmatpush.msra.mxu0 %v545
    %1735 = vmatpush.msra.mxu0 %v537
    %1736 = vmatpush.msra.mxu0 %v529
    %1737 = vmatpush.msra.mxu0 %v521
    %1738 = vmatpush.msra.mxu0 %v513
    %1739 = vmatpush.msra.mxu0 %v505
    %1740 = vmatpush.msra.mxu0 %v497
    %1741 = vmatmul.f32.gmra.mxu0 %v1520
    %v1742 = vpop.f32.mrf.mxu0
    %v1743 = vadd.f32 0.0, %v1742
    %1744 = vdwg.mxu0
    %1745 = vmatpush.msra.mxu0 0.0
    %1746 = vmatpush.msra.mxu0 0.0
    %1747 = vmatpush.msra.mxu0 0.0
    %1748 = vmatpush.msra.mxu0 0.0
    %1749 = vmatpush.msra.mxu0 0.0
    %1750 = vmatpush.msra.mxu0 0.0
    %1751 = vmatpush.msra.mxu0 0.0
    %1752 = vmatpush.msra.mxu0 0.0
    %1753 = vmatpush.msra.mxu0 0.0
    %1754 = vmatpush.msra.mxu0 0.0
    %1755 = vmatpush.msra.mxu0 0.0
    %1756 = vmatpush.msra.mxu0 0.0
    %1757 = vmatpush.msra.mxu0 0.0
    %1758 = vmatpush.msra.mxu0 0.0
    %1759 = vmatpush.msra.mxu0 0.0
    %1760 = vmatpush.msra.mxu0 %v625
    %1761 = vmatmul.f32.gmra.mxu0 %v1523
    %v1762 = vpop.f32.mrf.mxu0
    %v1763 = vadd.f32 %v1743, %v1762
    %1764 = vdwg.mxu0
    %1765 = vmatpush.msra.mxu0 %v618
    %1766 = vmatpush.msra.mxu0 %v610
    %1767 = vmatpush.msra.mxu0 %v602
    %1768 = vmatpush.msra.mxu0 %v594
    %1769 = vmatpush.msra.mxu0 %v586
    %1770 = vmatpush.msra.mxu0 %v578
    %1771 = vmatpush.msra.mxu0 %v570
    %1772 = vmatpush.msra.mxu0 %v562
    %1773 = vmatpush.msra.mxu0 %v554
    %1774 = vmatpush.msra.mxu0 %v546
    %1775 = vmatpush.msra.mxu0 %v538
    %1776 = vmatpush.msra.mxu0 %v530
    %1777 = vmatpush.msra.mxu0 %v522
    %1778 = vmatpush.msra.mxu0 %v514
    %1779 = vmatpush.msra.mxu0 %v506
    %1780 = vmatpush.msra.mxu0 %v498
    %1781 = vmatmul.f32.gmra.mxu0 %v1520
    %v1782 = vpop.f32.mrf.mxu0
    %v1783 = vadd.f32 0.0, %v1782
    %1784 = vdwg.mxu0
    %1785 = vmatpush.msra.mxu0 0.0
    %1786 = vmatpush.msra.mxu0 0.0
    %1787 = vmatpush.msra.mxu0 0.0
    %1788 = vmatpush.msra.mxu0 0.0
    %1789 = vmatpush.msra.mxu0 0.0
    %1790 = vmatpush.msra.mxu0 0.0
    %1791 = vmatpush.msra.mxu0 0.0
    %1792 = vmatpush.msra.mxu0 0.0
    %1793 = vmatpush.msra.mxu0 0.0
    %1794 = vmatpush.msra.mxu0 0.0
    %1795 = vmatpush.msra.mxu0 0.0
    %1796 = vmatpush.msra.mxu0 0.0
    %1797 = vmatpush.msra.mxu0 0.0
    %1798 = vmatpush.msra.mxu0 0.0
    %1799 = vmatpush.msra.mxu0 0.0
    %1800 = vmatpush.msra.mxu0 %v626
    %1801 = vmatmul.f32.gmra.mxu0 %v1523
    %v1802 = vpop.f32.mrf.mxu0
    %v1803 = vadd.f32 %v1783, %v1802
    %1804 = vdwg.mxu0
    %1805 = vmatpush.msra.mxu0 %v619
    %1806 = vmatpush.msra.mxu0 %v611
    %1807 = vmatpush.msra.mxu0 %v603
    %1808 = vmatpush.msra.mxu0 %v595
    %1809 = vmatpush.msra.mxu0 %v587
    %1810 = vmatpush.msra.mxu0 %v579
    %1811 = vmatpush.msra.mxu0 %v571
    %1812 = vmatpush.msra.mxu0 %v563
    %1813 = vmatpush.msra.mxu0 %v555
    %1814 = vmatpush.msra.mxu0 %v547
    %1815 = vmatpush.msra.mxu0 %v539
    %1816 = vmatpush.msra.mxu0 %v531
    %1817 = vmatpush.msra.mxu0 %v523
    %1818 = vmatpush.msra.mxu0 %v515
    %1819 = vmatpush.msra.mxu0 %v507
    %1820 = vmatpush.msra.mxu0 %v499
    %1821 = vmatmul.f32.gmra.mxu0 %v1520
    %v1822 = vpop.f32.mrf.mxu0
    %v1823 = vadd.f32 0.0, %v1822
    %1824 = vdwg.mxu0
    %1825 = vmatpush.msra.mxu0 0.0
    %1826 = vmatpush.msra.mxu0 0.0
    %1827 = vmatpush.msra.mxu0 0.0
    %1828 = vmatpush.msra.mxu0 0.0
    %1829 = vmatpush.msra.mxu0 0.0
    %1830 = vmatpush.msra.mxu0 0.0
    %1831 = vmatpush.msra.mxu0 0.0
    %1832 = vmatpush.msra.mxu0 0.0
    %1833 = vmatpush.msra.mxu0 0.0
    %1834 = vmatpush.msra.mxu0 0.0
    %1835 = vmatpush.msra.mxu0 0.0
    %1836 = vmatpush.msra.mxu0 0.0
    %1837 = vmatpush.msra.mxu0 0.0
    %1838 = vmatpush.msra.mxu0 0.0
    %1839 = vmatpush.msra.mxu0 0.0
    %1840 = vmatpush.msra.mxu0 %v627
    %1841 = vmatmul.f32.gmra.mxu0 %v1523
    %v1842 = vpop.f32.mrf.mxu0
    %v1843 = vadd.f32 %v1823, %v1842
    %1844 = vdwg.mxu0
    %v1845 = vmul.f32 %v1643, %v1723
    %v1846 = vmul.f32 %v1683, %v1763
    %s1847 = scalar_lea.vmem %s7, 4
    %v1848 = vld [vmem:[%s1847] sm:$0x3]
    %s1849 = scalar_lea.vmem %s8, 4
    %v1850 = vld [vmem:[%s1849] sm:$0x3]
    %v1851 = vmul.f32 %v1563, %v1803
    %v1852 = vmul.f32 %v1603, %v1843
    %v1853 = vld [vmem:[#allocation4] sm:$0xff]
    %1855 = vst [vmem:[#allocation1] ss:$2 sm:$0xff] %v1853
    %v1856 = vld.sshfl [vmem:[#allocation1] sm:$0xff pattern:$0x75316420]
    %v1857 = vld.sshfl [vmem:[#allocation1 + $0x8] sm:$0xff pattern:$0x75316420]
    %v1860 = vmul.f32 %v1851, %v1856
    %v1861 = vmul.f32 %v1852, %v1857
    %v1863 = vperm.slane %v1848, 0
    %v1864 = vperm.slane %v1848, 1
    %v1867 = vmul.f32 %v1845, %v1863
    %v1868 = vmul.f32 %v1846, %v1864
    %v1869 = vadd.f32 %v1860, %v1867
    %v1870 = vadd.f32 %v1861, %v1868
    %v1871 = vld [vmem:[#allocation5] sm:$0xff]
    %1873 = vst [vmem:[#allocation1] ss:$2 sm:$0xff] %v1871
    %v1874 = vld.sshfl [vmem:[#allocation1] sm:$0xff pattern:$0x75316420]
    %v1875 = vld.sshfl [vmem:[#allocation1 + $0x8] sm:$0xff pattern:$0x75316420]
    %v1878 = vmul.f32 %v1851, %v1874
    %v1879 = vmul.f32 %v1852, %v1875
    %v1881 = vperm.slane %v1850, 0
    %v1882 = vperm.slane %v1850, 1
    %v1885 = vmul.f32 %v1845, %v1881
    %v1886 = vmul.f32 %v1846, %v1882
    %v1887 = vadd.f32 %v1878, %v1885
    %v1888 = vadd.f32 %v1879, %v1886
    %v1889 = vmul.f32 %v1869, %v1869
    %v1890 = vmul.f32 %v1870, %v1870
    %v1891 = vmul.f32 %v1887, %v1887
    %v1892 = vmul.f32 %v1888, %v1888
    %v1893 = vadd.f32 %v1889, %v1891
    %v1894 = vadd.f32 %v1890, %v1892
    %1895 = vmatpush.msra.mxu0 %v643
    %1896 = vmatpush.msra.mxu0 %v642
    %1897 = vmatpush.msra.mxu0 %v641
    %1898 = vmatpush.msra.mxu0 %v640
    %1899 = vmatpush.msra.mxu0 %v639
    %1900 = vmatpush.msra.mxu0 %v638
    %1901 = vmatpush.msra.mxu0 %v637
    %1902 = vmatpush.msra.mxu0 %v636
    %1903 = vmatpush.msra.mxu0 %v635
    %1904 = vmatpush.msra.mxu0 %v634
    %1905 = vmatpush.msra.mxu0 %v633
    %1906 = vmatpush.msra.mxu0 %v632
    %1907 = vmatpush.msra.mxu0 %v631
    %1908 = vmatpush.msra.mxu0 %v630
    %1909 = vmatpush.msra.mxu0 %v629
    %1910 = vmatpush.msra.mxu0 %v628
    %1911 = vmatmul.f32.gmra.mxu0 %v1893
    %v1912 = vpop.f32.mrf.mxu0
    %v1913 = vadd.f32 %v879, %v1912
    %1914 = vdwg.mxu0
    %1915 = vmatpush.msra.mxu0 %v659
    %1916 = vmatpush.msra.mxu0 %v658
    %1917 = vmatpush.msra.mxu0 %v657
    %1918 = vmatpush.msra.mxu0 %v656
    %1919 = vmatpush.msra.mxu0 %v655
    %1920 = vmatpush.msra.mxu0 %v654
    %1921 = vmatpush.msra.mxu0 %v653
    %1922 = vmatpush.msra.mxu0 %v652
    %1923 = vmatpush.msra.mxu0 %v651
    %1924 = vmatpush.msra.mxu0 %v650
    %1925 = vmatpush.msra.mxu0 %v649
    %1926 = vmatpush.msra.mxu0 %v648
    %1927 = vmatpush.msra.mxu0 %v647
    %1928 = vmatpush.msra.mxu0 %v646
    %1929 = vmatpush.msra.mxu0 %v645
    %1930 = vmatpush.msra.mxu0 %v644
    %1931 = vmatmul.f32.gmra.mxu0 %v1894
    %v1932 = vpop.f32.mrf.mxu0
    %v1933 = vadd.f32 %v1913, %v1932
    %1934 = vdwg.mxu0
    %v1935 = vtanh.pop %v1933
    %1937 = vrot.lane.b32.xlu0 %v1935, 96
    %v1938 = vpop.permute.xlu0 %1937
    %v1940 = vmul.f32 %v1520, %v1938
    %1942 = vrot.lane.b32.xlu0 %v1940, 32
    %v1943 = vpop.permute.xlu0 %1942
    %1945 = vst.msk [vmem:[#allocation3] sm:$0xf] %vm931, %v1943
    %v1948 = vrot.slane %v1870, 4
    %v1949 = vsel %vm114, %v1869, %v1948
    %1951 = vst [vmem:[#allocation4] sm:$0xff] %v1949
    %v1954 = vrot.slane %v1888, 4
    %v1955 = vsel %vm114, %v1887, %v1954
    %1957 = vst [vmem:[#allocation5] sm:$0xff] %v1955
    %v1958 = vld [vmem:[%s274] sm:$0xff]
    %v1959 = vld [vmem:[#allocation3] sm:$0xf]
    %v1961 = vsel %vm947, %v1959, 0
    %1963 = vmatpush.msra.mxu0 0.0
    %1964 = vmatpush.msra.mxu0 0.0
    %1965 = vmatpush.msra.mxu0 0.0
    %1966 = vmatpush.msra.mxu0 0.0
    %1967 = vmatpush.msra.mxu0 0.0
    %1968 = vmatpush.msra.mxu0 0.0
    %1969 = vmatpush.msra.mxu0 0.0
    %1970 = vmatpush.msra.mxu0 0.0
    %1971 = vmatpush.msra.mxu0 0.0
    %1972 = vmatpush.msra.mxu0 0.0
    %1973 = vmatpush.msra.mxu0 0.0
    %1974 = vmatpush.msra.mxu0 0.0
    %1975 = vmatpush.msra.mxu0 %v490
    %1976 = vmatpush.msra.mxu0 %v488
    %1977 = vmatpush.msra.mxu0 %v486
    %1978 = vmatpush.msra.mxu0 %v484
    %1979 = vmatmul.f32.gmra.mxu0 %v1961
    %v1980 = vpop.f32.mrf.mxu0
    %v1981 = vadd.f32 0.0, %v1980
    %1982 = vdwg.mxu0
    %1983 = vmatpush.msra.mxu0 0.0
    %1984 = vmatpush.msra.mxu0 0.0
    %1985 = vmatpush.msra.mxu0 0.0
    %1986 = vmatpush.msra.mxu0 0.0
    %1987 = vmatpush.msra.mxu0 0.0
    %1988 = vmatpush.msra.mxu0 0.0
    %1989 = vmatpush.msra.mxu0 0.0
    %1990 = vmatpush.msra.mxu0 0.0
    %1991 = vmatpush.msra.mxu0 0.0
    %1992 = vmatpush.msra.mxu0 0.0
    %1993 = vmatpush.msra.mxu0 0.0
    %1994 = vmatpush.msra.mxu0 0.0
    %1995 = vmatpush.msra.mxu0 %v491
    %1996 = vmatpush.msra.mxu0 %v489
    %1997 = vmatpush.msra.mxu0 %v487
    %1998 = vmatpush.msra.mxu0 %v485
    %1999 = vmatmul.f32.gmra.mxu0 %v1961
    %v2000 = vpop.f32.mrf.mxu0
    %v2001 = vadd.f32 0.0, %v2000
    %2002 = vdwg.mxu0
    %v2005 = vrot.slane %v2001, 4
    %v2006 = vsel %vm114, %v1981, %v2005
    %v2008 = vadd.f32 %v1958, %v2006
    %v2009 = vtanh.pop %v2008
    %v2010 = vmul.f32 %v2008, 0.16666667
    %v2011 = vadd.f32 %v2010, 0.5
    %v2012 = vmax.f32 %v2011, 0.0
    %v2013 = vmin.f32 %v2012, 1.0
    %2015 = vst [vmem:[#allocation1] ss:$2 sm:$0xff] %v2009
    %v2016 = vld.sshfl [vmem:[#allocation1] sm:$0xff pattern:$0x75316420]
    %v2017 = vld.sshfl [vmem:[#allocation1 + $0x8] sm:$0xff pattern:$0x75316420]
    %2021 = vst [vmem:[#allocation1] ss:$2 sm:$0xff] %v2013
    %v2022 = vld.sshfl [vmem:[#allocation1] sm:$0xff pattern:$0x75316420]
    %v2023 = vld.sshfl [vmem:[#allocation1 + $0x8] sm:$0xff pattern:$0x75316420]
    %v2026 = vsel %vm668, %v2016, %v2022
    %v2027 = vsel %vm669, %v2017, %v2023
    %v2029 = vsel %vm690, %v2027, 0
    %2031 = vmatpush.msra.mxu0 %v612
    %2032 = vmatpush.msra.mxu0 %v604
    %2033 = vmatpush.msra.mxu0 %v596
    %2034 = vmatpush.msra.mxu0 %v588
    %2035 = vmatpush.msra.mxu0 %v580
    %2036 = vmatpush.msra.mxu0 %v572
    %2037 = vmatpush.msra.mxu0 %v564
    %2038 = vmatpush.msra.mxu0 %v556
    %2039 = vmatpush.msra.mxu0 %v548
    %2040 = vmatpush.msra.mxu0 %v540
    %2041 = vmatpush.msra.mxu0 %v532
    %2042 = vmatpush.msra.mxu0 %v524
    %2043 = vmatpush.msra.mxu0 %v516
    %2044 = vmatpush.msra.mxu0 %v508
    %2045 = vmatpush.msra.mxu0 %v500
    %2046 = vmatpush.msra.mxu0 %v492
    %2047 = vmatmul.f32.gmra.mxu0 %v2026
    %v2048 = vpop.f32.mrf.mxu0
    %v2049 = vadd.f32 0.0, %v2048
    %2050 = vdwg.mxu0
    %2051 = vmatpush.msra.mxu0 0.0
    %2052 = vmatpush.msra.mxu0 0.0
    %2053 = vmatpush.msra.mxu0 0.0
    %2054 = vmatpush.msra.mxu0 0.0
    %2055 = vmatpush.msra.mxu0 0.0
    %2056 = vmatpush.msra.mxu0 0.0
    %2057 = vmatpush.msra.mxu0 0.0
    %2058 = vmatpush.msra.mxu0 0.0
    %2059 = vmatpush.msra.mxu0 0.0
    %2060 = vmatpush.msra.mxu0 0.0
    %2061 = vmatpush.msra.mxu0 0.0
    %2062 = vmatpush.msra.mxu0 0.0
    %2063 = vmatpush.msra.mxu0 0.0
    %2064 = vmatpush.msra.mxu0 0.0
    %2065 = vmatpush.msra.mxu0 0.0
    %2066 = vmatpush.msra.mxu0 %v620
    %2067 = vmatmul.f32.gmra.mxu0 %v2029
    %v2068 = vpop.f32.mrf.mxu0
    %v2069 = vadd.f32 %v2049, %v2068
    %2070 = vdwg.mxu0
    %2071 = vmatpush.msra.mxu0 %v613
    %2072 = vmatpush.msra.mxu0 %v605
    %2073 = vmatpush.msra.mxu0 %v597
    %2074 = vmatpush.msra.mxu0 %v589
    %2075 = vmatpush.msra.mxu0 %v581
    %2076 = vmatpush.msra.mxu0 %v573
    %2077 = vmatpush.msra.mxu0 %v565
    %2078 = vmatpush.msra.mxu0 %v557
    %2079 = vmatpush.msra.mxu0 %v549
    %2080 = vmatpush.msra.mxu0 %v541
    %2081 = vmatpush.msra.mxu0 %v533
    %2082 = vmatpush.msra.mxu0 %v525
    %2083 = vmatpush.msra.mxu0 %v517
    %2084 = vmatpush.msra.mxu0 %v509
    %2085 = vmatpush.msra.mxu0 %v501
    %2086 = vmatpush.msra.mxu0 %v493
    %2087 = vmatmul.f32.gmra.mxu0 %v2026
    %v2088 = vpop.f32.mrf.mxu0
    %v2089 = vadd.f32 0.0, %v2088
    %2090 = vdwg.mxu0
    %2091 = vmatpush.msra.mxu0 0.0
    %2092 = vmatpush.msra.mxu0 0.0
    %2093 = vmatpush.msra.mxu0 0.0
    %2094 = vmatpush.msra.mxu0 0.0
    %2095 = vmatpush.msra.mxu0 0.0
    %2096 = vmatpush.msra.mxu0 0.0
    %2097 = vmatpush.msra.mxu0 0.0
    %2098 = vmatpush.msra.mxu0 0.0
    %2099 = vmatpush.msra.mxu0 0.0
    %2100 = vmatpush.msra.mxu0 0.0
    %2101 = vmatpush.msra.mxu0 0.0
    %2102 = vmatpush.msra.mxu0 0.0
    %2103 = vmatpush.msra.mxu0 0.0
    %2104 = vmatpush.msra.mxu0 0.0
    %2105 = vmatpush.msra.mxu0 0.0
    %2106 = vmatpush.msra.mxu0 %v621
    %2107 = vmatmul.f32.gmra.mxu0 %v2029
    %v2108 = vpop.f32.mrf.mxu0
    %v2109 = vadd.f32 %v2089, %v2108
    %2110 = vdwg.mxu0
    %2111 = vmatpush.msra.mxu0 %v614
    %2112 = vmatpush.msra.mxu0 %v606
    %2113 = vmatpush.msra.mxu0 %v598
    %2114 = vmatpush.msra.mxu0 %v590
    %2115 = vmatpush.msra.mxu0 %v582
    %2116 = vmatpush.msra.mxu0 %v574
    %2117 = vmatpush.msra.mxu0 %v566
    %2118 = vmatpush.msra.mxu0 %v558
    %2119 = vmatpush.msra.mxu0 %v550
    %2120 = vmatpush.msra.mxu0 %v542
    %2121 = vmatpush.msra.mxu0 %v534
    %2122 = vmatpush.msra.mxu0 %v526
    %2123 = vmatpush.msra.mxu0 %v518
    %2124 = vmatpush.msra.mxu0 %v510
    %2125 = vmatpush.msra.mxu0 %v502
    %2126 = vmatpush.msra.mxu0 %v494
    %2127 = vmatmul.f32.gmra.mxu0 %v2026
    %v2128 = vpop.f32.mrf.mxu0
    %v2129 = vadd.f32 0.0, %v2128
    %2130 = vdwg.mxu0
    %2131 = vmatpush.msra.mxu0 0.0
    %2132 = vmatpush.msra.mxu0 0.0
    %2133 = vmatpush.msra.mxu0 0.0
    %2134 = vmatpush.msra.mxu0 0.0
    %2135 = vmatpush.msra.mxu0 0.0
    %2136 = vmatpush.msra.mxu0 0.0
    %2137 = vmatpush.msra.mxu0 0.0
    %2138 = vmatpush.msra.mxu0 0.0
    %2139 = vmatpush.msra.mxu0 0.0
    %2140 = vmatpush.msra.mxu0 0.0
    %2141 = vmatpush.msra.mxu0 0.0
    %2142 = vmatpush.msra.mxu0 0.0
    %2143 = vmatpush.msra.mxu0 0.0
    %2144 = vmatpush.msra.mxu0 0.0
    %2145 = vmatpush.msra.mxu0 0.0
    %2146 = vmatpush.msra.mxu0 %v622
    %2147 = vmatmul.f32.gmra.mxu0 %v2029
    %v2148 = vpop.f32.mrf.mxu0
    %v2149 = vadd.f32 %v2129, %v2148
    %2150 = vdwg.mxu0
    %2151 = vmatpush.msra.mxu0 %v615
    %2152 = vmatpush.msra.mxu0 %v607
    %2153 = vmatpush.msra.mxu0 %v599
    %2154 = vmatpush.msra.mxu0 %v591
    %2155 = vmatpush.msra.mxu0 %v583
    %2156 = vmatpush.msra.mxu0 %v575
    %2157 = vmatpush.msra.mxu0 %v567
    %2158 = vmatpush.msra.mxu0 %v559
    %2159 = vmatpush.msra.mxu0 %v551
    %2160 = vmatpush.msra.mxu0 %v543
    %2161 = vmatpush.msra.mxu0 %v535
    %2162 = vmatpush.msra.mxu0 %v527
    %2163 = vmatpush.msra.mxu0 %v519
    %2164 = vmatpush.msra.mxu0 %v511
    %2165 = vmatpush.msra.mxu0 %v503
    %2166 = vmatpush.msra.mxu0 %v495
    %2167 = vmatmul.f32.gmra.mxu0 %v2026
    %v2168 = vpop.f32.mrf.mxu0
    %v2169 = vadd.f32 0.0, %v2168
    %2170 = vdwg.mxu0
    %2171 = vmatpush.msra.mxu0 0.0
    %2172 = vmatpush.msra.mxu0 0.0
    %2173 = vmatpush.msra.mxu0 0.0
    %2174 = vmatpush.msra.mxu0 0.0
    %2175 = vmatpush.msra.mxu0 0.0
    %2176 = vmatpush.msra.mxu0 0.0
    %2177 = vmatpush.msra.mxu0 0.0
    %2178 = vmatpush.msra.mxu0 0.0
    %2179 = vmatpush.msra.mxu0 0.0
    %2180 = vmatpush.msra.mxu0 0.0
    %2181 = vmatpush.msra.mxu0 0.0
    %2182 = vmatpush.msra.mxu0 0.0
    %2183 = vmatpush.msra.mxu0 0.0
    %2184 = vmatpush.msra.mxu0 0.0
    %2185 = vmatpush.msra.mxu0 0.0
    %2186 = vmatpush.msra.mxu0 %v623
    %2187 = vmatmul.f32.gmra.mxu0 %v2029
    %v2188 = vpop.f32.mrf.mxu0
    %v2189 = vadd.f32 %v2169, %v2188
    %2190 = vdwg.mxu0
    %2191 = vmatpush.msra.mxu0 %v616
    %2192 = vmatpush.msra.mxu0 %v608
    %2193 = vmatpush.msra.mxu0 %v600
    %2194 = vmatpush.msra.mxu0 %v592
    %2195 = vmatpush.msra.mxu0 %v584
    %2196 = vmatpush.msra.mxu0 %v576
    %2197 = vmatpush.msra.mxu0 %v568
    %2198 = vmatpush.msra.mxu0 %v560
    %2199 = vmatpush.msra.mxu0 %v552
    %2200 = vmatpush.msra.mxu0 %v544
    %2201 = vmatpush.msra.mxu0 %v536
    %2202 = vmatpush.msra.mxu0 %v528
    %2203 = vmatpush.msra.mxu0 %v520
    %2204 = vmatpush.msra.mxu0 %v512
    %2205 = vmatpush.msra.mxu0 %v504
    %2206 = vmatpush.msra.mxu0 %v496
    %2207 = vmatmul.f32.gmra.mxu0 %v2026
    %v2208 = vpop.f32.mrf.mxu0
    %v2209 = vadd.f32 0.0, %v2208
    %2210 = vdwg.mxu0
    %2211 = vmatpush.msra.mxu0 0.0
    %2212 = vmatpush.msra.mxu0 0.0
    %2213 = vmatpush.msra.mxu0 0.0
    %2214 = vmatpush.msra.mxu0 0.0
    %2215 = vmatpush.msra.mxu0 0.0
    %2216 = vmatpush.msra.mxu0 0.0
    %2217 = vmatpush.msra.mxu0 0.0
    %2218 = vmatpush.msra.mxu0 0.0
    %2219 = vmatpush.msra.mxu0 0.0
    %2220 = vmatpush.msra.mxu0 0.0
    %2221 = vmatpush.msra.mxu0 0.0
    %2222 = vmatpush.msra.mxu0 0.0
    %2223 = vmatpush.msra.mxu0 0.0
    %2224 = vmatpush.msra.mxu0 0.0
    %2225 = vmatpush.msra.mxu0 0.0
    %2226 = vmatpush.msra.mxu0 %v624
    %2227 = vmatmul.f32.gmra.mxu0 %v2029
    %v2228 = vpop.f32.mrf.mxu0
    %v2229 = vadd.f32 %v2209, %v2228
    %2230 = vdwg.mxu0
    %2231 = vmatpush.msra.mxu0 %v617
    %2232 = vmatpush.msra.mxu0 %v609
    %2233 = vmatpush.msra.mxu0 %v601
    %2234 = vmatpush.msra.mxu0 %v593
    %2235 = vmatpush.msra.mxu0 %v585
    %2236 = vmatpush.msra.mxu0 %v577
    %2237 = vmatpush.msra.mxu0 %v569
    %2238 = vmatpush.msra.mxu0 %v561
    %2239 = vmatpush.msra.mxu0 %v553
    %2240 = vmatpush.msra.mxu0 %v545
    %2241 = vmatpush.msra.mxu0 %v537
    %2242 = vmatpush.msra.mxu0 %v529
    %2243 = vmatpush.msra.mxu0 %v521
    %2244 = vmatpush.msra.mxu0 %v513
    %2245 = vmatpush.msra.mxu0 %v505
    %2246 = vmatpush.msra.mxu0 %v497
    %2247 = vmatmul.f32.gmra.mxu0 %v2026
    %v2248 = vpop.f32.mrf.mxu0
    %v2249 = vadd.f32 0.0, %v2248
    %2250 = vdwg.mxu0
    %2251 = vmatpush.msra.mxu0 0.0
    %2252 = vmatpush.msra.mxu0 0.0
    %2253 = vmatpush.msra.mxu0 0.0
    %2254 = vmatpush.msra.mxu0 0.0
    %2255 = vmatpush.msra.mxu0 0.0
    %2256 = vmatpush.msra.mxu0 0.0
    %2257 = vmatpush.msra.mxu0 0.0
    %2258 = vmatpush.msra.mxu0 0.0
    %2259 = vmatpush.msra.mxu0 0.0
    %2260 = vmatpush.msra.mxu0 0.0
    %2261 = vmatpush.msra.mxu0 0.0
    %2262 = vmatpush.msra.mxu0 0.0
    %2263 = vmatpush.msra.mxu0 0.0
    %2264 = vmatpush.msra.mxu0 0.0
    %2265 = vmatpush.msra.mxu0 0.0
    %2266 = vmatpush.msra.mxu0 %v625
    %2267 = vmatmul.f32.gmra.mxu0 %v2029
    %v2268 = vpop.f32.mrf.mxu0
    %v2269 = vadd.f32 %v2249, %v2268
    %2270 = vdwg.mxu0
    %2271 = vmatpush.msra.mxu0 %v618
    %2272 = vmatpush.msra.mxu0 %v610
    %2273 = vmatpush.msra.mxu0 %v602
    %2274 = vmatpush.msra.mxu0 %v594
    %2275 = vmatpush.msra.mxu0 %v586
    %2276 = vmatpush.msra.mxu0 %v578
    %2277 = vmatpush.msra.mxu0 %v570
    %2278 = vmatpush.msra.mxu0 %v562
    %2279 = vmatpush.msra.mxu0 %v554
    %2280 = vmatpush.msra.mxu0 %v546
    %2281 = vmatpush.msra.mxu0 %v538
    %2282 = vmatpush.msra.mxu0 %v530
    %2283 = vmatpush.msra.mxu0 %v522
    %2284 = vmatpush.msra.mxu0 %v514
    %2285 = vmatpush.msra.mxu0 %v506
    %2286 = vmatpush.msra.mxu0 %v498
    %2287 = vmatmul.f32.gmra.mxu0 %v2026
    %v2288 = vpop.f32.mrf.mxu0
    %v2289 = vadd.f32 0.0, %v2288
    %2290 = vdwg.mxu0
    %2291 = vmatpush.msra.mxu0 0.0
    %2292 = vmatpush.msra.mxu0 0.0
    %2293 = vmatpush.msra.mxu0 0.0
    %2294 = vmatpush.msra.mxu0 0.0
    %2295 = vmatpush.msra.mxu0 0.0
    %2296 = vmatpush.msra.mxu0 0.0
    %2297 = vmatpush.msra.mxu0 0.0
    %2298 = vmatpush.msra.mxu0 0.0
    %2299 = vmatpush.msra.mxu0 0.0
    %2300 = vmatpush.msra.mxu0 0.0
    %2301 = vmatpush.msra.mxu0 0.0
    %2302 = vmatpush.msra.mxu0 0.0
    %2303 = vmatpush.msra.mxu0 0.0
    %2304 = vmatpush.msra.mxu0 0.0
    %2305 = vmatpush.msra.mxu0 0.0
    %2306 = vmatpush.msra.mxu0 %v626
    %2307 = vmatmul.f32.gmra.mxu0 %v2029
    %v2308 = vpop.f32.mrf.mxu0
    %v2309 = vadd.f32 %v2289, %v2308
    %2310 = vdwg.mxu0
    %2311 = vmatpush.msra.mxu0 %v619
    %2312 = vmatpush.msra.mxu0 %v611
    %2313 = vmatpush.msra.mxu0 %v603
    %2314 = vmatpush.msra.mxu0 %v595
    %2315 = vmatpush.msra.mxu0 %v587
    %2316 = vmatpush.msra.mxu0 %v579
    %2317 = vmatpush.msra.mxu0 %v571
    %2318 = vmatpush.msra.mxu0 %v563
    %2319 = vmatpush.msra.mxu0 %v555
    %2320 = vmatpush.msra.mxu0 %v547
    %2321 = vmatpush.msra.mxu0 %v539
    %2322 = vmatpush.msra.mxu0 %v531
    %2323 = vmatpush.msra.mxu0 %v523
    %2324 = vmatpush.msra.mxu0 %v515
    %2325 = vmatpush.msra.mxu0 %v507
    %2326 = vmatpush.msra.mxu0 %v499
    %2327 = vmatmul.f32.gmra.mxu0 %v2026
    %v2328 = vpop.f32.mrf.mxu0
    %v2329 = vadd.f32 0.0, %v2328
    %2330 = vdwg.mxu0
    %2331 = vmatpush.msra.mxu0 0.0
    %2332 = vmatpush.msra.mxu0 0.0
    %2333 = vmatpush.msra.mxu0 0.0
    %2334 = vmatpush.msra.mxu0 0.0
    %2335 = vmatpush.msra.mxu0 0.0
    %2336 = vmatpush.msra.mxu0 0.0
    %2337 = vmatpush.msra.mxu0 0.0
    %2338 = vmatpush.msra.mxu0 0.0
    %2339 = vmatpush.msra.mxu0 0.0
    %2340 = vmatpush.msra.mxu0 0.0
    %2341 = vmatpush.msra.mxu0 0.0
    %2342 = vmatpush.msra.mxu0 0.0
    %2343 = vmatpush.msra.mxu0 0.0
    %2344 = vmatpush.msra.mxu0 0.0
    %2345 = vmatpush.msra.mxu0 0.0
    %2346 = vmatpush.msra.mxu0 %v627
    %2347 = vmatmul.f32.gmra.mxu0 %v2029
    %v2348 = vpop.f32.mrf.mxu0
    %v2349 = vadd.f32 %v2329, %v2348
    %2350 = vdwg.mxu0
    %v2351 = vmul.f32 %v2149, %v2229
    %v2352 = vmul.f32 %v2189, %v2269
    %s2353 = scalar_lea.vmem %s7, 6
    %v2354 = vld [vmem:[%s2353] sm:$0x3]
    %s2355 = scalar_lea.vmem %s8, 6
    %v2356 = vld [vmem:[%s2355] sm:$0x3]
    %v2357 = vmul.f32 %v2069, %v2309
    %v2358 = vmul.f32 %v2109, %v2349
    %v2359 = vld [vmem:[#allocation4] sm:$0xff]
    %2361 = vst [vmem:[#allocation1] ss:$2 sm:$0xff] %v2359
    %v2362 = vld.sshfl [vmem:[#allocation1] sm:$0xff pattern:$0x75316420]
    %v2363 = vld.sshfl [vmem:[#allocation1 + $0x8] sm:$0xff pattern:$0x75316420]
    %v2366 = vmul.f32 %v2357, %v2362
    %v2367 = vmul.f32 %v2358, %v2363
    %v2369 = vperm.slane %v2354, 0
    %v2370 = vperm.slane %v2354, 1
    %v2373 = vmul.f32 %v2351, %v2369
    %v2374 = vmul.f32 %v2352, %v2370
    %v2375 = vadd.f32 %v2366, %v2373
    %v2376 = vadd.f32 %v2367, %v2374
    %v2377 = vld [vmem:[#allocation5] sm:$0xff]
    %2379 = vst [vmem:[#allocation1] ss:$2 sm:$0xff] %v2377
    %v2380 = vld.sshfl [vmem:[#allocation1] sm:$0xff pattern:$0x75316420]
    %v2381 = vld.sshfl [vmem:[#allocation1 + $0x8] sm:$0xff pattern:$0x75316420]
    %v2384 = vmul.f32 %v2357, %v2380
    %v2385 = vmul.f32 %v2358, %v2381
    %v2387 = vperm.slane %v2356, 0
    %v2388 = vperm.slane %v2356, 1
    %v2391 = vmul.f32 %v2351, %v2387
    %v2392 = vmul.f32 %v2352, %v2388
    %v2393 = vadd.f32 %v2384, %v2391
    %v2394 = vadd.f32 %v2385, %v2392
    %v2395 = vmul.f32 %v2375, %v2375
    %v2396 = vmul.f32 %v2376, %v2376
    %v2397 = vmul.f32 %v2393, %v2393
    %v2398 = vmul.f32 %v2394, %v2394
    %v2399 = vadd.f32 %v2395, %v2397
    %v2400 = vadd.f32 %v2396, %v2398
    %2401 = vmatpush.msra.mxu0 %v643
    %2402 = vmatpush.msra.mxu0 %v642
    %2403 = vmatpush.msra.mxu0 %v641
    %2404 = vmatpush.msra.mxu0 %v640
    %2405 = vmatpush.msra.mxu0 %v639
    %2406 = vmatpush.msra.mxu0 %v638
    %2407 = vmatpush.msra.mxu0 %v637
    %2408 = vmatpush.msra.mxu0 %v636
    %2409 = vmatpush.msra.mxu0 %v635
    %2410 = vmatpush.msra.mxu0 %v634
    %2411 = vmatpush.msra.mxu0 %v633
    %2412 = vmatpush.msra.mxu0 %v632
    %2413 = vmatpush.msra.mxu0 %v631
    %2414 = vmatpush.msra.mxu0 %v630
    %2415 = vmatpush.msra.mxu0 %v629
    %2416 = vmatpush.msra.mxu0 %v628
    %2417 = vmatmul.f32.gmra.mxu0 %v2399
    %v2418 = vpop.f32.mrf.mxu0
    %v2419 = vadd.f32 %v879, %v2418
    %2420 = vdwg.mxu0
    %2421 = vmatpush.msra.mxu0 %v659
    %2422 = vmatpush.msra.mxu0 %v658
    %2423 = vmatpush.msra.mxu0 %v657
    %2424 = vmatpush.msra.mxu0 %v656
    %2425 = vmatpush.msra.mxu0 %v655
    %2426 = vmatpush.msra.mxu0 %v654
    %2427 = vmatpush.msra.mxu0 %v653
    %2428 = vmatpush.msra.mxu0 %v652
    %2429 = vmatpush.msra.mxu0 %v651
    %2430 = vmatpush.msra.mxu0 %v650
    %2431 = vmatpush.msra.mxu0 %v649
    %2432 = vmatpush.msra.mxu0 %v648
    %2433 = vmatpush.msra.mxu0 %v647
    %2434 = vmatpush.msra.mxu0 %v646
    %2435 = vmatpush.msra.mxu0 %v645
    %2436 = vmatpush.msra.mxu0 %v644
    %2437 = vmatmul.f32.gmra.mxu0 %v2400
    %v2438 = vpop.f32.mrf.mxu0
    %v2439 = vadd.f32 %v2419, %v2438
    %2440 = vdwg.mxu0
    %v2441 = vtanh.pop %v2439
    %2443 = vrot.lane.b32.xlu0 %v2441, 96
    %v2444 = vpop.permute.xlu0 %2443
    %v2446 = vmul.f32 %v2026, %v2444
    %2448 = vrot.lane.b32.xlu0 %v2446, 32
    %v2449 = vpop.permute.xlu0 %2448
    %2451 = vst.msk [vmem:[#allocation3] sm:$0xf] %vm931, %v2449
    %v2454 = vrot.slane %v2376, 4
    %v2455 = vsel %vm114, %v2375, %v2454
    %2457 = vst [vmem:[#allocation4] sm:$0xff] %v2455
    %v2460 = vrot.slane %v2394, 4
    %v2461 = vsel %vm114, %v2393, %v2460
    %2463 = vst [vmem:[#allocation5] sm:$0xff] %v2461
    %v2464 = vld [vmem:[%s326] sm:$0xff]
    %v2465 = vld [vmem:[#allocation3] sm:$0xf]
    %v2467 = vsel %vm947, %v2465, 0
    %2469 = vmatpush.msra.mxu0 0.0
    %2470 = vmatpush.msra.mxu0 0.0
    %2471 = vmatpush.msra.mxu0 0.0
    %2472 = vmatpush.msra.mxu0 0.0
    %2473 = vmatpush.msra.mxu0 0.0
    %2474 = vmatpush.msra.mxu0 0.0
    %2475 = vmatpush.msra.mxu0 0.0
    %2476 = vmatpush.msra.mxu0 0.0
    %2477 = vmatpush.msra.mxu0 0.0
    %2478 = vmatpush.msra.mxu0 0.0
    %2479 = vmatpush.msra.mxu0 0.0
    %2480 = vmatpush.msra.mxu0 0.0
    %2481 = vmatpush.msra.mxu0 %v490
    %2482 = vmatpush.msra.mxu0 %v488
    %2483 = vmatpush.msra.mxu0 %v486
    %2484 = vmatpush.msra.mxu0 %v484
    %2485 = vmatmul.f32.gmra.mxu0 %v2467
    %v2486 = vpop.f32.mrf.mxu0
    %v2487 = vadd.f32 0.0, %v2486
    %2488 = vdwg.mxu0
    %2489 = vmatpush.msra.mxu0 0.0
    %2490 = vmatpush.msra.mxu0 0.0
    %2491 = vmatpush.msra.mxu0 0.0
    %2492 = vmatpush.msra.mxu0 0.0
    %2493 = vmatpush.msra.mxu0 0.0
    %2494 = vmatpush.msra.mxu0 0.0
    %2495 = vmatpush.msra.mxu0 0.0
    %2496 = vmatpush.msra.mxu0 0.0
    %2497 = vmatpush.msra.mxu0 0.0
    %2498 = vmatpush.msra.mxu0 0.0
    %2499 = vmatpush.msra.mxu0 0.0
    %2500 = vmatpush.msra.mxu0 0.0
    %2501 = vmatpush.msra.mxu0 %v491
    %2502 = vmatpush.msra.mxu0 %v489
    %2503 = vmatpush.msra.mxu0 %v487
    %2504 = vmatpush.msra.mxu0 %v485
    %2505 = vmatmul.f32.gmra.mxu0 %v2467
    %v2506 = vpop.f32.mrf.mxu0
    %v2507 = vadd.f32 0.0, %v2506
    %2508 = vdwg.mxu0
    %v2511 = vrot.slane %v2507, 4
    %v2512 = vsel %vm114, %v2487, %v2511
    %v2514 = vadd.f32 %v2464, %v2512
    %v2515 = vtanh.pop %v2514
    %v2516 = vmul.f32 %v2514, 0.16666667
    %v2517 = vadd.f32 %v2516, 0.5
    %v2518 = vmax.f32 %v2517, 0.0
    %v2519 = vmin.f32 %v2518, 1.0
    %2521 = vst [vmem:[#allocation1] ss:$2 sm:$0xff] %v2515
    %v2522 = vld.sshfl [vmem:[#allocation1] sm:$0xff pattern:$0x75316420]
    %v2523 = vld.sshfl [vmem:[#allocation1 + $0x8] sm:$0xff pattern:$0x75316420]
    %2527 = vst [vmem:[#allocation1] ss:$2 sm:$0xff] %v2519
    %v2528 = vld.sshfl [vmem:[#allocation1] sm:$0xff pattern:$0x75316420]
    %v2529 = vld.sshfl [vmem:[#allocation1 + $0x8] sm:$0xff pattern:$0x75316420]
    %v2532 = vsel %vm668, %v2522, %v2528
    %v2533 = vsel %vm669, %v2523, %v2529
    %v2535 = vsel %vm690, %v2533, 0
    %2537 = vmatpush.msra.mxu0 %v612
    %2538 = vmatpush.msra.mxu0 %v604
    %2539 = vmatpush.msra.mxu0 %v596
    %2540 = vmatpush.msra.mxu0 %v588
    %2541 = vmatpush.msra.mxu0 %v580
    %2542 = vmatpush.msra.mxu0 %v572
    %2543 = vmatpush.msra.mxu0 %v564
    %2544 = vmatpush.msra.mxu0 %v556
    %2545 = vmatpush.msra.mxu0 %v548
    %2546 = vmatpush.msra.mxu0 %v540
    %2547 = vmatpush.msra.mxu0 %v532
    %2548 = vmatpush.msra.mxu0 %v524
    %2549 = vmatpush.msra.mxu0 %v516
    %2550 = vmatpush.msra.mxu0 %v508
    %2551 = vmatpush.msra.mxu0 %v500
    %2552 = vmatpush.msra.mxu0 %v492
    %2553 = vmatmul.f32.gmra.mxu0 %v2532
    %v2554 = vpop.f32.mrf.mxu0
    %v2555 = vadd.f32 0.0, %v2554
    %2556 = vdwg.mxu0
    %2557 = vmatpush.msra.mxu0 0.0
    %2558 = vmatpush.msra.mxu0 0.0
    %2559 = vmatpush.msra.mxu0 0.0
    %2560 = vmatpush.msra.mxu0 0.0
    %2561 = vmatpush.msra.mxu0 0.0
    %2562 = vmatpush.msra.mxu0 0.0
    %2563 = vmatpush.msra.mxu0 0.0
    %2564 = vmatpush.msra.mxu0 0.0
    %2565 = vmatpush.msra.mxu0 0.0
    %2566 = vmatpush.msra.mxu0 0.0
    %2567 = vmatpush.msra.mxu0 0.0
    %2568 = vmatpush.msra.mxu0 0.0
    %2569 = vmatpush.msra.mxu0 0.0
    %2570 = vmatpush.msra.mxu0 0.0
    %2571 = vmatpush.msra.mxu0 0.0
    %2572 = vmatpush.msra.mxu0 %v620
    %2573 = vmatmul.f32.gmra.mxu0 %v2535
    %v2574 = vpop.f32.mrf.mxu0
    %v2575 = vadd.f32 %v2555, %v2574
    %2576 = vdwg.mxu0
    %2577 = vmatpush.msra.mxu0 %v613
    %2578 = vmatpush.msra.mxu0 %v605
    %2579 = vmatpush.msra.mxu0 %v597
    %2580 = vmatpush.msra.mxu0 %v589
    %2581 = vmatpush.msra.mxu0 %v581
    %2582 = vmatpush.msra.mxu0 %v573
    %2583 = vmatpush.msra.mxu0 %v565
    %2584 = vmatpush.msra.mxu0 %v557
    %2585 = vmatpush.msra.mxu0 %v549
    %2586 = vmatpush.msra.mxu0 %v541
    %2587 = vmatpush.msra.mxu0 %v533
    %2588 = vmatpush.msra.mxu0 %v525
    %2589 = vmatpush.msra.mxu0 %v517
    %2590 = vmatpush.msra.mxu0 %v509
    %2591 = vmatpush.msra.mxu0 %v501
    %2592 = vmatpush.msra.mxu0 %v493
    %2593 = vmatmul.f32.gmra.mxu0 %v2532
    %v2594 = vpop.f32.mrf.mxu0
    %v2595 = vadd.f32 0.0, %v2594
    %2596 = vdwg.mxu0
    %2597 = vmatpush.msra.mxu0 0.0
    %2598 = vmatpush.msra.mxu0 0.0
    %2599 = vmatpush.msra.mxu0 0.0
    %2600 = vmatpush.msra.mxu0 0.0
    %2601 = vmatpush.msra.mxu0 0.0
    %2602 = vmatpush.msra.mxu0 0.0
    %2603 = vmatpush.msra.mxu0 0.0
    %2604 = vmatpush.msra.mxu0 0.0
    %2605 = vmatpush.msra.mxu0 0.0
    %2606 = vmatpush.msra.mxu0 0.0
    %2607 = vmatpush.msra.mxu0 0.0
    %2608 = vmatpush.msra.mxu0 0.0
    %2609 = vmatpush.msra.mxu0 0.0
    %2610 = vmatpush.msra.mxu0 0.0
    %2611 = vmatpush.msra.mxu0 0.0
    %2612 = vmatpush.msra.mxu0 %v621
    %2613 = vmatmul.f32.gmra.mxu0 %v2535
    %v2614 = vpop.f32.mrf.mxu0
    %v2615 = vadd.f32 %v2595, %v2614
    %2616 = vdwg.mxu0
    %2617 = vmatpush.msra.mxu0 %v614
    %2618 = vmatpush.msra.mxu0 %v606
    %2619 = vmatpush.msra.mxu0 %v598
    %2620 = vmatpush.msra.mxu0 %v590
    %2621 = vmatpush.msra.mxu0 %v582
    %2622 = vmatpush.msra.mxu0 %v574
    %2623 = vmatpush.msra.mxu0 %v566
    %2624 = vmatpush.msra.mxu0 %v558
    %2625 = vmatpush.msra.mxu0 %v550
    %2626 = vmatpush.msra.mxu0 %v542
    %2627 = vmatpush.msra.mxu0 %v534
    %2628 = vmatpush.msra.mxu0 %v526
    %2629 = vmatpush.msra.mxu0 %v518
    %2630 = vmatpush.msra.mxu0 %v510
    %2631 = vmatpush.msra.mxu0 %v502
    %2632 = vmatpush.msra.mxu0 %v494
    %2633 = vmatmul.f32.gmra.mxu0 %v2532
    %v2634 = vpop.f32.mrf.mxu0
    %v2635 = vadd.f32 0.0, %v2634
    %2636 = vdwg.mxu0
    %2637 = vmatpush.msra.mxu0 0.0
    %2638 = vmatpush.msra.mxu0 0.0
    %2639 = vmatpush.msra.mxu0 0.0
    %2640 = vmatpush.msra.mxu0 0.0
    %2641 = vmatpush.msra.mxu0 0.0
    %2642 = vmatpush.msra.mxu0 0.0
    %2643 = vmatpush.msra.mxu0 0.0
    %2644 = vmatpush.msra.mxu0 0.0
    %2645 = vmatpush.msra.mxu0 0.0
    %2646 = vmatpush.msra.mxu0 0.0
    %2647 = vmatpush.msra.mxu0 0.0
    %2648 = vmatpush.msra.mxu0 0.0
    %2649 = vmatpush.msra.mxu0 0.0
    %2650 = vmatpush.msra.mxu0 0.0
    %2651 = vmatpush.msra.mxu0 0.0
    %2652 = vmatpush.msra.mxu0 %v622
    %2653 = vmatmul.f32.gmra.mxu0 %v2535
    %v2654 = vpop.f32.mrf.mxu0
    %v2655 = vadd.f32 %v2635, %v2654
    %2656 = vdwg.mxu0
    %2657 = vmatpush.msra.mxu0 %v615
    %2658 = vmatpush.msra.mxu0 %v607
    %2659 = vmatpush.msra.mxu0 %v599
    %2660 = vmatpush.msra.mxu0 %v591
    %2661 = vmatpush.msra.mxu0 %v583
    %2662 = vmatpush.msra.mxu0 %v575
    %2663 = vmatpush.msra.mxu0 %v567
    %2664 = vmatpush.msra.mxu0 %v559
    %2665 = vmatpush.msra.mxu0 %v551
    %2666 = vmatpush.msra.mxu0 %v543
    %2667 = vmatpush.msra.mxu0 %v535
    %2668 = vmatpush.msra.mxu0 %v527
    %2669 = vmatpush.msra.mxu0 %v519
    %2670 = vmatpush.msra.mxu0 %v511
    %2671 = vmatpush.msra.mxu0 %v503
    %2672 = vmatpush.msra.mxu0 %v495
    %2673 = vmatmul.f32.gmra.mxu0 %v2532
    %v2674 = vpop.f32.mrf.mxu0
    %v2675 = vadd.f32 0.0, %v2674
    %2676 = vdwg.mxu0
    %2677 = vmatpush.msra.mxu0 0.0
    %2678 = vmatpush.msra.mxu0 0.0
    %2679 = vmatpush.msra.mxu0 0.0
    %2680 = vmatpush.msra.mxu0 0.0
    %2681 = vmatpush.msra.mxu0 0.0
    %2682 = vmatpush.msra.mxu0 0.0
    %2683 = vmatpush.msra.mxu0 0.0
    %2684 = vmatpush.msra.mxu0 0.0
    %2685 = vmatpush.msra.mxu0 0.0
    %2686 = vmatpush.msra.mxu0 0.0
    %2687 = vmatpush.msra.mxu0 0.0
    %2688 = vmatpush.msra.mxu0 0.0
    %2689 = vmatpush.msra.mxu0 0.0
    %2690 = vmatpush.msra.mxu0 0.0
    %2691 = vmatpush.msra.mxu0 0.0
    %2692 = vmatpush.msra.mxu0 %v623
    %2693 = vmatmul.f32.gmra.mxu0 %v2535
    %v2694 = vpop.f32.mrf.mxu0
    %v2695 = vadd.f32 %v2675, %v2694
    %2696 = vdwg.mxu0
    %2697 = vmatpush.msra.mxu0 %v616
    %2698 = vmatpush.msra.mxu0 %v608
    %2699 = vmatpush.msra.mxu0 %v600
    %2700 = vmatpush.msra.mxu0 %v592
    %2701 = vmatpush.msra.mxu0 %v584
    %2702 = vmatpush.msra.mxu0 %v576
    %2703 = vmatpush.msra.mxu0 %v568
    %2704 = vmatpush.msra.mxu0 %v560
    %2705 = vmatpush.msra.mxu0 %v552
    %2706 = vmatpush.msra.mxu0 %v544
    %2707 = vmatpush.msra.mxu0 %v536
    %2708 = vmatpush.msra.mxu0 %v528
    %2709 = vmatpush.msra.mxu0 %v520
    %2710 = vmatpush.msra.mxu0 %v512
    %2711 = vmatpush.msra.mxu0 %v504
    %2712 = vmatpush.msra.mxu0 %v496
    %2713 = vmatmul.f32.gmra.mxu0 %v2532
    %v2714 = vpop.f32.mrf.mxu0
    %v2715 = vadd.f32 0.0, %v2714
    %2716 = vdwg.mxu0
    %2717 = vmatpush.msra.mxu0 0.0
    %2718 = vmatpush.msra.mxu0 0.0
    %2719 = vmatpush.msra.mxu0 0.0
    %2720 = vmatpush.msra.mxu0 0.0
    %2721 = vmatpush.msra.mxu0 0.0
    %2722 = vmatpush.msra.mxu0 0.0
    %2723 = vmatpush.msra.mxu0 0.0
    %2724 = vmatpush.msra.mxu0 0.0
    %2725 = vmatpush.msra.mxu0 0.0
    %2726 = vmatpush.msra.mxu0 0.0
    %2727 = vmatpush.msra.mxu0 0.0
    %2728 = vmatpush.msra.mxu0 0.0
    %2729 = vmatpush.msra.mxu0 0.0
    %2730 = vmatpush.msra.mxu0 0.0
    %2731 = vmatpush.msra.mxu0 0.0
    %2732 = vmatpush.msra.mxu0 %v624
    %2733 = vmatmul.f32.gmra.mxu0 %v2535
    %v2734 = vpop.f32.mrf.mxu0
    %v2735 = vadd.f32 %v2715, %v2734
    %2736 = vdwg.mxu0
    %2737 = vmatpush.msra.mxu0 %v617
    %2738 = vmatpush.msra.mxu0 %v609
    %2739 = vmatpush.msra.mxu0 %v601
    %2740 = vmatpush.msra.mxu0 %v593
    %2741 = vmatpush.msra.mxu0 %v585
    %2742 = vmatpush.msra.mxu0 %v577
    %2743 = vmatpush.msra.mxu0 %v569
    %2744 = vmatpush.msra.mxu0 %v561
    %2745 = vmatpush.msra.mxu0 %v553
    %2746 = vmatpush.msra.mxu0 %v545
    %2747 = vmatpush.msra.mxu0 %v537
    %2748 = vmatpush.msra.mxu0 %v529
    %2749 = vmatpush.msra.mxu0 %v521
    %2750 = vmatpush.msra.mxu0 %v513
    %2751 = vmatpush.msra.mxu0 %v505
    %2752 = vmatpush.msra.mxu0 %v497
    %2753 = vmatmul.f32.gmra.mxu0 %v2532
    %v2754 = vpop.f32.mrf.mxu0
    %v2755 = vadd.f32 0.0, %v2754
    %2756 = vdwg.mxu0
    %2757 = vmatpush.msra.mxu0 0.0
    %2758 = vmatpush.msra.mxu0 0.0
    %2759 = vmatpush.msra.mxu0 0.0
    %2760 = vmatpush.msra.mxu0 0.0
    %2761 = vmatpush.msra.mxu0 0.0
    %2762 = vmatpush.msra.mxu0 0.0
    %2763 = vmatpush.msra.mxu0 0.0
    %2764 = vmatpush.msra.mxu0 0.0
    %2765 = vmatpush.msra.mxu0 0.0
    %2766 = vmatpush.msra.mxu0 0.0
    %2767 = vmatpush.msra.mxu0 0.0
    %2768 = vmatpush.msra.mxu0 0.0
    %2769 = vmatpush.msra.mxu0 0.0
    %2770 = vmatpush.msra.mxu0 0.0
    %2771 = vmatpush.msra.mxu0 0.0
    %2772 = vmatpush.msra.mxu0 %v625
    %2773 = vmatmul.f32.gmra.mxu0 %v2535
    %v2774 = vpop.f32.mrf.mxu0
    %v2775 = vadd.f32 %v2755, %v2774
    %2776 = vdwg.mxu0
    %2777 = vmatpush.msra.mxu0 %v618
    %2778 = vmatpush.msra.mxu0 %v610
    %2779 = vmatpush.msra.mxu0 %v602
    %2780 = vmatpush.msra.mxu0 %v594
    %2781 = vmatpush.msra.mxu0 %v586
    %2782 = vmatpush.msra.mxu0 %v578
    %2783 = vmatpush.msra.mxu0 %v570
    %2784 = vmatpush.msra.mxu0 %v562
    %2785 = vmatpush.msra.mxu0 %v554
    %2786 = vmatpush.msra.mxu0 %v546
    %2787 = vmatpush.msra.mxu0 %v538
    %2788 = vmatpush.msra.mxu0 %v530
    %2789 = vmatpush.msra.mxu0 %v522
    %2790 = vmatpush.msra.mxu0 %v514
    %2791 = vmatpush.msra.mxu0 %v506
    %2792 = vmatpush.msra.mxu0 %v498
    %2793 = vmatmul.f32.gmra.mxu0 %v2532
    %v2794 = vpop.f32.mrf.mxu0
    %v2795 = vadd.f32 0.0, %v2794
    %2796 = vdwg.mxu0
    %2797 = vmatpush.msra.mxu0 0.0
    %2798 = vmatpush.msra.mxu0 0.0
    %2799 = vmatpush.msra.mxu0 0.0
    %2800 = vmatpush.msra.mxu0 0.0
    %2801 = vmatpush.msra.mxu0 0.0
    %2802 = vmatpush.msra.mxu0 0.0
    %2803 = vmatpush.msra.mxu0 0.0
    %2804 = vmatpush.msra.mxu0 0.0
    %2805 = vmatpush.msra.mxu0 0.0
    %2806 = vmatpush.msra.mxu0 0.0
    %2807 = vmatpush.msra.mxu0 0.0
    %2808 = vmatpush.msra.mxu0 0.0
    %2809 = vmatpush.msra.mxu0 0.0
    %2810 = vmatpush.msra.mxu0 0.0
    %2811 = vmatpush.msra.mxu0 0.0
    %2812 = vmatpush.msra.mxu0 %v626
    %2813 = vmatmul.f32.gmra.mxu0 %v2535
    %v2814 = vpop.f32.mrf.mxu0
    %v2815 = vadd.f32 %v2795, %v2814
    %2816 = vdwg.mxu0
    %2817 = vmatpush.msra.mxu0 %v619
    %2818 = vmatpush.msra.mxu0 %v611
    %2819 = vmatpush.msra.mxu0 %v603
    %2820 = vmatpush.msra.mxu0 %v595
    %2821 = vmatpush.msra.mxu0 %v587
    %2822 = vmatpush.msra.mxu0 %v579
    %2823 = vmatpush.msra.mxu0 %v571
    %2824 = vmatpush.msra.mxu0 %v563
    %2825 = vmatpush.msra.mxu0 %v555
    %2826 = vmatpush.msra.mxu0 %v547
    %2827 = vmatpush.msra.mxu0 %v539
    %2828 = vmatpush.msra.mxu0 %v531
    %2829 = vmatpush.msra.mxu0 %v523
    %2830 = vmatpush.msra.mxu0 %v515
    %2831 = vmatpush.msra.mxu0 %v507
    %2832 = vmatpush.msra.mxu0 %v499
    %2833 = vmatmul.f32.gmra.mxu0 %v2532
    %v2834 = vpop.f32.mrf.mxu0
    %v2835 = vadd.f32 0.0, %v2834
    %2836 = vdwg.mxu0
    %2837 = vmatpush.msra.mxu0 0.0
    %2838 = vmatpush.msra.mxu0 0.0
    %2839 = vmatpush.msra.mxu0 0.0
    %2840 = vmatpush.msra.mxu0 0.0
    %2841 = vmatpush.msra.mxu0 0.0
    %2842 = vmatpush.msra.mxu0 0.0
    %2843 = vmatpush.msra.mxu0 0.0
    %2844 = vmatpush.msra.mxu0 0.0
    %2845 = vmatpush.msra.mxu0 0.0
    %2846 = vmatpush.msra.mxu0 0.0
    %2847 = vmatpush.msra.mxu0 0.0
    %2848 = vmatpush.msra.mxu0 0.0
    %2849 = vmatpush.msra.mxu0 0.0
    %2850 = vmatpush.msra.mxu0 0.0
    %2851 = vmatpush.msra.mxu0 0.0
    %2852 = vmatpush.msra.mxu0 %v627
    %2853 = vmatmul.f32.gmra.mxu0 %v2535
    %v2854 = vpop.f32.mrf.mxu0
    %v2855 = vadd.f32 %v2835, %v2854
    %2856 = vdwg.mxu0
    %v2857 = vmul.f32 %v2655, %v2735
    %v2858 = vmul.f32 %v2695, %v2775
    %s2859 = scalar_lea.vmem %s7, 8
    %v2860 = vld [vmem:[%s2859] sm:$0x3]
    %s2861 = scalar_lea.vmem %s8, 8
    %v2862 = vld [vmem:[%s2861] sm:$0x3]
    %v2863 = vmul.f32 %v2575, %v2815
    %v2864 = vmul.f32 %v2615, %v2855
    %v2865 = vld [vmem:[#allocation4] sm:$0xff]
    %2867 = vst [vmem:[#allocation1] ss:$2 sm:$0xff] %v2865
    %v2868 = vld.sshfl [vmem:[#allocation1] sm:$0xff pattern:$0x75316420]
    %v2869 = vld.sshfl [vmem:[#allocation1 + $0x8] sm:$0xff pattern:$0x75316420]
    %v2872 = vmul.f32 %v2863, %v2868
    %v2873 = vmul.f32 %v2864, %v2869
    %v2875 = vperm.slane %v2860, 0
    %v2876 = vperm.slane %v2860, 1
    %v2879 = vmul.f32 %v2857, %v2875
    %v2880 = vmul.f32 %v2858, %v2876
    %v2881 = vadd.f32 %v2872, %v2879
    %v2882 = vadd.f32 %v2873, %v2880
    %v2883 = vld [vmem:[#allocation5] sm:$0xff]
    %2885 = vst [vmem:[#allocation1] ss:$2 sm:$0xff] %v2883
    %v2886 = vld.sshfl [vmem:[#allocation1] sm:$0xff pattern:$0x75316420]
    %v2887 = vld.sshfl [vmem:[#allocation1 + $0x8] sm:$0xff pattern:$0x75316420]
    %v2890 = vmul.f32 %v2863, %v2886
    %v2891 = vmul.f32 %v2864, %v2887
    %v2893 = vperm.slane %v2862, 0
    %v2894 = vperm.slane %v2862, 1
    %v2897 = vmul.f32 %v2857, %v2893
    %v2898 = vmul.f32 %v2858, %v2894
    %v2899 = vadd.f32 %v2890, %v2897
    %v2900 = vadd.f32 %v2891, %v2898
    %v2901 = vmul.f32 %v2881, %v2881
    %v2902 = vmul.f32 %v2882, %v2882
    %v2903 = vmul.f32 %v2899, %v2899
    %v2904 = vmul.f32 %v2900, %v2900
    %v2905 = vadd.f32 %v2901, %v2903
    %v2906 = vadd.f32 %v2902, %v2904
    %2907 = vmatpush.msra.mxu0 %v643
    %2908 = vmatpush.msra.mxu0 %v642
    %2909 = vmatpush.msra.mxu0 %v641
    %2910 = vmatpush.msra.mxu0 %v640
    %2911 = vmatpush.msra.mxu0 %v639
    %2912 = vmatpush.msra.mxu0 %v638
    %2913 = vmatpush.msra.mxu0 %v637
    %2914 = vmatpush.msra.mxu0 %v636
    %2915 = vmatpush.msra.mxu0 %v635
    %2916 = vmatpush.msra.mxu0 %v634
    %2917 = vmatpush.msra.mxu0 %v633
    %2918 = vmatpush.msra.mxu0 %v632
    %2919 = vmatpush.msra.mxu0 %v631
    %2920 = vmatpush.msra.mxu0 %v630
    %2921 = vmatpush.msra.mxu0 %v629
    %2922 = vmatpush.msra.mxu0 %v628
    %2923 = vmatmul.f32.gmra.mxu0 %v2905
    %v2924 = vpop.f32.mrf.mxu0
    %v2925 = vadd.f32 %v879, %v2924
    %2926 = vdwg.mxu0
    %2927 = vmatpush.msra.mxu0 %v659
    %2928 = vmatpush.msra.mxu0 %v658
    %2929 = vmatpush.msra.mxu0 %v657
    %2930 = vmatpush.msra.mxu0 %v656
    %2931 = vmatpush.msra.mxu0 %v655
    %2932 = vmatpush.msra.mxu0 %v654
    %2933 = vmatpush.msra.mxu0 %v653
    %2934 = vmatpush.msra.mxu0 %v652
    %2935 = vmatpush.msra.mxu0 %v651
    %2936 = vmatpush.msra.mxu0 %v650
    %2937 = vmatpush.msra.mxu0 %v649
    %2938 = vmatpush.msra.mxu0 %v648
    %2939 = vmatpush.msra.mxu0 %v647
    %2940 = vmatpush.msra.mxu0 %v646
    %2941 = vmatpush.msra.mxu0 %v645
    %2942 = vmatpush.msra.mxu0 %v644
    %2943 = vmatmul.f32.gmra.mxu0 %v2906
    %v2944 = vpop.f32.mrf.mxu0
    %v2945 = vadd.f32 %v2925, %v2944
    %2946 = vdwg.mxu0
    %v2947 = vtanh.pop %v2945
    %2949 = vrot.lane.b32.xlu0 %v2947, 96
    %v2950 = vpop.permute.xlu0 %2949
    %v2952 = vmul.f32 %v2532, %v2950
    %2954 = vrot.lane.b32.xlu0 %v2952, 32
    %v2955 = vpop.permute.xlu0 %2954
    %2957 = vst.msk [vmem:[#allocation3] sm:$0xf] %vm931, %v2955
    %v2960 = vrot.slane %v2882, 4
    %v2961 = vsel %vm114, %v2881, %v2960
    %2963 = vst [vmem:[#allocation4] sm:$0xff] %v2961
    %v2966 = vrot.slane %v2900, 4
    %v2967 = vsel %vm114, %v2899, %v2966
    %2969 = vst [vmem:[#allocation5] sm:$0xff] %v2967
    %v2970 = vld [vmem:[%s378] sm:$0xff]
    %v2971 = vld [vmem:[#allocation3] sm:$0xf]
    %v2973 = vsel %vm947, %v2971, 0
    %2975 = vmatpush.msra.mxu0 0.0
    %2976 = vmatpush.msra.mxu0 0.0
    %2977 = vmatpush.msra.mxu0 0.0
    %2978 = vmatpush.msra.mxu0 0.0
    %2979 = vmatpush.msra.mxu0 0.0
    %2980 = vmatpush.msra.mxu0 0.0
    %2981 = vmatpush.msra.mxu0 0.0
    %2982 = vmatpush.msra.mxu0 0.0
    %2983 = vmatpush.msra.mxu0 0.0
    %2984 = vmatpush.msra.mxu0 0.0
    %2985 = vmatpush.msra.mxu0 0.0
    %2986 = vmatpush.msra.mxu0 0.0
    %2987 = vmatpush.msra.mxu0 %v490
    %2988 = vmatpush.msra.mxu0 %v488
    %2989 = vmatpush.msra.mxu0 %v486
    %2990 = vmatpush.msra.mxu0 %v484
    %2991 = vmatmul.f32.gmra.mxu0 %v2973
    %v2992 = vpop.f32.mrf.mxu0
    %v2993 = vadd.f32 0.0, %v2992
    %2994 = vdwg.mxu0
    %2995 = vmatpush.msra.mxu0 0.0
    %2996 = vmatpush.msra.mxu0 0.0
    %2997 = vmatpush.msra.mxu0 0.0
    %2998 = vmatpush.msra.mxu0 0.0
    %2999 = vmatpush.msra.mxu0 0.0
    %3000 = vmatpush.msra.mxu0 0.0
    %3001 = vmatpush.msra.mxu0 0.0
    %3002 = vmatpush.msra.mxu0 0.0
    %3003 = vmatpush.msra.mxu0 0.0
    %3004 = vmatpush.msra.mxu0 0.0
    %3005 = vmatpush.msra.mxu0 0.0
    %3006 = vmatpush.msra.mxu0 0.0
    %3007 = vmatpush.msra.mxu0 %v491
    %3008 = vmatpush.msra.mxu0 %v489
    %3009 = vmatpush.msra.mxu0 %v487
    %3010 = vmatpush.msra.mxu0 %v485
    %3011 = vmatmul.f32.gmra.mxu0 %v2973
    %v3012 = vpop.f32.mrf.mxu0
    %v3013 = vadd.f32 0.0, %v3012
    %3014 = vdwg.mxu0
    %v3017 = vrot.slane %v3013, 4
    %v3018 = vsel %vm114, %v2993, %v3017
    %v3020 = vadd.f32 %v2970, %v3018
    %v3021 = vtanh.pop %v3020
    %v3022 = vmul.f32 %v3020, 0.16666667
    %v3023 = vadd.f32 %v3022, 0.5
    %v3024 = vmax.f32 %v3023, 0.0
    %v3025 = vmin.f32 %v3024, 1.0
    %3027 = vst [vmem:[#allocation1] ss:$2 sm:$0xff] %v3021
    %v3028 = vld.sshfl [vmem:[#allocation1] sm:$0xff pattern:$0x75316420]
    %v3029 = vld.sshfl [vmem:[#allocation1 + $0x8] sm:$0xff pattern:$0x75316420]
    %3033 = vst [vmem:[#allocation1] ss:$2 sm:$0xff] %v3025
    %v3034 = vld.sshfl [vmem:[#allocation1] sm:$0xff pattern:$0x75316420]
    %v3035 = vld.sshfl [vmem:[#allocation1 + $0x8] sm:$0xff pattern:$0x75316420]
    %v3038 = vsel %vm668, %v3028, %v3034
    %v3039 = vsel %vm669, %v3029, %v3035
    %v3041 = vsel %vm690, %v3039, 0
    %3043 = vmatpush.msra.mxu0 %v612
    %3044 = vmatpush.msra.mxu0 %v604
    %3045 = vmatpush.msra.mxu0 %v596
    %3046 = vmatpush.msra.mxu0 %v588
    %3047 = vmatpush.msra.mxu0 %v580
    %3048 = vmatpush.msra.mxu0 %v572
    %3049 = vmatpush.msra.mxu0 %v564
    %3050 = vmatpush.msra.mxu0 %v556
    %3051 = vmatpush.msra.mxu0 %v548
    %3052 = vmatpush.msra.mxu0 %v540
    %3053 = vmatpush.msra.mxu0 %v532
    %3054 = vmatpush.msra.mxu0 %v524
    %3055 = vmatpush.msra.mxu0 %v516
    %3056 = vmatpush.msra.mxu0 %v508
    %3057 = vmatpush.msra.mxu0 %v500
    %3058 = vmatpush.msra.mxu0 %v492
    %3059 = vmatmul.f32.gmra.mxu0 %v3038
    %v3060 = vpop.f32.mrf.mxu0
    %v3061 = vadd.f32 0.0, %v3060
    %3062 = vdwg.mxu0
    %3063 = vmatpush.msra.mxu0 0.0
    %3064 = vmatpush.msra.mxu0 0.0
    %3065 = vmatpush.msra.mxu0 0.0
    %3066 = vmatpush.msra.mxu0 0.0
    %3067 = vmatpush.msra.mxu0 0.0
    %3068 = vmatpush.msra.mxu0 0.0
    %3069 = vmatpush.msra.mxu0 0.0
    %3070 = vmatpush.msra.mxu0 0.0
    %3071 = vmatpush.msra.mxu0 0.0
    %3072 = vmatpush.msra.mxu0 0.0
    %3073 = vmatpush.msra.mxu0 0.0
    %3074 = vmatpush.msra.mxu0 0.0
    %3075 = vmatpush.msra.mxu0 0.0
    %3076 = vmatpush.msra.mxu0 0.0
    %3077 = vmatpush.msra.mxu0 0.0
    %3078 = vmatpush.msra.mxu0 %v620
    %3079 = vmatmul.f32.gmra.mxu0 %v3041
    %v3080 = vpop.f32.mrf.mxu0
    %v3081 = vadd.f32 %v3061, %v3080
    %3082 = vdwg.mxu0
    %3083 = vmatpush.msra.mxu0 %v613
    %3084 = vmatpush.msra.mxu0 %v605
    %3085 = vmatpush.msra.mxu0 %v597
    %3086 = vmatpush.msra.mxu0 %v589
    %3087 = vmatpush.msra.mxu0 %v581
    %3088 = vmatpush.msra.mxu0 %v573
    %3089 = vmatpush.msra.mxu0 %v565
    %3090 = vmatpush.msra.mxu0 %v557
    %3091 = vmatpush.msra.mxu0 %v549
    %3092 = vmatpush.msra.mxu0 %v541
    %3093 = vmatpush.msra.mxu0 %v533
    %3094 = vmatpush.msra.mxu0 %v525
    %3095 = vmatpush.msra.mxu0 %v517
    %3096 = vmatpush.msra.mxu0 %v509
    %3097 = vmatpush.msra.mxu0 %v501
    %3098 = vmatpush.msra.mxu0 %v493
    %3099 = vmatmul.f32.gmra.mxu0 %v3038
    %v3100 = vpop.f32.mrf.mxu0
    %v3101 = vadd.f32 0.0, %v3100
    %3102 = vdwg.mxu0
    %3103 = vmatpush.msra.mxu0 0.0
    %3104 = vmatpush.msra.mxu0 0.0
    %3105 = vmatpush.msra.mxu0 0.0
    %3106 = vmatpush.msra.mxu0 0.0
    %3107 = vmatpush.msra.mxu0 0.0
    %3108 = vmatpush.msra.mxu0 0.0
    %3109 = vmatpush.msra.mxu0 0.0
    %3110 = vmatpush.msra.mxu0 0.0
    %3111 = vmatpush.msra.mxu0 0.0
    %3112 = vmatpush.msra.mxu0 0.0
    %3113 = vmatpush.msra.mxu0 0.0
    %3114 = vmatpush.msra.mxu0 0.0
    %3115 = vmatpush.msra.mxu0 0.0
    %3116 = vmatpush.msra.mxu0 0.0
    %3117 = vmatpush.msra.mxu0 0.0
    %3118 = vmatpush.msra.mxu0 %v621
    %3119 = vmatmul.f32.gmra.mxu0 %v3041
    %v3120 = vpop.f32.mrf.mxu0
    %v3121 = vadd.f32 %v3101, %v3120
    %3122 = vdwg.mxu0
    %3123 = vmatpush.msra.mxu0 %v614
    %3124 = vmatpush.msra.mxu0 %v606
    %3125 = vmatpush.msra.mxu0 %v598
    %3126 = vmatpush.msra.mxu0 %v590
    %3127 = vmatpush.msra.mxu0 %v582
    %3128 = vmatpush.msra.mxu0 %v574
    %3129 = vmatpush.msra.mxu0 %v566
    %3130 = vmatpush.msra.mxu0 %v558
    %3131 = vmatpush.msra.mxu0 %v550
    %3132 = vmatpush.msra.mxu0 %v542
    %3133 = vmatpush.msra.mxu0 %v534
    %3134 = vmatpush.msra.mxu0 %v526
    %3135 = vmatpush.msra.mxu0 %v518
    %3136 = vmatpush.msra.mxu0 %v510
    %3137 = vmatpush.msra.mxu0 %v502
    %3138 = vmatpush.msra.mxu0 %v494
    %3139 = vmatmul.f32.gmra.mxu0 %v3038
    %v3140 = vpop.f32.mrf.mxu0
    %v3141 = vadd.f32 0.0, %v3140
    %3142 = vdwg.mxu0
    %3143 = vmatpush.msra.mxu0 0.0
    %3144 = vmatpush.msra.mxu0 0.0
    %3145 = vmatpush.msra.mxu0 0.0
    %3146 = vmatpush.msra.mxu0 0.0
    %3147 = vmatpush.msra.mxu0 0.0
    %3148 = vmatpush.msra.mxu0 0.0
    %3149 = vmatpush.msra.mxu0 0.0
    %3150 = vmatpush.msra.mxu0 0.0
    %3151 = vmatpush.msra.mxu0 0.0
    %3152 = vmatpush.msra.mxu0 0.0
    %3153 = vmatpush.msra.mxu0 0.0
    %3154 = vmatpush.msra.mxu0 0.0
    %3155 = vmatpush.msra.mxu0 0.0
    %3156 = vmatpush.msra.mxu0 0.0
    %3157 = vmatpush.msra.mxu0 0.0
    %3158 = vmatpush.msra.mxu0 %v622
    %3159 = vmatmul.f32.gmra.mxu0 %v3041
    %v3160 = vpop.f32.mrf.mxu0
    %v3161 = vadd.f32 %v3141, %v3160
    %3162 = vdwg.mxu0
    %3163 = vmatpush.msra.mxu0 %v615
    %3164 = vmatpush.msra.mxu0 %v607
    %3165 = vmatpush.msra.mxu0 %v599
    %3166 = vmatpush.msra.mxu0 %v591
    %3167 = vmatpush.msra.mxu0 %v583
    %3168 = vmatpush.msra.mxu0 %v575
    %3169 = vmatpush.msra.mxu0 %v567
    %3170 = vmatpush.msra.mxu0 %v559
    %3171 = vmatpush.msra.mxu0 %v551
    %3172 = vmatpush.msra.mxu0 %v543
    %3173 = vmatpush.msra.mxu0 %v535
    %3174 = vmatpush.msra.mxu0 %v527
    %3175 = vmatpush.msra.mxu0 %v519
    %3176 = vmatpush.msra.mxu0 %v511
    %3177 = vmatpush.msra.mxu0 %v503
    %3178 = vmatpush.msra.mxu0 %v495
    %3179 = vmatmul.f32.gmra.mxu0 %v3038
    %v3180 = vpop.f32.mrf.mxu0
    %v3181 = vadd.f32 0.0, %v3180
    %3182 = vdwg.mxu0
    %3183 = vmatpush.msra.mxu0 0.0
    %3184 = vmatpush.msra.mxu0 0.0
    %3185 = vmatpush.msra.mxu0 0.0
    %3186 = vmatpush.msra.mxu0 0.0
    %3187 = vmatpush.msra.mxu0 0.0
    %3188 = vmatpush.msra.mxu0 0.0
    %3189 = vmatpush.msra.mxu0 0.0
    %3190 = vmatpush.msra.mxu0 0.0
    %3191 = vmatpush.msra.mxu0 0.0
    %3192 = vmatpush.msra.mxu0 0.0
    %3193 = vmatpush.msra.mxu0 0.0
    %3194 = vmatpush.msra.mxu0 0.0
    %3195 = vmatpush.msra.mxu0 0.0
    %3196 = vmatpush.msra.mxu0 0.0
    %3197 = vmatpush.msra.mxu0 0.0
    %3198 = vmatpush.msra.mxu0 %v623
    %3199 = vmatmul.f32.gmra.mxu0 %v3041
    %v3200 = vpop.f32.mrf.mxu0
    %v3201 = vadd.f32 %v3181, %v3200
    %3202 = vdwg.mxu0
    %3203 = vmatpush.msra.mxu0 %v616
    %3204 = vmatpush.msra.mxu0 %v608
    %3205 = vmatpush.msra.mxu0 %v600
    %3206 = vmatpush.msra.mxu0 %v592
    %3207 = vmatpush.msra.mxu0 %v584
    %3208 = vmatpush.msra.mxu0 %v576
    %3209 = vmatpush.msra.mxu0 %v568
    %3210 = vmatpush.msra.mxu0 %v560
    %3211 = vmatpush.msra.mxu0 %v552
    %3212 = vmatpush.msra.mxu0 %v544
    %3213 = vmatpush.msra.mxu0 %v536
    %3214 = vmatpush.msra.mxu0 %v528
    %3215 = vmatpush.msra.mxu0 %v520
    %3216 = vmatpush.msra.mxu0 %v512
    %3217 = vmatpush.msra.mxu0 %v504
    %3218 = vmatpush.msra.mxu0 %v496
    %3219 = vmatmul.f32.gmra.mxu0 %v3038
    %v3220 = vpop.f32.mrf.mxu0
    %v3221 = vadd.f32 0.0, %v3220
    %3222 = vdwg.mxu0
    %3223 = vmatpush.msra.mxu0 0.0
    %3224 = vmatpush.msra.mxu0 0.0
    %3225 = vmatpush.msra.mxu0 0.0
    %3226 = vmatpush.msra.mxu0 0.0
    %3227 = vmatpush.msra.mxu0 0.0
    %3228 = vmatpush.msra.mxu0 0.0
    %3229 = vmatpush.msra.mxu0 0.0
    %3230 = vmatpush.msra.mxu0 0.0
    %3231 = vmatpush.msra.mxu0 0.0
    %3232 = vmatpush.msra.mxu0 0.0
    %3233 = vmatpush.msra.mxu0 0.0
    %3234 = vmatpush.msra.mxu0 0.0
    %3235 = vmatpush.msra.mxu0 0.0
    %3236 = vmatpush.msra.mxu0 0.0
    %3237 = vmatpush.msra.mxu0 0.0
    %3238 = vmatpush.msra.mxu0 %v624
    %3239 = vmatmul.f32.gmra.mxu0 %v3041
    %v3240 = vpop.f32.mrf.mxu0
    %v3241 = vadd.f32 %v3221, %v3240
    %3242 = vdwg.mxu0
    %3243 = vmatpush.msra.mxu0 %v617
    %3244 = vmatpush.msra.mxu0 %v609
    %3245 = vmatpush.msra.mxu0 %v601
    %3246 = vmatpush.msra.mxu0 %v593
    %3247 = vmatpush.msra.mxu0 %v585
    %3248 = vmatpush.msra.mxu0 %v577
    %3249 = vmatpush.msra.mxu0 %v569
    %3250 = vmatpush.msra.mxu0 %v561
    %3251 = vmatpush.msra.mxu0 %v553
    %3252 = vmatpush.msra.mxu0 %v545
    %3253 = vmatpush.msra.mxu0 %v537
    %3254 = vmatpush.msra.mxu0 %v529
    %3255 = vmatpush.msra.mxu0 %v521
    %3256 = vmatpush.msra.mxu0 %v513
    %3257 = vmatpush.msra.mxu0 %v505
    %3258 = vmatpush.msra.mxu0 %v497
    %3259 = vmatmul.f32.gmra.mxu0 %v3038
    %v3260 = vpop.f32.mrf.mxu0
    %v3261 = vadd.f32 0.0, %v3260
    %3262 = vdwg.mxu0
    %3263 = vmatpush.msra.mxu0 0.0
    %3264 = vmatpush.msra.mxu0 0.0
    %3265 = vmatpush.msra.mxu0 0.0
    %3266 = vmatpush.msra.mxu0 0.0
    %3267 = vmatpush.msra.mxu0 0.0
    %3268 = vmatpush.msra.mxu0 0.0
    %3269 = vmatpush.msra.mxu0 0.0
    %3270 = vmatpush.msra.mxu0 0.0
    %3271 = vmatpush.msra.mxu0 0.0
    %3272 = vmatpush.msra.mxu0 0.0
    %3273 = vmatpush.msra.mxu0 0.0
    %3274 = vmatpush.msra.mxu0 0.0
    %3275 = vmatpush.msra.mxu0 0.0
    %3276 = vmatpush.msra.mxu0 0.0
    %3277 = vmatpush.msra.mxu0 0.0
    %3278 = vmatpush.msra.mxu0 %v625
    %3279 = vmatmul.f32.gmra.mxu0 %v3041
    %v3280 = vpop.f32.mrf.mxu0
    %v3281 = vadd.f32 %v3261, %v3280
    %3282 = vdwg.mxu0
    %3283 = vmatpush.msra.mxu0 %v618
    %3284 = vmatpush.msra.mxu0 %v610
    %3285 = vmatpush.msra.mxu0 %v602
    %3286 = vmatpush.msra.mxu0 %v594
    %3287 = vmatpush.msra.mxu0 %v586
    %3288 = vmatpush.msra.mxu0 %v578
    %3289 = vmatpush.msra.mxu0 %v570
    %3290 = vmatpush.msra.mxu0 %v562
    %3291 = vmatpush.msra.mxu0 %v554
    %3292 = vmatpush.msra.mxu0 %v546
    %3293 = vmatpush.msra.mxu0 %v538
    %3294 = vmatpush.msra.mxu0 %v530
    %3295 = vmatpush.msra.mxu0 %v522
    %3296 = vmatpush.msra.mxu0 %v514
    %3297 = vmatpush.msra.mxu0 %v506
    %3298 = vmatpush.msra.mxu0 %v498
    %3299 = vmatmul.f32.gmra.mxu0 %v3038
    %v3300 = vpop.f32.mrf.mxu0
    %v3301 = vadd.f32 0.0, %v3300
    %3302 = vdwg.mxu0
    %3303 = vmatpush.msra.mxu0 0.0
    %3304 = vmatpush.msra.mxu0 0.0
    %3305 = vmatpush.msra.mxu0 0.0
    %3306 = vmatpush.msra.mxu0 0.0
    %3307 = vmatpush.msra.mxu0 0.0
    %3308 = vmatpush.msra.mxu0 0.0
    %3309 = vmatpush.msra.mxu0 0.0
    %3310 = vmatpush.msra.mxu0 0.0
    %3311 = vmatpush.msra.mxu0 0.0
    %3312 = vmatpush.msra.mxu0 0.0
    %3313 = vmatpush.msra.mxu0 0.0
    %3314 = vmatpush.msra.mxu0 0.0
    %3315 = vmatpush.msra.mxu0 0.0
    %3316 = vmatpush.msra.mxu0 0.0
    %3317 = vmatpush.msra.mxu0 0.0
    %3318 = vmatpush.msra.mxu0 %v626
    %3319 = vmatmul.f32.gmra.mxu0 %v3041
    %v3320 = vpop.f32.mrf.mxu0
    %v3321 = vadd.f32 %v3301, %v3320
    %3322 = vdwg.mxu0
    %3323 = vmatpush.msra.mxu0 %v619
    %3324 = vmatpush.msra.mxu0 %v611
    %3325 = vmatpush.msra.mxu0 %v603
    %3326 = vmatpush.msra.mxu0 %v595
    %3327 = vmatpush.msra.mxu0 %v587
    %3328 = vmatpush.msra.mxu0 %v579
    %3329 = vmatpush.msra.mxu0 %v571
    %3330 = vmatpush.msra.mxu0 %v563
    %3331 = vmatpush.msra.mxu0 %v555
    %3332 = vmatpush.msra.mxu0 %v547
    %3333 = vmatpush.msra.mxu0 %v539
    %3334 = vmatpush.msra.mxu0 %v531
    %3335 = vmatpush.msra.mxu0 %v523
    %3336 = vmatpush.msra.mxu0 %v515
    %3337 = vmatpush.msra.mxu0 %v507
    %3338 = vmatpush.msra.mxu0 %v499
    %3339 = vmatmul.f32.gmra.mxu0 %v3038
    %v3340 = vpop.f32.mrf.mxu0
    %v3341 = vadd.f32 0.0, %v3340
    %3342 = vdwg.mxu0
    %3343 = vmatpush.msra.mxu0 0.0
    %3344 = vmatpush.msra.mxu0 0.0
    %3345 = vmatpush.msra.mxu0 0.0
    %3346 = vmatpush.msra.mxu0 0.0
    %3347 = vmatpush.msra.mxu0 0.0
    %3348 = vmatpush.msra.mxu0 0.0
    %3349 = vmatpush.msra.mxu0 0.0
    %3350 = vmatpush.msra.mxu0 0.0
    %3351 = vmatpush.msra.mxu0 0.0
    %3352 = vmatpush.msra.mxu0 0.0
    %3353 = vmatpush.msra.mxu0 0.0
    %3354 = vmatpush.msra.mxu0 0.0
    %3355 = vmatpush.msra.mxu0 0.0
    %3356 = vmatpush.msra.mxu0 0.0
    %3357 = vmatpush.msra.mxu0 0.0
    %3358 = vmatpush.msra.mxu0 %v627
    %3359 = vmatmul.f32.gmra.mxu0 %v3041
    %v3360 = vpop.f32.mrf.mxu0
    %v3361 = vadd.f32 %v3341, %v3360
    %3362 = vdwg.mxu0
    %v3363 = vmul.f32 %v3161, %v3241
    %v3364 = vmul.f32 %v3201, %v3281
    %s3365 = scalar_lea.vmem %s7, 10
    %v3366 = vld [vmem:[%s3365] sm:$0x3]
    %s3367 = scalar_lea.vmem %s8, 10
    %v3368 = vld [vmem:[%s3367] sm:$0x3]
    %v3369 = vmul.f32 %v3081, %v3321
    %v3370 = vmul.f32 %v3121, %v3361
    %v3371 = vld [vmem:[#allocation4] sm:$0xff]
    %3373 = vst [vmem:[#allocation1] ss:$2 sm:$0xff] %v3371
    %v3374 = vld.sshfl [vmem:[#allocation1] sm:$0xff pattern:$0x75316420]
    %v3375 = vld.sshfl [vmem:[#allocation1 + $0x8] sm:$0xff pattern:$0x75316420]
    %v3378 = vmul.f32 %v3369, %v3374
    %v3379 = vmul.f32 %v3370, %v3375
    %v3381 = vperm.slane %v3366, 0
    %v3382 = vperm.slane %v3366, 1
    %v3385 = vmul.f32 %v3363, %v3381
    %v3386 = vmul.f32 %v3364, %v3382
    %v3387 = vadd.f32 %v3378, %v3385
    %v3388 = vadd.f32 %v3379, %v3386
    %v3389 = vld [vmem:[#allocation5] sm:$0xff]
    %3391 = vst [vmem:[#allocation1] ss:$2 sm:$0xff] %v3389
    %v3392 = vld.sshfl [vmem:[#allocation1] sm:$0xff pattern:$0x75316420]
    %v3393 = vld.sshfl [vmem:[#allocation1 + $0x8] sm:$0xff pattern:$0x75316420]
    %v3396 = vmul.f32 %v3369, %v3392
    %v3397 = vmul.f32 %v3370, %v3393
    %v3399 = vperm.slane %v3368, 0
    %v3400 = vperm.slane %v3368, 1
    %v3403 = vmul.f32 %v3363, %v3399
    %v3404 = vmul.f32 %v3364, %v3400
    %v3405 = vadd.f32 %v3396, %v3403
    %v3406 = vadd.f32 %v3397, %v3404
    %v3407 = vmul.f32 %v3387, %v3387
    %v3408 = vmul.f32 %v3388, %v3388
    %v3409 = vmul.f32 %v3405, %v3405
    %v3410 = vmul.f32 %v3406, %v3406
    %v3411 = vadd.f32 %v3407, %v3409
    %v3412 = vadd.f32 %v3408, %v3410
    %3413 = vmatpush.msra.mxu0 %v643
    %3414 = vmatpush.msra.mxu0 %v642
    %3415 = vmatpush.msra.mxu0 %v641
    %3416 = vmatpush.msra.mxu0 %v640
    %3417 = vmatpush.msra.mxu0 %v639
    %3418 = vmatpush.msra.mxu0 %v638
    %3419 = vmatpush.msra.mxu0 %v637
    %3420 = vmatpush.msra.mxu0 %v636
    %3421 = vmatpush.msra.mxu0 %v635
    %3422 = vmatpush.msra.mxu0 %v634
    %3423 = vmatpush.msra.mxu0 %v633
    %3424 = vmatpush.msra.mxu0 %v632
    %3425 = vmatpush.msra.mxu0 %v631
    %3426 = vmatpush.msra.mxu0 %v630
    %3427 = vmatpush.msra.mxu0 %v629
    %3428 = vmatpush.msra.mxu0 %v628
    %3429 = vmatmul.f32.gmra.mxu0 %v3411
    %v3430 = vpop.f32.mrf.mxu0
    %v3431 = vadd.f32 %v879, %v3430
    %3432 = vdwg.mxu0
    %3433 = vmatpush.msra.mxu0 %v659
    %3434 = vmatpush.msra.mxu0 %v658
    %3435 = vmatpush.msra.mxu0 %v657
    %3436 = vmatpush.msra.mxu0 %v656
    %3437 = vmatpush.msra.mxu0 %v655
    %3438 = vmatpush.msra.mxu0 %v654
    %3439 = vmatpush.msra.mxu0 %v653
    %3440 = vmatpush.msra.mxu0 %v652
    %3441 = vmatpush.msra.mxu0 %v651
    %3442 = vmatpush.msra.mxu0 %v650
    %3443 = vmatpush.msra.mxu0 %v649
    %3444 = vmatpush.msra.mxu0 %v648
    %3445 = vmatpush.msra.mxu0 %v647
    %3446 = vmatpush.msra.mxu0 %v646
    %3447 = vmatpush.msra.mxu0 %v645
    %3448 = vmatpush.msra.mxu0 %v644
    %3449 = vmatmul.f32.gmra.mxu0 %v3412
    %v3450 = vpop.f32.mrf.mxu0
    %v3451 = vadd.f32 %v3431, %v3450
    %3452 = vdwg.mxu0
    %v3453 = vtanh.pop %v3451
    %3455 = vrot.lane.b32.xlu0 %v3453, 96
    %v3456 = vpop.permute.xlu0 %3455
    %v3458 = vmul.f32 %v3038, %v3456
    %3460 = vrot.lane.b32.xlu0 %v3458, 32
    %v3461 = vpop.permute.xlu0 %3460
    %3463 = vst.msk [vmem:[#allocation3] sm:$0xf] %vm931, %v3461
    %v3466 = vrot.slane %v3388, 4
    %v3467 = vsel %vm114, %v3387, %v3466
    %3469 = vst [vmem:[#allocation4] sm:$0xff] %v3467
    %v3472 = vrot.slane %v3406, 4
    %v3473 = vsel %vm114, %v3405, %v3472
    %3475 = vst [vmem:[#allocation5] sm:$0xff] %v3473
    %v3476 = vld [vmem:[%s430] sm:$0xff]
    %v3477 = vld [vmem:[#allocation3] sm:$0xf]
    %v3479 = vsel %vm947, %v3477, 0
    %3481 = vmatpush.msra.mxu0 0.0
    %3482 = vmatpush.msra.mxu0 0.0
    %3483 = vmatpush.msra.mxu0 0.0
    %3484 = vmatpush.msra.mxu0 0.0
    %3485 = vmatpush.msra.mxu0 0.0
    %3486 = vmatpush.msra.mxu0 0.0
    %3487 = vmatpush.msra.mxu0 0.0
    %3488 = vmatpush.msra.mxu0 0.0
    %3489 = vmatpush.msra.mxu0 0.0
    %3490 = vmatpush.msra.mxu0 0.0
    %3491 = vmatpush.msra.mxu0 0.0
    %3492 = vmatpush.msra.mxu0 0.0
    %3493 = vmatpush.msra.mxu0 %v490
    %3494 = vmatpush.msra.mxu0 %v488
    %3495 = vmatpush.msra.mxu0 %v486
    %3496 = vmatpush.msra.mxu0 %v484
    %3497 = vmatmul.f32.gmra.mxu0 %v3479
    %v3498 = vpop.f32.mrf.mxu0
    %v3499 = vadd.f32 0.0, %v3498
    %3500 = vdwg.mxu0
    %3501 = vmatpush.msra.mxu0 0.0
    %3502 = vmatpush.msra.mxu0 0.0
    %3503 = vmatpush.msra.mxu0 0.0
    %3504 = vmatpush.msra.mxu0 0.0
    %3505 = vmatpush.msra.mxu0 0.0
    %3506 = vmatpush.msra.mxu0 0.0
    %3507 = vmatpush.msra.mxu0 0.0
    %3508 = vmatpush.msra.mxu0 0.0
    %3509 = vmatpush.msra.mxu0 0.0
    %3510 = vmatpush.msra.mxu0 0.0
    %3511 = vmatpush.msra.mxu0 0.0
    %3512 = vmatpush.msra.mxu0 0.0
    %3513 = vmatpush.msra.mxu0 %v491
    %3514 = vmatpush.msra.mxu0 %v489
    %3515 = vmatpush.msra.mxu0 %v487
    %3516 = vmatpush.msra.mxu0 %v485
    %3517 = vmatmul.f32.gmra.mxu0 %v3479
    %v3518 = vpop.f32.mrf.mxu0
    %v3519 = vadd.f32 0.0, %v3518
    %3520 = vdwg.mxu0
    %v3523 = vrot.slane %v3519, 4
    %v3524 = vsel %vm114, %v3499, %v3523
    %v3526 = vadd.f32 %v3476, %v3524
    %v3527 = vtanh.pop %v3526
    %v3528 = vmul.f32 %v3526, 0.16666667
    %v3529 = vadd.f32 %v3528, 0.5
    %v3530 = vmax.f32 %v3529, 0.0
    %v3531 = vmin.f32 %v3530, 1.0
    %3533 = vst [vmem:[#allocation1] ss:$2 sm:$0xff] %v3527
    %v3534 = vld.sshfl [vmem:[#allocation1] sm:$0xff pattern:$0x75316420]
    %v3535 = vld.sshfl [vmem:[#allocation1 + $0x8] sm:$0xff pattern:$0x75316420]
    %3539 = vst [vmem:[#allocation1] ss:$2 sm:$0xff] %v3531
    %v3540 = vld.sshfl [vmem:[#allocation1] sm:$0xff pattern:$0x75316420]
    %v3541 = vld.sshfl [vmem:[#allocation1 + $0x8] sm:$0xff pattern:$0x75316420]
    %v3544 = vsel %vm668, %v3534, %v3540
    %v3545 = vsel %vm669, %v3535, %v3541
    %v3547 = vsel %vm690, %v3545, 0
    %3549 = vmatpush.msra.mxu0 %v612
    %3550 = vmatpush.msra.mxu0 %v604
    %3551 = vmatpush.msra.mxu0 %v596
    %3552 = vmatpush.msra.mxu0 %v588
    %3553 = vmatpush.msra.mxu0 %v580
    %3554 = vmatpush.msra.mxu0 %v572
    %3555 = vmatpush.msra.mxu0 %v564
    %3556 = vmatpush.msra.mxu0 %v556
    %3557 = vmatpush.msra.mxu0 %v548
    %3558 = vmatpush.msra.mxu0 %v540
    %3559 = vmatpush.msra.mxu0 %v532
    %3560 = vmatpush.msra.mxu0 %v524
    %3561 = vmatpush.msra.mxu0 %v516
    %3562 = vmatpush.msra.mxu0 %v508
    %3563 = vmatpush.msra.mxu0 %v500
    %3564 = vmatpush.msra.mxu0 %v492
    %3565 = vmatmul.f32.gmra.mxu0 %v3544
    %v3566 = vpop.f32.mrf.mxu0
    %v3567 = vadd.f32 0.0, %v3566
    %3568 = vdwg.mxu0
    %3569 = vmatpush.msra.mxu0 0.0
    %3570 = vmatpush.msra.mxu0 0.0
    %3571 = vmatpush.msra.mxu0 0.0
    %3572 = vmatpush.msra.mxu0 0.0
    %3573 = vmatpush.msra.mxu0 0.0
    %3574 = vmatpush.msra.mxu0 0.0
    %3575 = vmatpush.msra.mxu0 0.0
    %3576 = vmatpush.msra.mxu0 0.0
    %3577 = vmatpush.msra.mxu0 0.0
    %3578 = vmatpush.msra.mxu0 0.0
    %3579 = vmatpush.msra.mxu0 0.0
    %3580 = vmatpush.msra.mxu0 0.0
    %3581 = vmatpush.msra.mxu0 0.0
    %3582 = vmatpush.msra.mxu0 0.0
    %3583 = vmatpush.msra.mxu0 0.0
    %3584 = vmatpush.msra.mxu0 %v620
    %3585 = vmatmul.f32.gmra.mxu0 %v3547
    %v3586 = vpop.f32.mrf.mxu0
    %v3587 = vadd.f32 %v3567, %v3586
    %3588 = vdwg.mxu0
    %3589 = vmatpush.msra.mxu0 %v613
    %3590 = vmatpush.msra.mxu0 %v605
    %3591 = vmatpush.msra.mxu0 %v597
    %3592 = vmatpush.msra.mxu0 %v589
    %3593 = vmatpush.msra.mxu0 %v581
    %3594 = vmatpush.msra.mxu0 %v573
    %3595 = vmatpush.msra.mxu0 %v565
    %3596 = vmatpush.msra.mxu0 %v557
    %3597 = vmatpush.msra.mxu0 %v549
    %3598 = vmatpush.msra.mxu0 %v541
    %3599 = vmatpush.msra.mxu0 %v533
    %3600 = vmatpush.msra.mxu0 %v525
    %3601 = vmatpush.msra.mxu0 %v517
    %3602 = vmatpush.msra.mxu0 %v509
    %3603 = vmatpush.msra.mxu0 %v501
    %3604 = vmatpush.msra.mxu0 %v493
    %3605 = vmatmul.f32.gmra.mxu0 %v3544
    %v3606 = vpop.f32.mrf.mxu0
    %v3607 = vadd.f32 0.0, %v3606
    %3608 = vdwg.mxu0
    %3609 = vmatpush.msra.mxu0 0.0
    %3610 = vmatpush.msra.mxu0 0.0
    %3611 = vmatpush.msra.mxu0 0.0
    %3612 = vmatpush.msra.mxu0 0.0
    %3613 = vmatpush.msra.mxu0 0.0
    %3614 = vmatpush.msra.mxu0 0.0
    %3615 = vmatpush.msra.mxu0 0.0
    %3616 = vmatpush.msra.mxu0 0.0
    %3617 = vmatpush.msra.mxu0 0.0
    %3618 = vmatpush.msra.mxu0 0.0
    %3619 = vmatpush.msra.mxu0 0.0
    %3620 = vmatpush.msra.mxu0 0.0
    %3621 = vmatpush.msra.mxu0 0.0
    %3622 = vmatpush.msra.mxu0 0.0
    %3623 = vmatpush.msra.mxu0 0.0
    %3624 = vmatpush.msra.mxu0 %v621
    %3625 = vmatmul.f32.gmra.mxu0 %v3547
    %v3626 = vpop.f32.mrf.mxu0
    %v3627 = vadd.f32 %v3607, %v3626
    %3628 = vdwg.mxu0
    %3629 = vmatpush.msra.mxu0 %v614
    %3630 = vmatpush.msra.mxu0 %v606
    %3631 = vmatpush.msra.mxu0 %v598
    %3632 = vmatpush.msra.mxu0 %v590
    %3633 = vmatpush.msra.mxu0 %v582
    %3634 = vmatpush.msra.mxu0 %v574
    %3635 = vmatpush.msra.mxu0 %v566
    %3636 = vmatpush.msra.mxu0 %v558
    %3637 = vmatpush.msra.mxu0 %v550
    %3638 = vmatpush.msra.mxu0 %v542
    %3639 = vmatpush.msra.mxu0 %v534
    %3640 = vmatpush.msra.mxu0 %v526
    %3641 = vmatpush.msra.mxu0 %v518
    %3642 = vmatpush.msra.mxu0 %v510
    %3643 = vmatpush.msra.mxu0 %v502
    %3644 = vmatpush.msra.mxu0 %v494
    %3645 = vmatmul.f32.gmra.mxu0 %v3544
    %v3646 = vpop.f32.mrf.mxu0
    %v3647 = vadd.f32 0.0, %v3646
    %3648 = vdwg.mxu0
    %3649 = vmatpush.msra.mxu0 0.0
    %3650 = vmatpush.msra.mxu0 0.0
    %3651 = vmatpush.msra.mxu0 0.0
    %3652 = vmatpush.msra.mxu0 0.0
    %3653 = vmatpush.msra.mxu0 0.0
    %3654 = vmatpush.msra.mxu0 0.0
    %3655 = vmatpush.msra.mxu0 0.0
    %3656 = vmatpush.msra.mxu0 0.0
    %3657 = vmatpush.msra.mxu0 0.0
    %3658 = vmatpush.msra.mxu0 0.0
    %3659 = vmatpush.msra.mxu0 0.0
    %3660 = vmatpush.msra.mxu0 0.0
    %3661 = vmatpush.msra.mxu0 0.0
    %3662 = vmatpush.msra.mxu0 0.0
    %3663 = vmatpush.msra.mxu0 0.0
    %3664 = vmatpush.msra.mxu0 %v622
    %3665 = vmatmul.f32.gmra.mxu0 %v3547
    %v3666 = vpop.f32.mrf.mxu0
    %v3667 = vadd.f32 %v3647, %v3666
    %3668 = vdwg.mxu0
    %3669 = vmatpush.msra.mxu0 %v615
    %3670 = vmatpush.msra.mxu0 %v607
    %3671 = vmatpush.msra.mxu0 %v599
    %3672 = vmatpush.msra.mxu0 %v591
    %3673 = vmatpush.msra.mxu0 %v583
    %3674 = vmatpush.msra.mxu0 %v575
    %3675 = vmatpush.msra.mxu0 %v567
    %3676 = vmatpush.msra.mxu0 %v559
    %3677 = vmatpush.msra.mxu0 %v551
    %3678 = vmatpush.msra.mxu0 %v543
    %3679 = vmatpush.msra.mxu0 %v535
    %3680 = vmatpush.msra.mxu0 %v527
    %3681 = vmatpush.msra.mxu0 %v519
    %3682 = vmatpush.msra.mxu0 %v511
    %3683 = vmatpush.msra.mxu0 %v503
    %3684 = vmatpush.msra.mxu0 %v495
    %3685 = vmatmul.f32.gmra.mxu0 %v3544
    %v3686 = vpop.f32.mrf.mxu0
    %v3687 = vadd.f32 0.0, %v3686
    %3688 = vdwg.mxu0
    %3689 = vmatpush.msra.mxu0 0.0
    %3690 = vmatpush.msra.mxu0 0.0
    %3691 = vmatpush.msra.mxu0 0.0
    %3692 = vmatpush.msra.mxu0 0.0
    %3693 = vmatpush.msra.mxu0 0.0
    %3694 = vmatpush.msra.mxu0 0.0
    %3695 = vmatpush.msra.mxu0 0.0
    %3696 = vmatpush.msra.mxu0 0.0
    %3697 = vmatpush.msra.mxu0 0.0
    %3698 = vmatpush.msra.mxu0 0.0
    %3699 = vmatpush.msra.mxu0 0.0
    %3700 = vmatpush.msra.mxu0 0.0
    %3701 = vmatpush.msra.mxu0 0.0
    %3702 = vmatpush.msra.mxu0 0.0
    %3703 = vmatpush.msra.mxu0 0.0
    %3704 = vmatpush.msra.mxu0 %v623
    %3705 = vmatmul.f32.gmra.mxu0 %v3547
    %v3706 = vpop.f32.mrf.mxu0
    %v3707 = vadd.f32 %v3687, %v3706
    %3708 = vdwg.mxu0
    %3709 = vmatpush.msra.mxu0 %v616
    %3710 = vmatpush.msra.mxu0 %v608
    %3711 = vmatpush.msra.mxu0 %v600
    %3712 = vmatpush.msra.mxu0 %v592
    %3713 = vmatpush.msra.mxu0 %v584
    %3714 = vmatpush.msra.mxu0 %v576
    %3715 = vmatpush.msra.mxu0 %v568
    %3716 = vmatpush.msra.mxu0 %v560
    %3717 = vmatpush.msra.mxu0 %v552
    %3718 = vmatpush.msra.mxu0 %v544
    %3719 = vmatpush.msra.mxu0 %v536
    %3720 = vmatpush.msra.mxu0 %v528
    %3721 = vmatpush.msra.mxu0 %v520
    %3722 = vmatpush.msra.mxu0 %v512
    %3723 = vmatpush.msra.mxu0 %v504
    %3724 = vmatpush.msra.mxu0 %v496
    %3725 = vmatmul.f32.gmra.mxu0 %v3544
    %v3726 = vpop.f32.mrf.mxu0
    %v3727 = vadd.f32 0.0, %v3726
    %3728 = vdwg.mxu0
    %3729 = vmatpush.msra.mxu0 0.0
    %3730 = vmatpush.msra.mxu0 0.0
    %3731 = vmatpush.msra.mxu0 0.0
    %3732 = vmatpush.msra.mxu0 0.0
    %3733 = vmatpush.msra.mxu0 0.0
    %3734 = vmatpush.msra.mxu0 0.0
    %3735 = vmatpush.msra.mxu0 0.0
    %3736 = vmatpush.msra.mxu0 0.0
    %3737 = vmatpush.msra.mxu0 0.0
    %3738 = vmatpush.msra.mxu0 0.0
    %3739 = vmatpush.msra.mxu0 0.0
    %3740 = vmatpush.msra.mxu0 0.0
    %3741 = vmatpush.msra.mxu0 0.0
    %3742 = vmatpush.msra.mxu0 0.0
    %3743 = vmatpush.msra.mxu0 0.0
    %3744 = vmatpush.msra.mxu0 %v624
    %3745 = vmatmul.f32.gmra.mxu0 %v3547
    %v3746 = vpop.f32.mrf.mxu0
    %v3747 = vadd.f32 %v3727, %v3746
    %3748 = vdwg.mxu0
    %3749 = vmatpush.msra.mxu0 %v617
    %3750 = vmatpush.msra.mxu0 %v609
    %3751 = vmatpush.msra.mxu0 %v601
    %3752 = vmatpush.msra.mxu0 %v593
    %3753 = vmatpush.msra.mxu0 %v585
    %3754 = vmatpush.msra.mxu0 %v577
    %3755 = vmatpush.msra.mxu0 %v569
    %3756 = vmatpush.msra.mxu0 %v561
    %3757 = vmatpush.msra.mxu0 %v553
    %3758 = vmatpush.msra.mxu0 %v545
    %3759 = vmatpush.msra.mxu0 %v537
    %3760 = vmatpush.msra.mxu0 %v529
    %3761 = vmatpush.msra.mxu0 %v521
    %3762 = vmatpush.msra.mxu0 %v513
    %3763 = vmatpush.msra.mxu0 %v505
    %3764 = vmatpush.msra.mxu0 %v497
    %3765 = vmatmul.f32.gmra.mxu0 %v3544
    %v3766 = vpop.f32.mrf.mxu0
    %v3767 = vadd.f32 0.0, %v3766
    %3768 = vdwg.mxu0
    %3769 = vmatpush.msra.mxu0 0.0
    %3770 = vmatpush.msra.mxu0 0.0
    %3771 = vmatpush.msra.mxu0 0.0
    %3772 = vmatpush.msra.mxu0 0.0
    %3773 = vmatpush.msra.mxu0 0.0
    %3774 = vmatpush.msra.mxu0 0.0
    %3775 = vmatpush.msra.mxu0 0.0
    %3776 = vmatpush.msra.mxu0 0.0
    %3777 = vmatpush.msra.mxu0 0.0
    %3778 = vmatpush.msra.mxu0 0.0
    %3779 = vmatpush.msra.mxu0 0.0
    %3780 = vmatpush.msra.mxu0 0.0
    %3781 = vmatpush.msra.mxu0 0.0
    %3782 = vmatpush.msra.mxu0 0.0
    %3783 = vmatpush.msra.mxu0 0.0
    %3784 = vmatpush.msra.mxu0 %v625
    %3785 = vmatmul.f32.gmra.mxu0 %v3547
    %v3786 = vpop.f32.mrf.mxu0
    %v3787 = vadd.f32 %v3767, %v3786
    %3788 = vdwg.mxu0
    %3789 = vmatpush.msra.mxu0 %v618
    %3790 = vmatpush.msra.mxu0 %v610
    %3791 = vmatpush.msra.mxu0 %v602
    %3792 = vmatpush.msra.mxu0 %v594
    %3793 = vmatpush.msra.mxu0 %v586
    %3794 = vmatpush.msra.mxu0 %v578
    %3795 = vmatpush.msra.mxu0 %v570
    %3796 = vmatpush.msra.mxu0 %v562
    %3797 = vmatpush.msra.mxu0 %v554
    %3798 = vmatpush.msra.mxu0 %v546
    %3799 = vmatpush.msra.mxu0 %v538
    %3800 = vmatpush.msra.mxu0 %v530
    %3801 = vmatpush.msra.mxu0 %v522
    %3802 = vmatpush.msra.mxu0 %v514
    %3803 = vmatpush.msra.mxu0 %v506
    %3804 = vmatpush.msra.mxu0 %v498
    %3805 = vmatmul.f32.gmra.mxu0 %v3544
    %v3806 = vpop.f32.mrf.mxu0
    %v3807 = vadd.f32 0.0, %v3806
    %3808 = vdwg.mxu0
    %3809 = vmatpush.msra.mxu0 0.0
    %3810 = vmatpush.msra.mxu0 0.0
    %3811 = vmatpush.msra.mxu0 0.0
    %3812 = vmatpush.msra.mxu0 0.0
    %3813 = vmatpush.msra.mxu0 0.0
    %3814 = vmatpush.msra.mxu0 0.0
    %3815 = vmatpush.msra.mxu0 0.0
    %3816 = vmatpush.msra.mxu0 0.0
    %3817 = vmatpush.msra.mxu0 0.0
    %3818 = vmatpush.msra.mxu0 0.0
    %3819 = vmatpush.msra.mxu0 0.0
    %3820 = vmatpush.msra.mxu0 0.0
    %3821 = vmatpush.msra.mxu0 0.0
    %3822 = vmatpush.msra.mxu0 0.0
    %3823 = vmatpush.msra.mxu0 0.0
    %3824 = vmatpush.msra.mxu0 %v626
    %3825 = vmatmul.f32.gmra.mxu0 %v3547
    %v3826 = vpop.f32.mrf.mxu0
    %v3827 = vadd.f32 %v3807, %v3826
    %3828 = vdwg.mxu0
    %3829 = vmatpush.msra.mxu0 %v619
    %3830 = vmatpush.msra.mxu0 %v611
    %3831 = vmatpush.msra.mxu0 %v603
    %3832 = vmatpush.msra.mxu0 %v595
    %3833 = vmatpush.msra.mxu0 %v587
    %3834 = vmatpush.msra.mxu0 %v579
    %3835 = vmatpush.msra.mxu0 %v571
    %3836 = vmatpush.msra.mxu0 %v563
    %3837 = vmatpush.msra.mxu0 %v555
    %3838 = vmatpush.msra.mxu0 %v547
    %3839 = vmatpush.msra.mxu0 %v539
    %3840 = vmatpush.msra.mxu0 %v531
    %3841 = vmatpush.msra.mxu0 %v523
    %3842 = vmatpush.msra.mxu0 %v515
    %3843 = vmatpush.msra.mxu0 %v507
    %3844 = vmatpush.msra.mxu0 %v499
    %3845 = vmatmul.f32.gmra.mxu0 %v3544
    %v3846 = vpop.f32.mrf.mxu0
    %v3847 = vadd.f32 0.0, %v3846
    %3848 = vdwg.mxu0
    %3849 = vmatpush.msra.mxu0 0.0
    %3850 = vmatpush.msra.mxu0 0.0
    %3851 = vmatpush.msra.mxu0 0.0
    %3852 = vmatpush.msra.mxu0 0.0
    %3853 = vmatpush.msra.mxu0 0.0
    %3854 = vmatpush.msra.mxu0 0.0
    %3855 = vmatpush.msra.mxu0 0.0
    %3856 = vmatpush.msra.mxu0 0.0
    %3857 = vmatpush.msra.mxu0 0.0
    %3858 = vmatpush.msra.mxu0 0.0
    %3859 = vmatpush.msra.mxu0 0.0
    %3860 = vmatpush.msra.mxu0 0.0
    %3861 = vmatpush.msra.mxu0 0.0
    %3862 = vmatpush.msra.mxu0 0.0
    %3863 = vmatpush.msra.mxu0 0.0
    %3864 = vmatpush.msra.mxu0 %v627
    %3865 = vmatmul.f32.gmra.mxu0 %v3547
    %v3866 = vpop.f32.mrf.mxu0
    %v3867 = vadd.f32 %v3847, %v3866
    %3868 = vdwg.mxu0
    %v3869 = vmul.f32 %v3667, %v3747
    %v3870 = vmul.f32 %v3707, %v3787
    %s3871 = scalar_lea.vmem %s7, 12
    %v3872 = vld [vmem:[%s3871] sm:$0x3]
    %s3873 = scalar_lea.vmem %s8, 12
    %v3874 = vld [vmem:[%s3873] sm:$0x3]
    %v3875 = vmul.f32 %v3587, %v3827
    %v3876 = vmul.f32 %v3627, %v3867
    %v3877 = vld [vmem:[#allocation4] sm:$0xff]
    %3879 = vst [vmem:[#allocation1] ss:$2 sm:$0xff] %v3877
    %v3880 = vld.sshfl [vmem:[#allocation1] sm:$0xff pattern:$0x75316420]
    %v3881 = vld.sshfl [vmem:[#allocation1 + $0x8] sm:$0xff pattern:$0x75316420]
    %v3884 = vmul.f32 %v3875, %v3880
    %v3885 = vmul.f32 %v3876, %v3881
    %v3887 = vperm.slane %v3872, 0
    %v3888 = vperm.slane %v3872, 1
    %v3891 = vmul.f32 %v3869, %v3887
    %v3892 = vmul.f32 %v3870, %v3888
    %v3893 = vadd.f32 %v3884, %v3891
    %v3894 = vadd.f32 %v3885, %v3892
    %v3895 = vld [vmem:[#allocation5] sm:$0xff]
    %3897 = vst [vmem:[#allocation1] ss:$2 sm:$0xff] %v3895
    %v3898 = vld.sshfl [vmem:[#allocation1] sm:$0xff pattern:$0x75316420]
    %v3899 = vld.sshfl [vmem:[#allocation1 + $0x8] sm:$0xff pattern:$0x75316420]
    %v3902 = vmul.f32 %v3875, %v3898
    %v3903 = vmul.f32 %v3876, %v3899
    %v3905 = vperm.slane %v3874, 0
    %v3906 = vperm.slane %v3874, 1
    %v3909 = vmul.f32 %v3869, %v3905
    %v3910 = vmul.f32 %v3870, %v3906
    %v3911 = vadd.f32 %v3902, %v3909
    %v3912 = vadd.f32 %v3903, %v3910
    %v3913 = vmul.f32 %v3893, %v3893
    %v3914 = vmul.f32 %v3894, %v3894
    %v3915 = vmul.f32 %v3911, %v3911
    %v3916 = vmul.f32 %v3912, %v3912
    %v3917 = vadd.f32 %v3913, %v3915
    %v3918 = vadd.f32 %v3914, %v3916
    %3919 = vmatpush.msra.mxu0 %v643
    %3920 = vmatpush.msra.mxu0 %v642
    %3921 = vmatpush.msra.mxu0 %v641
    %3922 = vmatpush.msra.mxu0 %v640
    %3923 = vmatpush.msra.mxu0 %v639
    %3924 = vmatpush.msra.mxu0 %v638
    %3925 = vmatpush.msra.mxu0 %v637
    %3926 = vmatpush.msra.mxu0 %v636
    %3927 = vmatpush.msra.mxu0 %v635
    %3928 = vmatpush.msra.mxu0 %v634
    %3929 = vmatpush.msra.mxu0 %v633
    %3930 = vmatpush.msra.mxu0 %v632
    %3931 = vmatpush.msra.mxu0 %v631
    %3932 = vmatpush.msra.mxu0 %v630
    %3933 = vmatpush.msra.mxu0 %v629
    %3934 = vmatpush.msra.mxu0 %v628
    %3935 = vmatmul.f32.gmra.mxu0 %v3917
    %v3936 = vpop.f32.mrf.mxu0
    %v3937 = vadd.f32 %v879, %v3936
    %3938 = vdwg.mxu0
    %3939 = vmatpush.msra.mxu0 %v659
    %3940 = vmatpush.msra.mxu0 %v658
    %3941 = vmatpush.msra.mxu0 %v657
    %3942 = vmatpush.msra.mxu0 %v656
    %3943 = vmatpush.msra.mxu0 %v655
    %3944 = vmatpush.msra.mxu0 %v654
    %3945 = vmatpush.msra.mxu0 %v653
    %3946 = vmatpush.msra.mxu0 %v652
    %3947 = vmatpush.msra.mxu0 %v651
    %3948 = vmatpush.msra.mxu0 %v650
    %3949 = vmatpush.msra.mxu0 %v649
    %3950 = vmatpush.msra.mxu0 %v648
    %3951 = vmatpush.msra.mxu0 %v647
    %3952 = vmatpush.msra.mxu0 %v646
    %3953 = vmatpush.msra.mxu0 %v645
    %3954 = vmatpush.msra.mxu0 %v644
    %3955 = vmatmul.f32.gmra.mxu0 %v3918
    %v3956 = vpop.f32.mrf.mxu0
    %v3957 = vadd.f32 %v3937, %v3956
    %3958 = vdwg.mxu0
    %v3959 = vtanh.pop %v3957
    %3961 = vrot.lane.b32.xlu0 %v3959, 96
    %v3962 = vpop.permute.xlu0 %3961
    %v3964 = vmul.f32 %v3544, %v3962
    %3966 = vrot.lane.b32.xlu0 %v3964, 32
    %v3967 = vpop.permute.xlu0 %3966
    %3969 = vst.msk [vmem:[#allocation3] sm:$0xf] %vm931, %v3967
    %v3972 = vrot.slane %v3894, 4
    %v3973 = vsel %vm114, %v3893, %v3972
    %3975 = vst [vmem:[#allocation4] sm:$0xff] %v3973
    %v3978 = vrot.slane %v3912, 4
    %v3979 = vsel %vm114, %v3911, %v3978
    %3981 = vst [vmem:[#allocation5] sm:$0xff] %v3979
    %v3982 = vld [vmem:[%s482] sm:$0xff]
    %v3983 = vld [vmem:[#allocation3] sm:$0xf]
    %v3985 = vsel %vm947, %v3983, 0
    %3987 = vmatpush.msra.mxu0 0.0
    %3988 = vmatpush.msra.mxu0 0.0
    %3989 = vmatpush.msra.mxu0 0.0
    %3990 = vmatpush.msra.mxu0 0.0
    %3991 = vmatpush.msra.mxu0 0.0
    %3992 = vmatpush.msra.mxu0 0.0
    %3993 = vmatpush.msra.mxu0 0.0
    %3994 = vmatpush.msra.mxu0 0.0
    %3995 = vmatpush.msra.mxu0 0.0
    %3996 = vmatpush.msra.mxu0 0.0
    %3997 = vmatpush.msra.mxu0 0.0
    %3998 = vmatpush.msra.mxu0 0.0
    %3999 = vmatpush.msra.mxu0 %v490
    %4000 = vmatpush.msra.mxu0 %v488
    %4001 = vmatpush.msra.mxu0 %v486
    %4002 = vmatpush.msra.mxu0 %v484
    %4003 = vmatmul.f32.gmra.mxu0 %v3985
    %v4004 = vpop.f32.mrf.mxu0
    %v4005 = vadd.f32 0.0, %v4004
    %4006 = vdwg.mxu0
    %4007 = vmatpush.msra.mxu0 0.0
    %4008 = vmatpush.msra.mxu0 0.0
    %4009 = vmatpush.msra.mxu0 0.0
    %4010 = vmatpush.msra.mxu0 0.0
    %4011 = vmatpush.msra.mxu0 0.0
    %4012 = vmatpush.msra.mxu0 0.0
    %4013 = vmatpush.msra.mxu0 0.0
    %4014 = vmatpush.msra.mxu0 0.0
    %4015 = vmatpush.msra.mxu0 0.0
    %4016 = vmatpush.msra.mxu0 0.0
    %4017 = vmatpush.msra.mxu0 0.0
    %4018 = vmatpush.msra.mxu0 0.0
    %4019 = vmatpush.msra.mxu0 %v491
    %4020 = vmatpush.msra.mxu0 %v489
    %4021 = vmatpush.msra.mxu0 %v487
    %4022 = vmatpush.msra.mxu0 %v485
    %4023 = vmatmul.f32.gmra.mxu0 %v3985
    %v4024 = vpop.f32.mrf.mxu0
    %v4025 = vadd.f32 0.0, %v4024
    %4026 = vdwg.mxu0
    %v4029 = vrot.slane %v4025, 4
    %v4030 = vsel %vm114, %v4005, %v4029
    %v4032 = vadd.f32 %v3982, %v4030
    %v4033 = vtanh.pop %v4032
    %v4034 = vmul.f32 %v4032, 0.16666667
    %v4035 = vadd.f32 %v4034, 0.5
    %v4036 = vmax.f32 %v4035, 0.0
    %v4037 = vmin.f32 %v4036, 1.0
    %4039 = vst [vmem:[#allocation1] ss:$2 sm:$0xff] %v4033
    %v4040 = vld.sshfl [vmem:[#allocation1] sm:$0xff pattern:$0x75316420]
    %v4041 = vld.sshfl [vmem:[#allocation1 + $0x8] sm:$0xff pattern:$0x75316420]
    %4045 = vst [vmem:[#allocation1] ss:$2 sm:$0xff] %v4037
    %v4046 = vld.sshfl [vmem:[#allocation1] sm:$0xff pattern:$0x75316420]
    %v4047 = vld.sshfl [vmem:[#allocation1 + $0x8] sm:$0xff pattern:$0x75316420]
    %v4050 = vsel %vm668, %v4040, %v4046
    %v4051 = vsel %vm669, %v4041, %v4047
    %v4053 = vsel %vm690, %v4051, 0
    %4055 = vmatpush.msra.mxu0 %v612
    %4056 = vmatpush.msra.mxu0 %v604
    %4057 = vmatpush.msra.mxu0 %v596
    %4058 = vmatpush.msra.mxu0 %v588
    %4059 = vmatpush.msra.mxu0 %v580
    %4060 = vmatpush.msra.mxu0 %v572
    %4061 = vmatpush.msra.mxu0 %v564
    %4062 = vmatpush.msra.mxu0 %v556
    %4063 = vmatpush.msra.mxu0 %v548
    %4064 = vmatpush.msra.mxu0 %v540
    %4065 = vmatpush.msra.mxu0 %v532
    %4066 = vmatpush.msra.mxu0 %v524
    %4067 = vmatpush.msra.mxu0 %v516
    %4068 = vmatpush.msra.mxu0 %v508
    %4069 = vmatpush.msra.mxu0 %v500
    %4070 = vmatpush.msra.mxu0 %v492
    %4071 = vmatmul.f32.gmra.mxu0 %v4050
    %v4072 = vpop.f32.mrf.mxu0
    %v4073 = vadd.f32 0.0, %v4072
    %4074 = vdwg.mxu0
    %4075 = vmatpush.msra.mxu0 0.0
    %4076 = vmatpush.msra.mxu0 0.0
    %4077 = vmatpush.msra.mxu0 0.0
    %4078 = vmatpush.msra.mxu0 0.0
    %4079 = vmatpush.msra.mxu0 0.0
    %4080 = vmatpush.msra.mxu0 0.0
    %4081 = vmatpush.msra.mxu0 0.0
    %4082 = vmatpush.msra.mxu0 0.0
    %4083 = vmatpush.msra.mxu0 0.0
    %4084 = vmatpush.msra.mxu0 0.0
    %4085 = vmatpush.msra.mxu0 0.0
    %4086 = vmatpush.msra.mxu0 0.0
    %4087 = vmatpush.msra.mxu0 0.0
    %4088 = vmatpush.msra.mxu0 0.0
    %4089 = vmatpush.msra.mxu0 0.0
    %4090 = vmatpush.msra.mxu0 %v620
    %4091 = vmatmul.f32.gmra.mxu0 %v4053
    %v4092 = vpop.f32.mrf.mxu0
    %v4093 = vadd.f32 %v4073, %v4092
    %4094 = vdwg.mxu0
    %4095 = vmatpush.msra.mxu0 %v613
    %4096 = vmatpush.msra.mxu0 %v605
    %4097 = vmatpush.msra.mxu0 %v597
    %4098 = vmatpush.msra.mxu0 %v589
    %4099 = vmatpush.msra.mxu0 %v581
    %4100 = vmatpush.msra.mxu0 %v573
    %4101 = vmatpush.msra.mxu0 %v565
    %4102 = vmatpush.msra.mxu0 %v557
    %4103 = vmatpush.msra.mxu0 %v549
    %4104 = vmatpush.msra.mxu0 %v541
    %4105 = vmatpush.msra.mxu0 %v533
    %4106 = vmatpush.msra.mxu0 %v525
    %4107 = vmatpush.msra.mxu0 %v517
    %4108 = vmatpush.msra.mxu0 %v509
    %4109 = vmatpush.msra.mxu0 %v501
    %4110 = vmatpush.msra.mxu0 %v493
    %4111 = vmatmul.f32.gmra.mxu0 %v4050
    %v4112 = vpop.f32.mrf.mxu0
    %v4113 = vadd.f32 0.0, %v4112
    %4114 = vdwg.mxu0
    %4115 = vmatpush.msra.mxu0 0.0
    %4116 = vmatpush.msra.mxu0 0.0
    %4117 = vmatpush.msra.mxu0 0.0
    %4118 = vmatpush.msra.mxu0 0.0
    %4119 = vmatpush.msra.mxu0 0.0
    %4120 = vmatpush.msra.mxu0 0.0
    %4121 = vmatpush.msra.mxu0 0.0
    %4122 = vmatpush.msra.mxu0 0.0
    %4123 = vmatpush.msra.mxu0 0.0
    %4124 = vmatpush.msra.mxu0 0.0
    %4125 = vmatpush.msra.mxu0 0.0
    %4126 = vmatpush.msra.mxu0 0.0
    %4127 = vmatpush.msra.mxu0 0.0
    %4128 = vmatpush.msra.mxu0 0.0
    %4129 = vmatpush.msra.mxu0 0.0
    %4130 = vmatpush.msra.mxu0 %v621
    %4131 = vmatmul.f32.gmra.mxu0 %v4053
    %v4132 = vpop.f32.mrf.mxu0
    %v4133 = vadd.f32 %v4113, %v4132
    %4134 = vdwg.mxu0
    %4135 = vmatpush.msra.mxu0 %v614
    %4136 = vmatpush.msra.mxu0 %v606
    %4137 = vmatpush.msra.mxu0 %v598
    %4138 = vmatpush.msra.mxu0 %v590
    %4139 = vmatpush.msra.mxu0 %v582
    %4140 = vmatpush.msra.mxu0 %v574
    %4141 = vmatpush.msra.mxu0 %v566
    %4142 = vmatpush.msra.mxu0 %v558
    %4143 = vmatpush.msra.mxu0 %v550
    %4144 = vmatpush.msra.mxu0 %v542
    %4145 = vmatpush.msra.mxu0 %v534
    %4146 = vmatpush.msra.mxu0 %v526
    %4147 = vmatpush.msra.mxu0 %v518
    %4148 = vmatpush.msra.mxu0 %v510
    %4149 = vmatpush.msra.mxu0 %v502
    %4150 = vmatpush.msra.mxu0 %v494
    %4151 = vmatmul.f32.gmra.mxu0 %v4050
    %v4152 = vpop.f32.mrf.mxu0
    %v4153 = vadd.f32 0.0, %v4152
    %4154 = vdwg.mxu0
    %4155 = vmatpush.msra.mxu0 0.0
    %4156 = vmatpush.msra.mxu0 0.0
    %4157 = vmatpush.msra.mxu0 0.0
    %4158 = vmatpush.msra.mxu0 0.0
    %4159 = vmatpush.msra.mxu0 0.0
    %4160 = vmatpush.msra.mxu0 0.0
    %4161 = vmatpush.msra.mxu0 0.0
    %4162 = vmatpush.msra.mxu0 0.0
    %4163 = vmatpush.msra.mxu0 0.0
    %4164 = vmatpush.msra.mxu0 0.0
    %4165 = vmatpush.msra.mxu0 0.0
    %4166 = vmatpush.msra.mxu0 0.0
    %4167 = vmatpush.msra.mxu0 0.0
    %4168 = vmatpush.msra.mxu0 0.0
    %4169 = vmatpush.msra.mxu0 0.0
    %4170 = vmatpush.msra.mxu0 %v622
    %4171 = vmatmul.f32.gmra.mxu0 %v4053
    %v4172 = vpop.f32.mrf.mxu0
    %v4173 = vadd.f32 %v4153, %v4172
    %4174 = vdwg.mxu0
    %4175 = vmatpush.msra.mxu0 %v615
    %4176 = vmatpush.msra.mxu0 %v607
    %4177 = vmatpush.msra.mxu0 %v599
    %4178 = vmatpush.msra.mxu0 %v591
    %4179 = vmatpush.msra.mxu0 %v583
    %4180 = vmatpush.msra.mxu0 %v575
    %4181 = vmatpush.msra.mxu0 %v567
    %4182 = vmatpush.msra.mxu0 %v559
    %4183 = vmatpush.msra.mxu0 %v551
    %4184 = vmatpush.msra.mxu0 %v543
    %4185 = vmatpush.msra.mxu0 %v535
    %4186 = vmatpush.msra.mxu0 %v527
    %4187 = vmatpush.msra.mxu0 %v519
    %4188 = vmatpush.msra.mxu0 %v511
    %4189 = vmatpush.msra.mxu0 %v503
    %4190 = vmatpush.msra.mxu0 %v495
    %4191 = vmatmul.f32.gmra.mxu0 %v4050
    %v4192 = vpop.f32.mrf.mxu0
    %v4193 = vadd.f32 0.0, %v4192
    %4194 = vdwg.mxu0
    %4195 = vmatpush.msra.mxu0 0.0
    %4196 = vmatpush.msra.mxu0 0.0
    %4197 = vmatpush.msra.mxu0 0.0
    %4198 = vmatpush.msra.mxu0 0.0
    %4199 = vmatpush.msra.mxu0 0.0
    %4200 = vmatpush.msra.mxu0 0.0
    %4201 = vmatpush.msra.mxu0 0.0
    %4202 = vmatpush.msra.mxu0 0.0
    %4203 = vmatpush.msra.mxu0 0.0
    %4204 = vmatpush.msra.mxu0 0.0
    %4205 = vmatpush.msra.mxu0 0.0
    %4206 = vmatpush.msra.mxu0 0.0
    %4207 = vmatpush.msra.mxu0 0.0
    %4208 = vmatpush.msra.mxu0 0.0
    %4209 = vmatpush.msra.mxu0 0.0
    %4210 = vmatpush.msra.mxu0 %v623
    %4211 = vmatmul.f32.gmra.mxu0 %v4053
    %v4212 = vpop.f32.mrf.mxu0
    %v4213 = vadd.f32 %v4193, %v4212
    %4214 = vdwg.mxu0
    %4215 = vmatpush.msra.mxu0 %v616
    %4216 = vmatpush.msra.mxu0 %v608
    %4217 = vmatpush.msra.mxu0 %v600
    %4218 = vmatpush.msra.mxu0 %v592
    %4219 = vmatpush.msra.mxu0 %v584
    %4220 = vmatpush.msra.mxu0 %v576
    %4221 = vmatpush.msra.mxu0 %v568
    %4222 = vmatpush.msra.mxu0 %v560
    %4223 = vmatpush.msra.mxu0 %v552
    %4224 = vmatpush.msra.mxu0 %v544
    %4225 = vmatpush.msra.mxu0 %v536
    %4226 = vmatpush.msra.mxu0 %v528
    %4227 = vmatpush.msra.mxu0 %v520
    %4228 = vmatpush.msra.mxu0 %v512
    %4229 = vmatpush.msra.mxu0 %v504
    %4230 = vmatpush.msra.mxu0 %v496
    %4231 = vmatmul.f32.gmra.mxu0 %v4050
    %v4232 = vpop.f32.mrf.mxu0
    %v4233 = vadd.f32 0.0, %v4232
    %4234 = vdwg.mxu0
    %4235 = vmatpush.msra.mxu0 0.0
    %4236 = vmatpush.msra.mxu0 0.0
    %4237 = vmatpush.msra.mxu0 0.0
    %4238 = vmatpush.msra.mxu0 0.0
    %4239 = vmatpush.msra.mxu0 0.0
    %4240 = vmatpush.msra.mxu0 0.0
    %4241 = vmatpush.msra.mxu0 0.0
    %4242 = vmatpush.msra.mxu0 0.0
    %4243 = vmatpush.msra.mxu0 0.0
    %4244 = vmatpush.msra.mxu0 0.0
    %4245 = vmatpush.msra.mxu0 0.0
    %4246 = vmatpush.msra.mxu0 0.0
    %4247 = vmatpush.msra.mxu0 0.0
    %4248 = vmatpush.msra.mxu0 0.0
    %4249 = vmatpush.msra.mxu0 0.0
    %4250 = vmatpush.msra.mxu0 %v624
    %4251 = vmatmul.f32.gmra.mxu0 %v4053
    %v4252 = vpop.f32.mrf.mxu0
    %v4253 = vadd.f32 %v4233, %v4252
    %4254 = vdwg.mxu0
    %4255 = vmatpush.msra.mxu0 %v617
    %4256 = vmatpush.msra.mxu0 %v609
    %4257 = vmatpush.msra.mxu0 %v601
    %4258 = vmatpush.msra.mxu0 %v593
    %4259 = vmatpush.msra.mxu0 %v585
    %4260 = vmatpush.msra.mxu0 %v577
    %4261 = vmatpush.msra.mxu0 %v569
    %4262 = vmatpush.msra.mxu0 %v561
    %4263 = vmatpush.msra.mxu0 %v553
    %4264 = vmatpush.msra.mxu0 %v545
    %4265 = vmatpush.msra.mxu0 %v537
    %4266 = vmatpush.msra.mxu0 %v529
    %4267 = vmatpush.msra.mxu0 %v521
    %4268 = vmatpush.msra.mxu0 %v513
    %4269 = vmatpush.msra.mxu0 %v505
    %4270 = vmatpush.msra.mxu0 %v497
    %4271 = vmatmul.f32.gmra.mxu0 %v4050
    %v4272 = vpop.f32.mrf.mxu0
    %v4273 = vadd.f32 0.0, %v4272
    %4274 = vdwg.mxu0
    %4275 = vmatpush.msra.mxu0 0.0
    %4276 = vmatpush.msra.mxu0 0.0
    %4277 = vmatpush.msra.mxu0 0.0
    %4278 = vmatpush.msra.mxu0 0.0
    %4279 = vmatpush.msra.mxu0 0.0
    %4280 = vmatpush.msra.mxu0 0.0
    %4281 = vmatpush.msra.mxu0 0.0
    %4282 = vmatpush.msra.mxu0 0.0
    %4283 = vmatpush.msra.mxu0 0.0
    %4284 = vmatpush.msra.mxu0 0.0
    %4285 = vmatpush.msra.mxu0 0.0
    %4286 = vmatpush.msra.mxu0 0.0
    %4287 = vmatpush.msra.mxu0 0.0
    %4288 = vmatpush.msra.mxu0 0.0
    %4289 = vmatpush.msra.mxu0 0.0
    %4290 = vmatpush.msra.mxu0 %v625
    %4291 = vmatmul.f32.gmra.mxu0 %v4053
    %v4292 = vpop.f32.mrf.mxu0
    %v4293 = vadd.f32 %v4273, %v4292
    %4294 = vdwg.mxu0
    %4295 = vmatpush.msra.mxu0 %v618
    %4296 = vmatpush.msra.mxu0 %v610
    %4297 = vmatpush.msra.mxu0 %v602
    %4298 = vmatpush.msra.mxu0 %v594
    %4299 = vmatpush.msra.mxu0 %v586
    %4300 = vmatpush.msra.mxu0 %v578
    %4301 = vmatpush.msra.mxu0 %v570
    %4302 = vmatpush.msra.mxu0 %v562
    %4303 = vmatpush.msra.mxu0 %v554
    %4304 = vmatpush.msra.mxu0 %v546
    %4305 = vmatpush.msra.mxu0 %v538
    %4306 = vmatpush.msra.mxu0 %v530
    %4307 = vmatpush.msra.mxu0 %v522
    %4308 = vmatpush.msra.mxu0 %v514
    %4309 = vmatpush.msra.mxu0 %v506
    %4310 = vmatpush.msra.mxu0 %v498
    %4311 = vmatmul.f32.gmra.mxu0 %v4050
    %v4312 = vpop.f32.mrf.mxu0
    %v4313 = vadd.f32 0.0, %v4312
    %4314 = vdwg.mxu0
    %4315 = vmatpush.msra.mxu0 0.0
    %4316 = vmatpush.msra.mxu0 0.0
    %4317 = vmatpush.msra.mxu0 0.0
    %4318 = vmatpush.msra.mxu0 0.0
    %4319 = vmatpush.msra.mxu0 0.0
    %4320 = vmatpush.msra.mxu0 0.0
    %4321 = vmatpush.msra.mxu0 0.0
    %4322 = vmatpush.msra.mxu0 0.0
    %4323 = vmatpush.msra.mxu0 0.0
    %4324 = vmatpush.msra.mxu0 0.0
    %4325 = vmatpush.msra.mxu0 0.0
    %4326 = vmatpush.msra.mxu0 0.0
    %4327 = vmatpush.msra.mxu0 0.0
    %4328 = vmatpush.msra.mxu0 0.0
    %4329 = vmatpush.msra.mxu0 0.0
    %4330 = vmatpush.msra.mxu0 %v626
    %4331 = vmatmul.f32.gmra.mxu0 %v4053
    %v4332 = vpop.f32.mrf.mxu0
    %v4333 = vadd.f32 %v4313, %v4332
    %4334 = vdwg.mxu0
    %4335 = vmatpush.msra.mxu0 %v619
    %4336 = vmatpush.msra.mxu0 %v611
    %4337 = vmatpush.msra.mxu0 %v603
    %4338 = vmatpush.msra.mxu0 %v595
    %4339 = vmatpush.msra.mxu0 %v587
    %4340 = vmatpush.msra.mxu0 %v579
    %4341 = vmatpush.msra.mxu0 %v571
    %4342 = vmatpush.msra.mxu0 %v563
    %4343 = vmatpush.msra.mxu0 %v555
    %4344 = vmatpush.msra.mxu0 %v547
    %4345 = vmatpush.msra.mxu0 %v539
    %4346 = vmatpush.msra.mxu0 %v531
    %4347 = vmatpush.msra.mxu0 %v523
    %4348 = vmatpush.msra.mxu0 %v515
    %4349 = vmatpush.msra.mxu0 %v507
    %4350 = vmatpush.msra.mxu0 %v499
    %4351 = vmatmul.f32.gmra.mxu0 %v4050
    %v4352 = vpop.f32.mrf.mxu0
    %v4353 = vadd.f32 0.0, %v4352
    %4354 = vdwg.mxu0
    %4355 = vmatpush.msra.mxu0 0.0
    %4356 = vmatpush.msra.mxu0 0.0
    %4357 = vmatpush.msra.mxu0 0.0
    %4358 = vmatpush.msra.mxu0 0.0
    %4359 = vmatpush.msra.mxu0 0.0
    %4360 = vmatpush.msra.mxu0 0.0
    %4361 = vmatpush.msra.mxu0 0.0
    %4362 = vmatpush.msra.mxu0 0.0
    %4363 = vmatpush.msra.mxu0 0.0
    %4364 = vmatpush.msra.mxu0 0.0
    %4365 = vmatpush.msra.mxu0 0.0
    %4366 = vmatpush.msra.mxu0 0.0
    %4367 = vmatpush.msra.mxu0 0.0
    %4368 = vmatpush.msra.mxu0 0.0
    %4369 = vmatpush.msra.mxu0 0.0
    %4370 = vmatpush.msra.mxu0 %v627
    %4371 = vmatmul.f32.gmra.mxu0 %v4053
    %v4372 = vpop.f32.mrf.mxu0
    %v4373 = vadd.f32 %v4353, %v4372
    %4374 = vdwg.mxu0
    %v4375 = vmul.f32 %v4173, %v4253
    %v4376 = vmul.f32 %v4213, %v4293
    %s4377 = scalar_lea.vmem %s7, 14
    %v4378 = vld [vmem:[%s4377] sm:$0x3]
    %s4379 = scalar_lea.vmem %s8, 14
    %v4380 = vld [vmem:[%s4379] sm:$0x3]
    %v4381 = vmul.f32 %v4093, %v4333
    %v4382 = vmul.f32 %v4133, %v4373
    %v4383 = vld [vmem:[#allocation4] sm:$0xff]
    %4385 = vst [vmem:[#allocation1] ss:$2 sm:$0xff] %v4383
    %v4386 = vld.sshfl [vmem:[#allocation1] sm:$0xff pattern:$0x75316420]
    %v4387 = vld.sshfl [vmem:[#allocation1 + $0x8] sm:$0xff pattern:$0x75316420]
    %v4390 = vmul.f32 %v4381, %v4386
    %v4391 = vmul.f32 %v4382, %v4387
    %v4393 = vperm.slane %v4378, 0
    %v4394 = vperm.slane %v4378, 1
    %v4397 = vmul.f32 %v4375, %v4393
    %v4398 = vmul.f32 %v4376, %v4394
    %v4399 = vadd.f32 %v4390, %v4397
    %v4400 = vadd.f32 %v4391, %v4398
    %v4401 = vld [vmem:[#allocation5] sm:$0xff]
    %4403 = vst [vmem:[#allocation1] ss:$2 sm:$0xff] %v4401
    %v4404 = vld.sshfl [vmem:[#allocation1] sm:$0xff pattern:$0x75316420]
    %v4405 = vld.sshfl [vmem:[#allocation1 + $0x8] sm:$0xff pattern:$0x75316420]
    %v4408 = vmul.f32 %v4381, %v4404
    %v4409 = vmul.f32 %v4382, %v4405
    %v4411 = vperm.slane %v4380, 0
    %v4412 = vperm.slane %v4380, 1
    %v4415 = vmul.f32 %v4375, %v4411
    %v4416 = vmul.f32 %v4376, %v4412
    %v4417 = vadd.f32 %v4408, %v4415
    %v4418 = vadd.f32 %v4409, %v4416
    %v4419 = vmul.f32 %v4399, %v4399
    %v4420 = vmul.f32 %v4400, %v4400
    %v4421 = vmul.f32 %v4417, %v4417
    %v4422 = vmul.f32 %v4418, %v4418
    %v4423 = vadd.f32 %v4419, %v4421
    %v4424 = vadd.f32 %v4420, %v4422
    %4425 = vmatpush.msra.mxu0 %v643
    %4426 = vmatpush.msra.mxu0 %v642
    %4427 = vmatpush.msra.mxu0 %v641
    %4428 = vmatpush.msra.mxu0 %v640
    %4429 = vmatpush.msra.mxu0 %v639
    %4430 = vmatpush.msra.mxu0 %v638
    %4431 = vmatpush.msra.mxu0 %v637
    %4432 = vmatpush.msra.mxu0 %v636
    %4433 = vmatpush.msra.mxu0 %v635
    %4434 = vmatpush.msra.mxu0 %v634
    %4435 = vmatpush.msra.mxu0 %v633
    %4436 = vmatpush.msra.mxu0 %v632
    %4437 = vmatpush.msra.mxu0 %v631
    %4438 = vmatpush.msra.mxu0 %v630
    %4439 = vmatpush.msra.mxu0 %v629
    %4440 = vmatpush.msra.mxu0 %v628
    %4441 = vmatmul.f32.gmra.mxu0 %v4423
    %v4442 = vpop.f32.mrf.mxu0
    %v4443 = vadd.f32 %v879, %v4442
    %4444 = vdwg.mxu0
    %4445 = vmatpush.msra.mxu0 %v659
    %4446 = vmatpush.msra.mxu0 %v658
    %4447 = vmatpush.msra.mxu0 %v657
    %4448 = vmatpush.msra.mxu0 %v656
    %4449 = vmatpush.msra.mxu0 %v655
    %4450 = vmatpush.msra.mxu0 %v654
    %4451 = vmatpush.msra.mxu0 %v653
    %4452 = vmatpush.msra.mxu0 %v652
    %4453 = vmatpush.msra.mxu0 %v651
    %4454 = vmatpush.msra.mxu0 %v650
    %4455 = vmatpush.msra.mxu0 %v649
    %4456 = vmatpush.msra.mxu0 %v648
    %4457 = vmatpush.msra.mxu0 %v647
    %4458 = vmatpush.msra.mxu0 %v646
    %4459 = vmatpush.msra.mxu0 %v645
    %4460 = vmatpush.msra.mxu0 %v644
    %4461 = vmatmul.f32.gmra.mxu0 %v4424
    %v4462 = vpop.f32.mrf.mxu0
    %v4463 = vadd.f32 %v4443, %v4462
    %4464 = vdwg.mxu0
    %v4465 = vtanh.pop %v4463
    %4467 = vrot.lane.b32.xlu0 %v4465, 96
    %v4468 = vpop.permute.xlu0 %4467
    %v4470 = vmul.f32 %v4050, %v4468
    %4472 = vrot.lane.b32.xlu0 %v4470, 32
    %v4473 = vpop.permute.xlu0 %4472
    %4475 = vst.msk [vmem:[#allocation3] sm:$0xf] %vm931, %v4473
    %v4478 = vrot.slane %v4400, 4
    %v4479 = vsel %vm114, %v4399, %v4478
    %4481 = vst [vmem:[#allocation4] sm:$0xff] %v4479
    %v4484 = vrot.slane %v4418, 4
    %v4485 = vsel %vm114, %v4417, %v4484
    %4487 = vst [vmem:[#allocation5] sm:$0xff] %v4485
    %v4488 = vld [vmem:[#allocation3] sm:$0xf]
    %v4489 = vld [vmem:[%s9] sm:$0xff]
    %v4490 = vld [vmem:[%s9 + $0x8] sm:$0xff]
    %v4491 = vld [vmem:[%s9 + $0x10] sm:$0xff]
    %v4492 = vld [vmem:[%s9 + $0x18] sm:$0xff]
    %v4493 = vld [vmem:[#allocation6] sm:$0x1]
    %v4495 = vperm.slane %v4493, 0
    %v4498 = vsel %vm947, %v4488, 0
    %4500 = vmatpush.msra.mxu0 0.0
    %4501 = vmatpush.msra.mxu0 0.0
    %4502 = vmatpush.msra.mxu0 0.0
    %4503 = vmatpush.msra.mxu0 0.0
    %4504 = vmatpush.msra.mxu0 0.0
    %4505 = vmatpush.msra.mxu0 0.0
    %4506 = vmatpush.msra.mxu0 0.0
    %4507 = vmatpush.msra.mxu0 0.0
    %4508 = vmatpush.msra.mxu0 0.0
    %4509 = vmatpush.msra.mxu0 0.0
    %4510 = vmatpush.msra.mxu0 0.0
    %4511 = vmatpush.msra.mxu0 0.0
    %4512 = vmatpush.msra.mxu0 %v4492
    %4513 = vmatpush.msra.mxu0 %v4491
    %4514 = vmatpush.msra.mxu0 %v4490
    %4515 = vmatpush.msra.mxu0 %v4489
    %4516 = vmatmul.f32.gmra.mxu0 %v4498
    %v4517 = vpop.f32.mrf.mxu0
    %v4518 = vadd.f32 %v4495, %v4517
    %4519 = vdwg.mxu0
    %vm4520 = vcmask 3072
    %4521 = vst.msk [vmem:[%s11] sm:$0xf] %vm4520, %v4518
    // Predicated region
    $region50: #{sfm_forward.1} parent=1 // pred_check
      _
    $region51: #{sfm_forward.1} parent=1 // pred_check_branch
      %4523 = sbr.rel (0) target = $region53
    $region52: #{sfm_forward.1} parent=1 // pred_region
      _
    $region53: #{sfm_forward.1} parent=1 // pred_fallthru
      _
    // Predicated region
    $region54: #{sfm_forward.1} parent=1 // pred_check
      _
    $region55: #{sfm_forward.1} parent=1 // pred_check_branch
      %4525 = sbr.rel (0) target = $region57
    $region56: #{sfm_forward.1} parent=1 // pred_region
      _
    $region57: #{sfm_forward.1} parent=1 // pred_fallthru
      _
    %4526 = vsyncpa [#allocation8], 1

</llo_original>
